<compile_context>
chip_gen: v6e
topology: v6e:2x2x1
jax: 0.10.0
libtpu: 0.0.40
codegen_flags: <defaults>
</compile_context>

<pallas_src>
import jax
import jax.numpy as jnp
from jax import lax
from jax.experimental import pallas as pl
from jax.experimental.pallas import tpu as pltpu

SELU_ALPHA = 1.6732632423543772848170429916717
SELU_SCALE = 1.0507009873554804934193349852946
_KS = 7          # grouped-conv kernel size (fixed by the module, size != 1)
_N_ACC = 4       # independent partial accumulators per weight set (VALU ILP)


def _tree_add(vals):
    vals = [v for v in vals if v is not None]
    while len(vals) > 1:
        nxt = [vals[i] + vals[i + 1] for i in range(0, len(vals) - 1, 2)]
        if len(vals) % 2:
            nxt.append(vals[-1])
        vals = nxt
    return vals[0]


def _hrad_kernel(xcol_ref, w_ref, shift_ref, gwb_ref, ssum_ref, gbias_ref,
                 x_out_ref, f_ref):
    """One batch block per grid step.

    xcol_ref  : (7, 2, ho+3, L)      f32  width-im2col / height-phase input view
                                          L = nb * c_in * wo  (lane axis)
    w_ref     : (mult, 49, 1, L)     f32  conv weights * folded BN scale
    shift_ref : (mult, 1, L)         f32  folded BN shift (incl. conv bias)
    gwb_ref   : (lin, ho, L)         f32  gconv weight, broadcast over (n, c_in)
    ssum_ref  : (L, nb*c_in)         f32  0/1 lane-group-sum matrix
    gbias_ref : (mult*lin, 1)        f32  gconv bias per (m, l) row
    x_out_ref : (ho, mult*L)         out  post-SELU activation (lane-dense)
    f_ref     : (mult*lin, nb*c_in)  out  gconv features
    """
    mult = w_ref.shape[0]
    lin, ho, _ = gwb_ref.shape

    # Depthwise 7x7 stride-2 conv: 49 taps.  Each kh tap is a contiguous
    # sublane window of the height-phase view (shared across the `mult`
    # weight sets); 4 independent accumulators per set break the dep chain.
    parts = [[None] * _N_ACC for _ in range(mult)]
    t = 0
    for kh in range(_KS):
        a, ph = kh // 2, kh % 2
        for kw in range(_KS):
            xblk = xcol_ref[kw, ph, pl.ds(a, ho)]          # (ho, L)
            s = t % _N_ACC
            for m in range(mult):
                contrib = w_ref[m, t] * xblk               # (1,L) bcast * (ho,L)
                parts[m][s] = contrib if parts[m][s] is None \
                    else parts[m][s] + contrib
            t += 1

    y_slabs = []
    f_rows = []
    for m in range(mult):
        acc = _tree_add(parts[m]) + shift_ref[m]           # folded BatchNorm
        # SELU.  The exp argument is clamped so the unselected branch stays
        # finite; exp(min(x,0))-1 differs from expm1 by <~1e-7 absolute.
        neg = SELU_ALPHA * (jnp.exp(jnp.minimum(acc, 0.0)) - 1.0)
        y = SELU_SCALE * jnp.where(acc > 0.0, acc, neg)
        y_slabs.append(y)
        # gconv stage 1: weighted reduction over the output rows (sublanes).
        for l in range(lin):
            f_rows.append(jnp.sum(y * gwb_ref[l], axis=0, keepdims=True))

    # Dropout (eval) is identity; one lane-dense store of the activation.
    x_out_ref[...] = jnp.concatenate(y_slabs, axis=-1).astype(x_out_ref.dtype)

    # gconv stage 2: sum each wo-lane group with one tiny 0/1 matmul.
    rmat = jnp.concatenate(f_rows, axis=0)                 # (mult*lin, L)
    f = jnp.dot(rmat, ssum_ref[...],
                preferred_element_type=jnp.float32,
                precision=lax.Precision.HIGHEST)
    f_ref[...] = (f + gbias_ref[...]).astype(f_ref.dtype)


def hrad_block(x, conv_w, conv_b, bn_gamma, bn_beta, bn_mean, bn_var,
               g_weight, g_bias, *, eps=1e-5):
    """Pallas implementation of HRadBlock.forward (size != 1 branch, eval)."""
    n, c_in, h, w_in = x.shape
    c_out = conv_w.shape[0]
    assert c_out % c_in == 0, "grouped conv requires c_out % c_in == 0"
    assert h % 2 == 0 and w_in % 2 == 0, "even spatial dims assumed"
    mult = c_out // c_in
    ho = (h + 2 * 3 - _KS) // 2 + 1
    wo = (w_in + 2 * 3 - _KS) // 2 + 1
    hw = ho * wo
    lin = g_weight.shape[0]
    assert g_weight.shape[1] == hw, "gsize*gsize must equal conv output H*W"
    n_taps = _KS * _KS

    # Batch-block coarsening: fold batch elements into the lane axis
    # (lane unit = c_in * wo) up to ~1024 lanes so per-step overhead and the
    # invariant constants are amortized.  Awkward batch sizes fall back to the
    # largest divisor of n; pad the batch externally if exact 128-lane
    # multiples matter more than the (dominant) streamed-input bytes.
    lane_unit = c_in * wo
    desired = max(1, min(n, 1024 // max(lane_unit, 1)))
    nb = 1
    for cand in range(desired, 0, -1):
        if n % cand == 0:
            nb = cand
            break
    n_bb = n // nb
    L = nb * lane_unit
    nc = nb * c_in

    # ---- host-side glue (pure layout plumbing / constant folding) ----------
    # Width im2col + height phase split of the zero-padded input:
    #   xc[bb, kw, ph, a, (n_l, c, j)] = xpad[n, c, 2a+ph, 2j+kw]
    xp = jnp.pad(x.astype(jnp.float32), ((0, 0), (0, 0), (3, 3), (3, 3)))
    xc = jnp.stack([xp[:, :, :, kw:kw + 2 * wo:2] for kw in range(_KS)], 0)
    xc = xc.reshape(_KS, n, c_in, ho + 3, 2, wo)        # rows 2a+ph -> (a, ph)
    xc = xc.transpose(1, 0, 4, 3, 2, 5)                 # (n, kw, ph, a, c, j)
    xc = xc.reshape(n_bb, nb, _KS, 2, ho + 3, c_in, wo)
    xc = xc.transpose(0, 2, 3, 4, 1, 5, 6).reshape(n_bb, _KS, 2, ho + 3, L)

    # Fold BatchNorm running stats and pre-broadcast per-tap weights / shifts
    # over the lane axis so the kernel does plain vector loads.
    scale = bn_gamma / jnp.sqrt(bn_var + eps)
    w_fold = (conv_w.reshape(c_out, n_taps) * scale[:, None]).astype(jnp.float32)
    w_fold = w_fold.reshape(c_in, mult, n_taps).transpose(1, 2, 0)  # (mult,49,c)
    w_lane = jnp.tile(jnp.repeat(w_fold, wo, axis=-1), (1, 1, nb))
    w_lane = w_lane.reshape(mult, n_taps, 1, L)

    shift = (bn_beta + scale * (conv_b - bn_mean)).astype(jnp.float32)
    shift_mc = shift.reshape(c_in, mult).T                          # (mult, c)
    shift_lane = jnp.tile(jnp.repeat(shift_mc, wo, axis=-1), (1, nb))
    shift_lane = shift_lane.reshape(mult, 1, L)

    # gconv weight broadcast over (n, c_in) lane groups + 0/1 group-sum matrix.
    gwb = jnp.tile(g_weight.astype(jnp.float32).reshape(lin, ho, wo),
                   (1, 1, nc))                                      # (lin,ho,L)
    ssum = jnp.repeat(jnp.eye(nc, dtype=jnp.float32), wo, axis=0)   # (L, nc)
    gbias = jnp.tile(g_bias.astype(jnp.float32), mult).reshape(mult * lin, 1)

    # ---- pallas_call --------------------------------------------------------
    x_out_k, f_k = pl.pallas_call(
        _hrad_kernel,
        out_shape=(jax.ShapeDtypeStruct((n_bb, ho, mult * L), x.dtype),
                   jax.ShapeDtypeStruct((n_bb, mult * lin, nc), x.dtype)),
        grid_spec=pltpu.PrefetchScalarGridSpec(
            num_scalar_prefetch=0,
            grid=(n_bb,),
            in_specs=[
                pl.BlockSpec((None, _KS, 2, ho + 3, L),
                             lambda b: (b, 0, 0, 0, 0)),
                pl.BlockSpec((mult, n_taps, 1, L), lambda b: (0, 0, 0, 0)),
                pl.BlockSpec((mult, 1, L), lambda b: (0, 0, 0)),
                pl.BlockSpec((lin, ho, L), lambda b: (0, 0, 0)),
                pl.BlockSpec((L, nc), lambda b: (0, 0)),
                pl.BlockSpec((mult * lin, 1), lambda b: (0, 0)),
            ],
            out_specs=(
                pl.BlockSpec((None, ho, mult * L), lambda b: (b, 0, 0)),
                pl.BlockSpec((None, mult * lin, nc), lambda b: (b, 0, 0)),
            ),
        ),
        compiler_params=pltpu.CompilerParams(
            dimension_semantics=("parallel",)),
    )(xc, w_lane, shift_lane, gwb, ssum, gbias)

    # ---- host-side glue: un-interleave the lane-dense slabs to NCHW --------
    x_out = x_out_k.reshape(n_bb, ho, mult, nb, c_in, wo)
    x_out = x_out.transpose(0, 3, 4, 2, 1, 5).reshape(n, c_out, ho, wo)
    f = f_k.reshape(n_bb, mult, lin, nb, c_in)
    f = f.transpose(0, 3, 4, 1, 2).reshape(n, c_out, lin)
    return x_out, f


def hrad_block_reference(x, conv_w, conv_b, bn_gamma, bn_beta, bn_mean, bn_var,
                         g_weight, g_bias, eps=1e-5):
    """Pure-JAX reference mirroring PyTorch inference semantics (f32-precise)."""
    c_in = x.shape[1]
    y = lax.conv_general_dilated(
        x, conv_w, window_strides=(2, 2), padding=((3, 3), (3, 3)),
        dimension_numbers=("NCHW", "OIHW", "NCHW"), feature_group_count=c_in,
        precision=lax.Precision.HIGHEST)
    y = y + conv_b[None, :, None, None]
    y = (y - bn_mean[None, :, None, None]) / jnp.sqrt(
        bn_var[None, :, None, None] + eps)
    y = y * bn_gamma[None, :, None, None] + bn_beta[None, :, None, None]
    y = jax.nn.selu(y)
    n, c_out, ho, wo = y.shape
    f = jnp.einsum("ncp,lp->ncl", y.reshape(n, c_out, ho * wo), g_weight,
                   precision=lax.Precision.HIGHEST) + g_bias
    return y, f


if __name__ == "__main__":
    # Shapes consistent with the module:
    #   inp=4, outp=8 (groups=inp => channel multiplier 2), input 16x16,
    #   stride-2 7x7 conv -> 8x8, so gsize=8, linear_scale=1 (default).
    N, C_IN, H, W = 2, 4, 16, 16
    C_OUT, GSIZE, LIN = 8, 8, 1

    key = jax.random.PRNGKey(0)
    (kx, kw, kb, kgam, kbet, kmu, kvar, kgw, kgb) = jax.random.split(key, 9)

    x = jax.random.normal(kx, (N, C_IN, H, W), jnp.float32)
    conv_w = 0.1 * jax.random.normal(kw, (C_OUT, 1, 7, 7), jnp.float32)
    conv_b = 0.1 * jax.random.normal(kb, (C_OUT,), jnp.float32)
    bn_gamma = 1.0 + 0.1 * jax.random.normal(kgam, (C_OUT,), jnp.float32)
    bn_beta = 0.1 * jax.random.normal(kbet, (C_OUT,), jnp.float32)
    bn_mean = 0.1 * jax.random.normal(kmu, (C_OUT,), jnp.float32)
    bn_var = jax.random.uniform(kvar, (C_OUT,), jnp.float32, 0.5, 1.5)
    g_weight = jax.random.normal(kgw, (LIN, GSIZE * GSIZE), jnp.float32) / GSIZE
    g_bias = 0.1 * jax.random.normal(kgb, (LIN,), jnp.float32)

    x_out, f = hrad_block(x, conv_w, conv_b, bn_gamma, bn_beta, bn_mean,
                          bn_var, g_weight, g_bias)
    jax.block_until_ready((x_out, f))

    x_ref, f_ref = hrad_block_reference(x, conv_w, conv_b, bn_gamma, bn_beta,
                                        bn_mean, bn_var, g_weight, g_bias)

    assert x_out.shape == (N, C_OUT, GSIZE, GSIZE)
    assert f.shape == (N, C_OUT, LIN)
    assert jnp.allclose(x_out, x_ref, atol=1e-4, rtol=1e-4), "x mismatch"
    assert jnp.allclose(f, f_ref, atol=5e-3, rtol=5e-3), "f mismatch"
    print("KERNEL_OK")
</pallas_src>

<mosaic_0001>
module attributes {stable_mosaic.version = 11 : i64} {
  func.func @_hrad_kernel(%arg0: i32, %arg1: memref<1x7x2x11x64xf32, #tpu.memory_space<vmem>>, %arg2: memref<2x49x1x64xf32, #tpu.memory_space<vmem>>, %arg3: memref<2x1x64xf32, #tpu.memory_space<vmem>>, %arg4: memref<1x8x64xf32, #tpu.memory_space<vmem>>, %arg5: memref<64x8xf32, #tpu.memory_space<vmem>>, %arg6: memref<2x1xf32, #tpu.memory_space<vmem>>, %arg7: memref<1x8x128xf32, #tpu.memory_space<vmem>>, %arg8: memref<1x2x8xf32, #tpu.memory_space<vmem>>) attributes {dimension_semantics = [#tpu.dimension_semantics<parallel>], iteration_bounds = array<i64: 1>, scalar_prefetch = 0 : i64, scratch_operands = 0 : i64, tpu.core_type = #tpu.core_type<tc>, window_params = [{transform_indices = @transform_0, window_bounds = array<i64: 1, 7, 2, 11, 64>}, {pipeline_mode = #tpu.pipeline_mode<synchronous>, transform_indices = @transform_1, window_bounds = array<i64: 2, 49, 1, 64>}, {pipeline_mode = #tpu.pipeline_mode<synchronous>, transform_indices = @transform_2, window_bounds = array<i64: 2, 1, 64>}, {pipeline_mode = #tpu.pipeline_mode<synchronous>, transform_indices = @transform_3, window_bounds = array<i64: 1, 8, 64>}, {pipeline_mode = #tpu.pipeline_mode<synchronous>, transform_indices = @transform_4, window_bounds = array<i64: 64, 8>}, {pipeline_mode = #tpu.pipeline_mode<synchronous>, transform_indices = @transform_5, window_bounds = array<i64: 2, 1>}, {transform_indices = @transform_6, window_bounds = array<i64: 1, 8, 128>}, {transform_indices = @transform_7, window_bounds = array<i64: 1, 2, 8>}]} {
    %c0 = arith.constant 0 : index
    %c0_0 = arith.constant 0 : index
    %c0_1 = arith.constant 0 : index
    %c0_2 = arith.constant 0 : index
    %c0_3 = arith.constant 0 : index
    %0 = vector.load %arg1[%c0, %c0_0, %c0_1, %c0_2, %c0_3] : memref<1x7x2x11x64xf32, #tpu.memory_space<vmem>>, vector<1x1x1x8x64xf32>
    %1 = vector.shape_cast %0 : vector<1x1x1x8x64xf32> to vector<8x64xf32>
    %c0_4 = arith.constant 0 : index
    %c0_5 = arith.constant 0 : index
    %c0_6 = arith.constant 0 : index
    %c0_7 = arith.constant 0 : index
    %2 = vector.load %arg2[%c0_4, %c0_5, %c0_6, %c0_7] : memref<2x49x1x64xf32, #tpu.memory_space<vmem>>, vector<1x1x1x64xf32>
    %3 = vector.shape_cast %2 : vector<1x1x1x64xf32> to vector<1x64xf32>
    %4 = vector.broadcast %3 : vector<1x64xf32> to vector<8x64xf32>
    %5 = arith.mulf %4, %1 : vector<8x64xf32>
    %c1 = arith.constant 1 : index
    %c0_8 = arith.constant 0 : index
    %c0_9 = arith.constant 0 : index
    %c0_10 = arith.constant 0 : index
    %6 = vector.load %arg2[%c1, %c0_8, %c0_9, %c0_10] : memref<2x49x1x64xf32, #tpu.memory_space<vmem>>, vector<1x1x1x64xf32>
    %7 = vector.shape_cast %6 : vector<1x1x1x64xf32> to vector<1x64xf32>
    %8 = vector.broadcast %7 : vector<1x64xf32> to vector<8x64xf32>
    %9 = arith.mulf %8, %1 : vector<8x64xf32>
    %c0_11 = arith.constant 0 : index
    %c1_12 = arith.constant 1 : index
    %c0_13 = arith.constant 0 : index
    %c0_14 = arith.constant 0 : index
    %c0_15 = arith.constant 0 : index
    %10 = vector.load %arg1[%c0_11, %c1_12, %c0_13, %c0_14, %c0_15] : memref<1x7x2x11x64xf32, #tpu.memory_space<vmem>>, vector<1x1x1x8x64xf32>
    %11 = vector.shape_cast %10 : vector<1x1x1x8x64xf32> to vector<8x64xf32>
    %c0_16 = arith.constant 0 : index
    %c1_17 = arith.constant 1 : index
    %c0_18 = arith.constant 0 : index
    %c0_19 = arith.constant 0 : index
    %12 = vector.load %arg2[%c0_16, %c1_17, %c0_18, %c0_19] : memref<2x49x1x64xf32, #tpu.memory_space<vmem>>, vector<1x1x1x64xf32>
    %13 = vector.shape_cast %12 : vector<1x1x1x64xf32> to vector<1x64xf32>
    %14 = vector.broadcast %13 : vector<1x64xf32> to vector<8x64xf32>
    %15 = arith.mulf %14, %11 : vector<8x64xf32>
    %c1_20 = arith.constant 1 : index
    %c1_21 = arith.constant 1 : index
    %c0_22 = arith.constant 0 : index
    %c0_23 = arith.constant 0 : index
    %16 = vector.load %arg2[%c1_20, %c1_21, %c0_22, %c0_23] : memref<2x49x1x64xf32, #tpu.memory_space<vmem>>, vector<1x1x1x64xf32>
    %17 = vector.shape_cast %16 : vector<1x1x1x64xf32> to vector<1x64xf32>
    %18 = vector.broadcast %17 : vector<1x64xf32> to vector<8x64xf32>
    %19 = arith.mulf %18, %11 : vector<8x64xf32>
    %c0_24 = arith.constant 0 : index
    %c2 = arith.constant 2 : index
    %c0_25 = arith.constant 0 : index
    %c0_26 = arith.constant 0 : index
    %c0_27 = arith.constant 0 : index
    %20 = vector.load %arg1[%c0_24, %c2, %c0_25, %c0_26, %c0_27] : memref<1x7x2x11x64xf32, #tpu.memory_space<vmem>>, vector<1x1x1x8x64xf32>
    %21 = vector.shape_cast %20 : vector<1x1x1x8x64xf32> to vector<8x64xf32>
    %c0_28 = arith.constant 0 : index
    %c2_29 = arith.constant 2 : index
    %c0_30 = arith.constant 0 : index
    %c0_31 = arith.constant 0 : index
    %22 = vector.load %arg2[%c0_28, %c2_29, %c0_30, %c0_31] : memref<2x49x1x64xf32, #tpu.memory_space<vmem>>, vector<1x1x1x64xf32>
    %23 = vector.shape_cast %22 : vector<1x1x1x64xf32> to vector<1x64xf32>
    %24 = vector.broadcast %23 : vector<1x64xf32> to vector<8x64xf32>
    %25 = arith.mulf %24, %21 : vector<8x64xf32>
    %c1_32 = arith.constant 1 : index
    %c2_33 = arith.constant 2 : index
    %c0_34 = arith.constant 0 : index
    %c0_35 = arith.constant 0 : index
    %26 = vector.load %arg2[%c1_32, %c2_33, %c0_34, %c0_35] : memref<2x49x1x64xf32, #tpu.memory_space<vmem>>, vector<1x1x1x64xf32>
    %27 = vector.shape_cast %26 : vector<1x1x1x64xf32> to vector<1x64xf32>
    %28 = vector.broadcast %27 : vector<1x64xf32> to vector<8x64xf32>
    %29 = arith.mulf %28, %21 : vector<8x64xf32>
    %c0_36 = arith.constant 0 : index
    %c3 = arith.constant 3 : index
    %c0_37 = arith.constant 0 : index
    %c0_38 = arith.constant 0 : index
    %c0_39 = arith.constant 0 : index
    %30 = vector.load %arg1[%c0_36, %c3, %c0_37, %c0_38, %c0_39] : memref<1x7x2x11x64xf32, #tpu.memory_space<vmem>>, vector<1x1x1x8x64xf32>
    %31 = vector.shape_cast %30 : vector<1x1x1x8x64xf32> to vector<8x64xf32>
    %c0_40 = arith.constant 0 : index
    %c3_41 = arith.constant 3 : index
    %c0_42 = arith.constant 0 : index
    %c0_43 = arith.constant 0 : index
    %32 = vector.load %arg2[%c0_40, %c3_41, %c0_42, %c0_43] : memref<2x49x1x64xf32, #tpu.memory_space<vmem>>, vector<1x1x1x64xf32>
    %33 = vector.shape_cast %32 : vector<1x1x1x64xf32> to vector<1x64xf32>
    %34 = vector.broadcast %33 : vector<1x64xf32> to vector<8x64xf32>
    %35 = arith.mulf %34, %31 : vector<8x64xf32>
    %c1_44 = arith.constant 1 : index
    %c3_45 = arith.constant 3 : index
    %c0_46 = arith.constant 0 : index
    %c0_47 = arith.constant 0 : index
    %36 = vector.load %arg2[%c1_44, %c3_45, %c0_46, %c0_47] : memref<2x49x1x64xf32, #tpu.memory_space<vmem>>, vector<1x1x1x64xf32>
    %37 = vector.shape_cast %36 : vector<1x1x1x64xf32> to vector<1x64xf32>
    %38 = vector.broadcast %37 : vector<1x64xf32> to vector<8x64xf32>
    %39 = arith.mulf %38, %31 : vector<8x64xf32>
    %c0_48 = arith.constant 0 : index
    %c4 = arith.constant 4 : index
    %c0_49 = arith.constant 0 : index
    %c0_50 = arith.constant 0 : index
    %c0_51 = arith.constant 0 : index
    %40 = vector.load %arg1[%c0_48, %c4, %c0_49, %c0_50, %c0_51] : memref<1x7x2x11x64xf32, #tpu.memory_space<vmem>>, vector<1x1x1x8x64xf32>
    %41 = vector.shape_cast %40 : vector<1x1x1x8x64xf32> to vector<8x64xf32>
    %c0_52 = arith.constant 0 : index
    %c4_53 = arith.constant 4 : index
    %c0_54 = arith.constant 0 : index
    %c0_55 = arith.constant 0 : index
    %42 = vector.load %arg2[%c0_52, %c4_53, %c0_54, %c0_55] : memref<2x49x1x64xf32, #tpu.memory_space<vmem>>, vector<1x1x1x64xf32>
    %43 = vector.shape_cast %42 : vector<1x1x1x64xf32> to vector<1x64xf32>
    %44 = vector.broadcast %43 : vector<1x64xf32> to vector<8x64xf32>
    %45 = arith.mulf %44, %41 : vector<8x64xf32>
    %46 = arith.addf %5, %45 : vector<8x64xf32>
    %c1_56 = arith.constant 1 : index
    %c4_57 = arith.constant 4 : index
    %c0_58 = arith.constant 0 : index
    %c0_59 = arith.constant 0 : index
    %47 = vector.load %arg2[%c1_56, %c4_57, %c0_58, %c0_59] : memref<2x49x1x64xf32, #tpu.memory_space<vmem>>, vector<1x1x1x64xf32>
    %48 = vector.shape_cast %47 : vector<1x1x1x64xf32> to vector<1x64xf32>
    %49 = vector.broadcast %48 : vector<1x64xf32> to vector<8x64xf32>
    %50 = arith.mulf %49, %41 : vector<8x64xf32>
    %51 = arith.addf %9, %50 : vector<8x64xf32>
    %c0_60 = arith.constant 0 : index
    %c5 = arith.constant 5 : index
    %c0_61 = arith.constant 0 : index
    %c0_62 = arith.constant 0 : index
    %c0_63 = arith.constant 0 : index
    %52 = vector.load %arg1[%c0_60, %c5, %c0_61, %c0_62, %c0_63] : memref<1x7x2x11x64xf32, #tpu.memory_space<vmem>>, vector<1x1x1x8x64xf32>
    %53 = vector.shape_cast %52 : vector<1x1x1x8x64xf32> to vector<8x64xf32>
    %c0_64 = arith.constant 0 : index
    %c5_65 = arith.constant 5 : index
    %c0_66 = arith.constant 0 : index
    %c0_67 = arith.constant 0 : index
    %54 = vector.load %arg2[%c0_64, %c5_65, %c0_66, %c0_67] : memref<2x49x1x64xf32, #tpu.memory_space<vmem>>, vector<1x1x1x64xf32>
    %55 = vector.shape_cast %54 : vector<1x1x1x64xf32> to vector<1x64xf32>
    %56 = vector.broadcast %55 : vector<1x64xf32> to vector<8x64xf32>
    %57 = arith.mulf %56, %53 : vector<8x64xf32>
    %58 = arith.addf %15, %57 : vector<8x64xf32>
    %c1_68 = arith.constant 1 : index
    %c5_69 = arith.constant 5 : index
    %c0_70 = arith.constant 0 : index
    %c0_71 = arith.constant 0 : index
    %59 = vector.load %arg2[%c1_68, %c5_69, %c0_70, %c0_71] : memref<2x49x1x64xf32, #tpu.memory_space<vmem>>, vector<1x1x1x64xf32>
    %60 = vector.shape_cast %59 : vector<1x1x1x64xf32> to vector<1x64xf32>
    %61 = vector.broadcast %60 : vector<1x64xf32> to vector<8x64xf32>
    %62 = arith.mulf %61, %53 : vector<8x64xf32>
    %63 = arith.addf %19, %62 : vector<8x64xf32>
    %c0_72 = arith.constant 0 : index
    %c6 = arith.constant 6 : index
    %c0_73 = arith.constant 0 : index
    %c0_74 = arith.constant 0 : index
    %c0_75 = arith.constant 0 : index
    %64 = vector.load %arg1[%c0_72, %c6, %c0_73, %c0_74, %c0_75] : memref<1x7x2x11x64xf32, #tpu.memory_space<vmem>>, vector<1x1x1x8x64xf32>
    %65 = vector.shape_cast %64 : vector<1x1x1x8x64xf32> to vector<8x64xf32>
    %c0_76 = arith.constant 0 : index
    %c6_77 = arith.constant 6 : index
    %c0_78 = arith.constant 0 : index
    %c0_79 = arith.constant 0 : index
    %66 = vector.load %arg2[%c0_76, %c6_77, %c0_78, %c0_79] : memref<2x49x1x64xf32, #tpu.memory_space<vmem>>, vector<1x1x1x64xf32>
    %67 = vector.shape_cast %66 : vector<1x1x1x64xf32> to vector<1x64xf32>
    %68 = vector.broadcast %67 : vector<1x64xf32> to vector<8x64xf32>
    %69 = arith.mulf %68, %65 : vector<8x64xf32>
    %70 = arith.addf %25, %69 : vector<8x64xf32>
    %c1_80 = arith.constant 1 : index
    %c6_81 = arith.constant 6 : index
    %c0_82 = arith.constant 0 : index
    %c0_83 = arith.constant 0 : index
    %71 = vector.load %arg2[%c1_80, %c6_81, %c0_82, %c0_83] : memref<2x49x1x64xf32, #tpu.memory_space<vmem>>, vector<1x1x1x64xf32>
    %72 = vector.shape_cast %71 : vector<1x1x1x64xf32> to vector<1x64xf32>
    %73 = vector.broadcast %72 : vector<1x64xf32> to vector<8x64xf32>
    %74 = arith.mulf %73, %65 : vector<8x64xf32>
    %75 = arith.addf %29, %74 : vector<8x64xf32>
    %c0_84 = arith.constant 0 : index
    %c0_85 = arith.constant 0 : index
    %c1_86 = arith.constant 1 : index
    %c0_87 = arith.constant 0 : index
    %c0_88 = arith.constant 0 : index
    %76 = vector.load %arg1[%c0_84, %c0_85, %c1_86, %c0_87, %c0_88] : memref<1x7x2x11x64xf32, #tpu.memory_space<vmem>>, vector<1x1x1x8x64xf32>
    %77 = vector.shape_cast %76 : vector<1x1x1x8x64xf32> to vector<8x64xf32>
    %c0_89 = arith.constant 0 : index
    %c7 = arith.constant 7 : index
    %c0_90 = arith.constant 0 : index
    %c0_91 = arith.constant 0 : index
    %78 = vector.load %arg2[%c0_89, %c7, %c0_90, %c0_91] : memref<2x49x1x64xf32, #tpu.memory_space<vmem>>, vector<1x1x1x64xf32>
    %79 = vector.shape_cast %78 : vector<1x1x1x64xf32> to vector<1x64xf32>
    %80 = vector.broadcast %79 : vector<1x64xf32> to vector<8x64xf32>
    %81 = arith.mulf %80, %77 : vector<8x64xf32>
    %82 = arith.addf %35, %81 : vector<8x64xf32>
    %c1_92 = arith.constant 1 : index
    %c7_93 = arith.constant 7 : index
    %c0_94 = arith.constant 0 : index
    %c0_95 = arith.constant 0 : index
    %83 = vector.load %arg2[%c1_92, %c7_93, %c0_94, %c0_95] : memref<2x49x1x64xf32, #tpu.memory_space<vmem>>, vector<1x1x1x64xf32>
    %84 = vector.shape_cast %83 : vector<1x1x1x64xf32> to vector<1x64xf32>
    %85 = vector.broadcast %84 : vector<1x64xf32> to vector<8x64xf32>
    %86 = arith.mulf %85, %77 : vector<8x64xf32>
    %87 = arith.addf %39, %86 : vector<8x64xf32>
    %c0_96 = arith.constant 0 : index
    %c1_97 = arith.constant 1 : index
    %c1_98 = arith.constant 1 : index
    %c0_99 = arith.constant 0 : index
    %c0_100 = arith.constant 0 : index
    %88 = vector.load %arg1[%c0_96, %c1_97, %c1_98, %c0_99, %c0_100] : memref<1x7x2x11x64xf32, #tpu.memory_space<vmem>>, vector<1x1x1x8x64xf32>
    %89 = vector.shape_cast %88 : vector<1x1x1x8x64xf32> to vector<8x64xf32>
    %c0_101 = arith.constant 0 : index
    %c8 = arith.constant 8 : index
    %c0_102 = arith.constant 0 : index
    %c0_103 = arith.constant 0 : index
    %90 = vector.load %arg2[%c0_101, %c8, %c0_102, %c0_103] : memref<2x49x1x64xf32, #tpu.memory_space<vmem>>, vector<1x1x1x64xf32>
    %91 = vector.shape_cast %90 : vector<1x1x1x64xf32> to vector<1x64xf32>
    %92 = vector.broadcast %91 : vector<1x64xf32> to vector<8x64xf32>
    %93 = arith.mulf %92, %89 : vector<8x64xf32>
    %94 = arith.addf %46, %93 : vector<8x64xf32>
    %c1_104 = arith.constant 1 : index
    %c8_105 = arith.constant 8 : index
    %c0_106 = arith.constant 0 : index
    %c0_107 = arith.constant 0 : index
    %95 = vector.load %arg2[%c1_104, %c8_105, %c0_106, %c0_107] : memref<2x49x1x64xf32, #tpu.memory_space<vmem>>, vector<1x1x1x64xf32>
    %96 = vector.shape_cast %95 : vector<1x1x1x64xf32> to vector<1x64xf32>
    %97 = vector.broadcast %96 : vector<1x64xf32> to vector<8x64xf32>
    %98 = arith.mulf %97, %89 : vector<8x64xf32>
    %99 = arith.addf %51, %98 : vector<8x64xf32>
    %c0_108 = arith.constant 0 : index
    %c2_109 = arith.constant 2 : index
    %c1_110 = arith.constant 1 : index
    %c0_111 = arith.constant 0 : index
    %c0_112 = arith.constant 0 : index
    %100 = vector.load %arg1[%c0_108, %c2_109, %c1_110, %c0_111, %c0_112] : memref<1x7x2x11x64xf32, #tpu.memory_space<vmem>>, vector<1x1x1x8x64xf32>
    %101 = vector.shape_cast %100 : vector<1x1x1x8x64xf32> to vector<8x64xf32>
    %c0_113 = arith.constant 0 : index
    %c9 = arith.constant 9 : index
    %c0_114 = arith.constant 0 : index
    %c0_115 = arith.constant 0 : index
    %102 = vector.load %arg2[%c0_113, %c9, %c0_114, %c0_115] : memref<2x49x1x64xf32, #tpu.memory_space<vmem>>, vector<1x1x1x64xf32>
    %103 = vector.shape_cast %102 : vector<1x1x1x64xf32> to vector<1x64xf32>
    %104 = vector.broadcast %103 : vector<1x64xf32> to vector<8x64xf32>
    %105 = arith.mulf %104, %101 : vector<8x64xf32>
    %106 = arith.addf %58, %105 : vector<8x64xf32>
    %c1_116 = arith.constant 1 : index
    %c9_117 = arith.constant 9 : index
    %c0_118 = arith.constant 0 : index
    %c0_119 = arith.constant 0 : index
    %107 = vector.load %arg2[%c1_116, %c9_117, %c0_118, %c0_119] : memref<2x49x1x64xf32, #tpu.memory_space<vmem>>, vector<1x1x1x64xf32>
    %108 = vector.shape_cast %107 : vector<1x1x1x64xf32> to vector<1x64xf32>
    %109 = vector.broadcast %108 : vector<1x64xf32> to vector<8x64xf32>
    %110 = arith.mulf %109, %101 : vector<8x64xf32>
    %111 = arith.addf %63, %110 : vector<8x64xf32>
    %c0_120 = arith.constant 0 : index
    %c3_121 = arith.constant 3 : index
    %c1_122 = arith.constant 1 : index
    %c0_123 = arith.constant 0 : index
    %c0_124 = arith.constant 0 : index
    %112 = vector.load %arg1[%c0_120, %c3_121, %c1_122, %c0_123, %c0_124] : memref<1x7x2x11x64xf32, #tpu.memory_space<vmem>>, vector<1x1x1x8x64xf32>
    %113 = vector.shape_cast %112 : vector<1x1x1x8x64xf32> to vector<8x64xf32>
    %c0_125 = arith.constant 0 : index
    %c10 = arith.constant 10 : index
    %c0_126 = arith.constant 0 : index
    %c0_127 = arith.constant 0 : index
    %114 = vector.load %arg2[%c0_125, %c10, %c0_126, %c0_127] : memref<2x49x1x64xf32, #tpu.memory_space<vmem>>, vector<1x1x1x64xf32>
    %115 = vector.shape_cast %114 : vector<1x1x1x64xf32> to vector<1x64xf32>
    %116 = vector.broadcast %115 : vector<1x64xf32> to vector<8x64xf32>
    %117 = arith.mulf %116, %113 : vector<8x64xf32>
    %118 = arith.addf %70, %117 : vector<8x64xf32>
    %c1_128 = arith.constant 1 : index
    %c10_129 = arith.constant 10 : index
    %c0_130 = arith.constant 0 : index
    %c0_131 = arith.constant 0 : index
    %119 = vector.load %arg2[%c1_128, %c10_129, %c0_130, %c0_131] : memref<2x49x1x64xf32, #tpu.memory_space<vmem>>, vector<1x1x1x64xf32>
    %120 = vector.shape_cast %119 : vector<1x1x1x64xf32> to vector<1x64xf32>
    %121 = vector.broadcast %120 : vector<1x64xf32> to vector<8x64xf32>
    %122 = arith.mulf %121, %113 : vector<8x64xf32>
    %123 = arith.addf %75, %122 : vector<8x64xf32>
    %c0_132 = arith.constant 0 : index
    %c4_133 = arith.constant 4 : index
    %c1_134 = arith.constant 1 : index
    %c0_135 = arith.constant 0 : index
    %c0_136 = arith.constant 0 : index
    %124 = vector.load %arg1[%c0_132, %c4_133, %c1_134, %c0_135, %c0_136] : memref<1x7x2x11x64xf32, #tpu.memory_space<vmem>>, vector<1x1x1x8x64xf32>
    %125 = vector.shape_cast %124 : vector<1x1x1x8x64xf32> to vector<8x64xf32>
    %c0_137 = arith.constant 0 : index
    %c11 = arith.constant 11 : index
    %c0_138 = arith.constant 0 : index
    %c0_139 = arith.constant 0 : index
    %126 = vector.load %arg2[%c0_137, %c11, %c0_138, %c0_139] : memref<2x49x1x64xf32, #tpu.memory_space<vmem>>, vector<1x1x1x64xf32>
    %127 = vector.shape_cast %126 : vector<1x1x1x64xf32> to vector<1x64xf32>
    %128 = vector.broadcast %127 : vector<1x64xf32> to vector<8x64xf32>
    %129 = arith.mulf %128, %125 : vector<8x64xf32>
    %130 = arith.addf %82, %129 : vector<8x64xf32>
    %c1_140 = arith.constant 1 : index
    %c11_141 = arith.constant 11 : index
    %c0_142 = arith.constant 0 : index
    %c0_143 = arith.constant 0 : index
    %131 = vector.load %arg2[%c1_140, %c11_141, %c0_142, %c0_143] : memref<2x49x1x64xf32, #tpu.memory_space<vmem>>, vector<1x1x1x64xf32>
    %132 = vector.shape_cast %131 : vector<1x1x1x64xf32> to vector<1x64xf32>
    %133 = vector.broadcast %132 : vector<1x64xf32> to vector<8x64xf32>
    %134 = arith.mulf %133, %125 : vector<8x64xf32>
    %135 = arith.addf %87, %134 : vector<8x64xf32>
    %c0_144 = arith.constant 0 : index
    %c5_145 = arith.constant 5 : index
    %c1_146 = arith.constant 1 : index
    %c0_147 = arith.constant 0 : index
    %c0_148 = arith.constant 0 : index
    %136 = vector.load %arg1[%c0_144, %c5_145, %c1_146, %c0_147, %c0_148] : memref<1x7x2x11x64xf32, #tpu.memory_space<vmem>>, vector<1x1x1x8x64xf32>
    %137 = vector.shape_cast %136 : vector<1x1x1x8x64xf32> to vector<8x64xf32>
    %c0_149 = arith.constant 0 : index
    %c12 = arith.constant 12 : index
    %c0_150 = arith.constant 0 : index
    %c0_151 = arith.constant 0 : index
    %138 = vector.load %arg2[%c0_149, %c12, %c0_150, %c0_151] : memref<2x49x1x64xf32, #tpu.memory_space<vmem>>, vector<1x1x1x64xf32>
    %139 = vector.shape_cast %138 : vector<1x1x1x64xf32> to vector<1x64xf32>
    %140 = vector.broadcast %139 : vector<1x64xf32> to vector<8x64xf32>
    %141 = arith.mulf %140, %137 : vector<8x64xf32>
    %142 = arith.addf %94, %141 : vector<8x64xf32>
    %c1_152 = arith.constant 1 : index
    %c12_153 = arith.constant 12 : index
    %c0_154 = arith.constant 0 : index
    %c0_155 = arith.constant 0 : index
    %143 = vector.load %arg2[%c1_152, %c12_153, %c0_154, %c0_155] : memref<2x49x1x64xf32, #tpu.memory_space<vmem>>, vector<1x1x1x64xf32>
    %144 = vector.shape_cast %143 : vector<1x1x1x64xf32> to vector<1x64xf32>
    %145 = vector.broadcast %144 : vector<1x64xf32> to vector<8x64xf32>
    %146 = arith.mulf %145, %137 : vector<8x64xf32>
    %147 = arith.addf %99, %146 : vector<8x64xf32>
    %c0_156 = arith.constant 0 : index
    %c6_157 = arith.constant 6 : index
    %c1_158 = arith.constant 1 : index
    %c0_159 = arith.constant 0 : index
    %c0_160 = arith.constant 0 : index
    %148 = vector.load %arg1[%c0_156, %c6_157, %c1_158, %c0_159, %c0_160] : memref<1x7x2x11x64xf32, #tpu.memory_space<vmem>>, vector<1x1x1x8x64xf32>
    %149 = vector.shape_cast %148 : vector<1x1x1x8x64xf32> to vector<8x64xf32>
    %c0_161 = arith.constant 0 : index
    %c13 = arith.constant 13 : index
    %c0_162 = arith.constant 0 : index
    %c0_163 = arith.constant 0 : index
    %150 = vector.load %arg2[%c0_161, %c13, %c0_162, %c0_163] : memref<2x49x1x64xf32, #tpu.memory_space<vmem>>, vector<1x1x1x64xf32>
    %151 = vector.shape_cast %150 : vector<1x1x1x64xf32> to vector<1x64xf32>
    %152 = vector.broadcast %151 : vector<1x64xf32> to vector<8x64xf32>
    %153 = arith.mulf %152, %149 : vector<8x64xf32>
    %154 = arith.addf %106, %153 : vector<8x64xf32>
    %c1_164 = arith.constant 1 : index
    %c13_165 = arith.constant 13 : index
    %c0_166 = arith.constant 0 : index
    %c0_167 = arith.constant 0 : index
    %155 = vector.load %arg2[%c1_164, %c13_165, %c0_166, %c0_167] : memref<2x49x1x64xf32, #tpu.memory_space<vmem>>, vector<1x1x1x64xf32>
    %156 = vector.shape_cast %155 : vector<1x1x1x64xf32> to vector<1x64xf32>
    %157 = vector.broadcast %156 : vector<1x64xf32> to vector<8x64xf32>
    %158 = arith.mulf %157, %149 : vector<8x64xf32>
    %159 = arith.addf %111, %158 : vector<8x64xf32>
    %c0_168 = arith.constant 0 : index
    %c0_169 = arith.constant 0 : index
    %c0_170 = arith.constant 0 : index
    %c1_171 = arith.constant 1 : index
    %c0_172 = arith.constant 0 : index
    %160 = vector.load %arg1[%c0_168, %c0_169, %c0_170, %c1_171, %c0_172] : memref<1x7x2x11x64xf32, #tpu.memory_space<vmem>>, vector<1x1x1x8x64xf32>
    %161 = vector.shape_cast %160 : vector<1x1x1x8x64xf32> to vector<8x64xf32>
    %c0_173 = arith.constant 0 : index
    %c14 = arith.constant 14 : index
    %c0_174 = arith.constant 0 : index
    %c0_175 = arith.constant 0 : index
    %162 = vector.load %arg2[%c0_173, %c14, %c0_174, %c0_175] : memref<2x49x1x64xf32, #tpu.memory_space<vmem>>, vector<1x1x1x64xf32>
    %163 = vector.shape_cast %162 : vector<1x1x1x64xf32> to vector<1x64xf32>
    %164 = vector.broadcast %163 : vector<1x64xf32> to vector<8x64xf32>
    %165 = arith.mulf %164, %161 : vector<8x64xf32>
    %166 = arith.addf %118, %165 : vector<8x64xf32>
    %c1_176 = arith.constant 1 : index
    %c14_177 = arith.constant 14 : index
    %c0_178 = arith.constant 0 : index
    %c0_179 = arith.constant 0 : index
    %167 = vector.load %arg2[%c1_176, %c14_177, %c0_178, %c0_179] : memref<2x49x1x64xf32, #tpu.memory_space<vmem>>, vector<1x1x1x64xf32>
    %168 = vector.shape_cast %167 : vector<1x1x1x64xf32> to vector<1x64xf32>
    %169 = vector.broadcast %168 : vector<1x64xf32> to vector<8x64xf32>
    %170 = arith.mulf %169, %161 : vector<8x64xf32>
    %171 = arith.addf %123, %170 : vector<8x64xf32>
    %c0_180 = arith.constant 0 : index
    %c1_181 = arith.constant 1 : index
    %c0_182 = arith.constant 0 : index
    %c1_183 = arith.constant 1 : index
    %c0_184 = arith.constant 0 : index
    %172 = vector.load %arg1[%c0_180, %c1_181, %c0_182, %c1_183, %c0_184] : memref<1x7x2x11x64xf32, #tpu.memory_space<vmem>>, vector<1x1x1x8x64xf32>
    %173 = vector.shape_cast %172 : vector<1x1x1x8x64xf32> to vector<8x64xf32>
    %c0_185 = arith.constant 0 : index
    %c15 = arith.constant 15 : index
    %c0_186 = arith.constant 0 : index
    %c0_187 = arith.constant 0 : index
    %174 = vector.load %arg2[%c0_185, %c15, %c0_186, %c0_187] : memref<2x49x1x64xf32, #tpu.memory_space<vmem>>, vector<1x1x1x64xf32>
    %175 = vector.shape_cast %174 : vector<1x1x1x64xf32> to vector<1x64xf32>
    %176 = vector.broadcast %175 : vector<1x64xf32> to vector<8x64xf32>
    %177 = arith.mulf %176, %173 : vector<8x64xf32>
    %178 = arith.addf %130, %177 : vector<8x64xf32>
    %c1_188 = arith.constant 1 : index
    %c15_189 = arith.constant 15 : index
    %c0_190 = arith.constant 0 : index
    %c0_191 = arith.constant 0 : index
    %179 = vector.load %arg2[%c1_188, %c15_189, %c0_190, %c0_191] : memref<2x49x1x64xf32, #tpu.memory_space<vmem>>, vector<1x1x1x64xf32>
    %180 = vector.shape_cast %179 : vector<1x1x1x64xf32> to vector<1x64xf32>
    %181 = vector.broadcast %180 : vector<1x64xf32> to vector<8x64xf32>
    %182 = arith.mulf %181, %173 : vector<8x64xf32>
    %183 = arith.addf %135, %182 : vector<8x64xf32>
    %c0_192 = arith.constant 0 : index
    %c2_193 = arith.constant 2 : index
    %c0_194 = arith.constant 0 : index
    %c1_195 = arith.constant 1 : index
    %c0_196 = arith.constant 0 : index
    %184 = vector.load %arg1[%c0_192, %c2_193, %c0_194, %c1_195, %c0_196] : memref<1x7x2x11x64xf32, #tpu.memory_space<vmem>>, vector<1x1x1x8x64xf32>
    %185 = vector.shape_cast %184 : vector<1x1x1x8x64xf32> to vector<8x64xf32>
    %c0_197 = arith.constant 0 : index
    %c16 = arith.constant 16 : index
    %c0_198 = arith.constant 0 : index
    %c0_199 = arith.constant 0 : index
    %186 = vector.load %arg2[%c0_197, %c16, %c0_198, %c0_199] : memref<2x49x1x64xf32, #tpu.memory_space<vmem>>, vector<1x1x1x64xf32>
    %187 = vector.shape_cast %186 : vector<1x1x1x64xf32> to vector<1x64xf32>
    %188 = vector.broadcast %187 : vector<1x64xf32> to vector<8x64xf32>
    %189 = arith.mulf %188, %185 : vector<8x64xf32>
    %190 = arith.addf %142, %189 : vector<8x64xf32>
    %c1_200 = arith.constant 1 : index
    %c16_201 = arith.constant 16 : index
    %c0_202 = arith.constant 0 : index
    %c0_203 = arith.constant 0 : index
    %191 = vector.load %arg2[%c1_200, %c16_201, %c0_202, %c0_203] : memref<2x49x1x64xf32, #tpu.memory_space<vmem>>, vector<1x1x1x64xf32>
    %192 = vector.shape_cast %191 : vector<1x1x1x64xf32> to vector<1x64xf32>
    %193 = vector.broadcast %192 : vector<1x64xf32> to vector<8x64xf32>
    %194 = arith.mulf %193, %185 : vector<8x64xf32>
    %195 = arith.addf %147, %194 : vector<8x64xf32>
    %c0_204 = arith.constant 0 : index
    %c3_205 = arith.constant 3 : index
    %c0_206 = arith.constant 0 : index
    %c1_207 = arith.constant 1 : index
    %c0_208 = arith.constant 0 : index
    %196 = vector.load %arg1[%c0_204, %c3_205, %c0_206, %c1_207, %c0_208] : memref<1x7x2x11x64xf32, #tpu.memory_space<vmem>>, vector<1x1x1x8x64xf32>
    %197 = vector.shape_cast %196 : vector<1x1x1x8x64xf32> to vector<8x64xf32>
    %c0_209 = arith.constant 0 : index
    %c17 = arith.constant 17 : index
    %c0_210 = arith.constant 0 : index
    %c0_211 = arith.constant 0 : index
    %198 = vector.load %arg2[%c0_209, %c17, %c0_210, %c0_211] : memref<2x49x1x64xf32, #tpu.memory_space<vmem>>, vector<1x1x1x64xf32>
    %199 = vector.shape_cast %198 : vector<1x1x1x64xf32> to vector<1x64xf32>
    %200 = vector.broadcast %199 : vector<1x64xf32> to vector<8x64xf32>
    %201 = arith.mulf %200, %197 : vector<8x64xf32>
    %202 = arith.addf %154, %201 : vector<8x64xf32>
    %c1_212 = arith.constant 1 : index
    %c17_213 = arith.constant 17 : index
    %c0_214 = arith.constant 0 : index
    %c0_215 = arith.constant 0 : index
    %203 = vector.load %arg2[%c1_212, %c17_213, %c0_214, %c0_215] : memref<2x49x1x64xf32, #tpu.memory_space<vmem>>, vector<1x1x1x64xf32>
    %204 = vector.shape_cast %203 : vector<1x1x1x64xf32> to vector<1x64xf32>
    %205 = vector.broadcast %204 : vector<1x64xf32> to vector<8x64xf32>
    %206 = arith.mulf %205, %197 : vector<8x64xf32>
    %207 = arith.addf %159, %206 : vector<8x64xf32>
    %c0_216 = arith.constant 0 : index
    %c4_217 = arith.constant 4 : index
    %c0_218 = arith.constant 0 : index
    %c1_219 = arith.constant 1 : index
    %c0_220 = arith.constant 0 : index
    %208 = vector.load %arg1[%c0_216, %c4_217, %c0_218, %c1_219, %c0_220] : memref<1x7x2x11x64xf32, #tpu.memory_space<vmem>>, vector<1x1x1x8x64xf32>
    %209 = vector.shape_cast %208 : vector<1x1x1x8x64xf32> to vector<8x64xf32>
    %c0_221 = arith.constant 0 : index
    %c18 = arith.constant 18 : index
    %c0_222 = arith.constant 0 : index
    %c0_223 = arith.constant 0 : index
    %210 = vector.load %arg2[%c0_221, %c18, %c0_222, %c0_223] : memref<2x49x1x64xf32, #tpu.memory_space<vmem>>, vector<1x1x1x64xf32>
    %211 = vector.shape_cast %210 : vector<1x1x1x64xf32> to vector<1x64xf32>
    %212 = vector.broadcast %211 : vector<1x64xf32> to vector<8x64xf32>
    %213 = arith.mulf %212, %209 : vector<8x64xf32>
    %214 = arith.addf %166, %213 : vector<8x64xf32>
    %c1_224 = arith.constant 1 : index
    %c18_225 = arith.constant 18 : index
    %c0_226 = arith.constant 0 : index
    %c0_227 = arith.constant 0 : index
    %215 = vector.load %arg2[%c1_224, %c18_225, %c0_226, %c0_227] : memref<2x49x1x64xf32, #tpu.memory_space<vmem>>, vector<1x1x1x64xf32>
    %216 = vector.shape_cast %215 : vector<1x1x1x64xf32> to vector<1x64xf32>
    %217 = vector.broadcast %216 : vector<1x64xf32> to vector<8x64xf32>
    %218 = arith.mulf %217, %209 : vector<8x64xf32>
    %219 = arith.addf %171, %218 : vector<8x64xf32>
    %c0_228 = arith.constant 0 : index
    %c5_229 = arith.constant 5 : index
    %c0_230 = arith.constant 0 : index
    %c1_231 = arith.constant 1 : index
    %c0_232 = arith.constant 0 : index
    %220 = vector.load %arg1[%c0_228, %c5_229, %c0_230, %c1_231, %c0_232] : memref<1x7x2x11x64xf32, #tpu.memory_space<vmem>>, vector<1x1x1x8x64xf32>
    %221 = vector.shape_cast %220 : vector<1x1x1x8x64xf32> to vector<8x64xf32>
    %c0_233 = arith.constant 0 : index
    %c19 = arith.constant 19 : index
    %c0_234 = arith.constant 0 : index
    %c0_235 = arith.constant 0 : index
    %222 = vector.load %arg2[%c0_233, %c19, %c0_234, %c0_235] : memref<2x49x1x64xf32, #tpu.memory_space<vmem>>, vector<1x1x1x64xf32>
    %223 = vector.shape_cast %222 : vector<1x1x1x64xf32> to vector<1x64xf32>
    %224 = vector.broadcast %223 : vector<1x64xf32> to vector<8x64xf32>
    %225 = arith.mulf %224, %221 : vector<8x64xf32>
    %226 = arith.addf %178, %225 : vector<8x64xf32>
    %c1_236 = arith.constant 1 : index
    %c19_237 = arith.constant 19 : index
    %c0_238 = arith.constant 0 : index
    %c0_239 = arith.constant 0 : index
    %227 = vector.load %arg2[%c1_236, %c19_237, %c0_238, %c0_239] : memref<2x49x1x64xf32, #tpu.memory_space<vmem>>, vector<1x1x1x64xf32>
    %228 = vector.shape_cast %227 : vector<1x1x1x64xf32> to vector<1x64xf32>
    %229 = vector.broadcast %228 : vector<1x64xf32> to vector<8x64xf32>
    %230 = arith.mulf %229, %221 : vector<8x64xf32>
    %231 = arith.addf %183, %230 : vector<8x64xf32>
    %c0_240 = arith.constant 0 : index
    %c6_241 = arith.constant 6 : index
    %c0_242 = arith.constant 0 : index
    %c1_243 = arith.constant 1 : index
    %c0_244 = arith.constant 0 : index
    %232 = vector.load %arg1[%c0_240, %c6_241, %c0_242, %c1_243, %c0_244] : memref<1x7x2x11x64xf32, #tpu.memory_space<vmem>>, vector<1x1x1x8x64xf32>
    %233 = vector.shape_cast %232 : vector<1x1x1x8x64xf32> to vector<8x64xf32>
    %c0_245 = arith.constant 0 : index
    %c20 = arith.constant 20 : index
    %c0_246 = arith.constant 0 : index
    %c0_247 = arith.constant 0 : index
    %234 = vector.load %arg2[%c0_245, %c20, %c0_246, %c0_247] : memref<2x49x1x64xf32, #tpu.memory_space<vmem>>, vector<1x1x1x64xf32>
    %235 = vector.shape_cast %234 : vector<1x1x1x64xf32> to vector<1x64xf32>
    %236 = vector.broadcast %235 : vector<1x64xf32> to vector<8x64xf32>
    %237 = arith.mulf %236, %233 : vector<8x64xf32>
    %238 = arith.addf %190, %237 : vector<8x64xf32>
    %c1_248 = arith.constant 1 : index
    %c20_249 = arith.constant 20 : index
    %c0_250 = arith.constant 0 : index
    %c0_251 = arith.constant 0 : index
    %239 = vector.load %arg2[%c1_248, %c20_249, %c0_250, %c0_251] : memref<2x49x1x64xf32, #tpu.memory_space<vmem>>, vector<1x1x1x64xf32>
    %240 = vector.shape_cast %239 : vector<1x1x1x64xf32> to vector<1x64xf32>
    %241 = vector.broadcast %240 : vector<1x64xf32> to vector<8x64xf32>
    %242 = arith.mulf %241, %233 : vector<8x64xf32>
    %243 = arith.addf %195, %242 : vector<8x64xf32>
    %c0_252 = arith.constant 0 : index
    %c0_253 = arith.constant 0 : index
    %c1_254 = arith.constant 1 : index
    %c1_255 = arith.constant 1 : index
    %c0_256 = arith.constant 0 : index
    %244 = vector.load %arg1[%c0_252, %c0_253, %c1_254, %c1_255, %c0_256] : memref<1x7x2x11x64xf32, #tpu.memory_space<vmem>>, vector<1x1x1x8x64xf32>
    %245 = vector.shape_cast %244 : vector<1x1x1x8x64xf32> to vector<8x64xf32>
    %c0_257 = arith.constant 0 : index
    %c21 = arith.constant 21 : index
    %c0_258 = arith.constant 0 : index
    %c0_259 = arith.constant 0 : index
    %246 = vector.load %arg2[%c0_257, %c21, %c0_258, %c0_259] : memref<2x49x1x64xf32, #tpu.memory_space<vmem>>, vector<1x1x1x64xf32>
    %247 = vector.shape_cast %246 : vector<1x1x1x64xf32> to vector<1x64xf32>
    %248 = vector.broadcast %247 : vector<1x64xf32> to vector<8x64xf32>
    %249 = arith.mulf %248, %245 : vector<8x64xf32>
    %250 = arith.addf %202, %249 : vector<8x64xf32>
    %c1_260 = arith.constant 1 : index
    %c21_261 = arith.constant 21 : index
    %c0_262 = arith.constant 0 : index
    %c0_263 = arith.constant 0 : index
    %251 = vector.load %arg2[%c1_260, %c21_261, %c0_262, %c0_263] : memref<2x49x1x64xf32, #tpu.memory_space<vmem>>, vector<1x1x1x64xf32>
    %252 = vector.shape_cast %251 : vector<1x1x1x64xf32> to vector<1x64xf32>
    %253 = vector.broadcast %252 : vector<1x64xf32> to vector<8x64xf32>
    %254 = arith.mulf %253, %245 : vector<8x64xf32>
    %255 = arith.addf %207, %254 : vector<8x64xf32>
    %c0_264 = arith.constant 0 : index
    %c1_265 = arith.constant 1 : index
    %c1_266 = arith.constant 1 : index
    %c1_267 = arith.constant 1 : index
    %c0_268 = arith.constant 0 : index
    %256 = vector.load %arg1[%c0_264, %c1_265, %c1_266, %c1_267, %c0_268] : memref<1x7x2x11x64xf32, #tpu.memory_space<vmem>>, vector<1x1x1x8x64xf32>
    %257 = vector.shape_cast %256 : vector<1x1x1x8x64xf32> to vector<8x64xf32>
    %c0_269 = arith.constant 0 : index
    %c22 = arith.constant 22 : index
    %c0_270 = arith.constant 0 : index
    %c0_271 = arith.constant 0 : index
    %258 = vector.load %arg2[%c0_269, %c22, %c0_270, %c0_271] : memref<2x49x1x64xf32, #tpu.memory_space<vmem>>, vector<1x1x1x64xf32>
    %259 = vector.shape_cast %258 : vector<1x1x1x64xf32> to vector<1x64xf32>
    %260 = vector.broadcast %259 : vector<1x64xf32> to vector<8x64xf32>
    %261 = arith.mulf %260, %257 : vector<8x64xf32>
    %262 = arith.addf %214, %261 : vector<8x64xf32>
    %c1_272 = arith.constant 1 : index
    %c22_273 = arith.constant 22 : index
    %c0_274 = arith.constant 0 : index
    %c0_275 = arith.constant 0 : index
    %263 = vector.load %arg2[%c1_272, %c22_273, %c0_274, %c0_275] : memref<2x49x1x64xf32, #tpu.memory_space<vmem>>, vector<1x1x1x64xf32>
    %264 = vector.shape_cast %263 : vector<1x1x1x64xf32> to vector<1x64xf32>
    %265 = vector.broadcast %264 : vector<1x64xf32> to vector<8x64xf32>
    %266 = arith.mulf %265, %257 : vector<8x64xf32>
    %267 = arith.addf %219, %266 : vector<8x64xf32>
    %c0_276 = arith.constant 0 : index
    %c2_277 = arith.constant 2 : index
    %c1_278 = arith.constant 1 : index
    %c1_279 = arith.constant 1 : index
    %c0_280 = arith.constant 0 : index
    %268 = vector.load %arg1[%c0_276, %c2_277, %c1_278, %c1_279, %c0_280] : memref<1x7x2x11x64xf32, #tpu.memory_space<vmem>>, vector<1x1x1x8x64xf32>
    %269 = vector.shape_cast %268 : vector<1x1x1x8x64xf32> to vector<8x64xf32>
    %c0_281 = arith.constant 0 : index
    %c23 = arith.constant 23 : index
    %c0_282 = arith.constant 0 : index
    %c0_283 = arith.constant 0 : index
    %270 = vector.load %arg2[%c0_281, %c23, %c0_282, %c0_283] : memref<2x49x1x64xf32, #tpu.memory_space<vmem>>, vector<1x1x1x64xf32>
    %271 = vector.shape_cast %270 : vector<1x1x1x64xf32> to vector<1x64xf32>
    %272 = vector.broadcast %271 : vector<1x64xf32> to vector<8x64xf32>
    %273 = arith.mulf %272, %269 : vector<8x64xf32>
    %274 = arith.addf %226, %273 : vector<8x64xf32>
    %c1_284 = arith.constant 1 : index
    %c23_285 = arith.constant 23 : index
    %c0_286 = arith.constant 0 : index
    %c0_287 = arith.constant 0 : index
    %275 = vector.load %arg2[%c1_284, %c23_285, %c0_286, %c0_287] : memref<2x49x1x64xf32, #tpu.memory_space<vmem>>, vector<1x1x1x64xf32>
    %276 = vector.shape_cast %275 : vector<1x1x1x64xf32> to vector<1x64xf32>
    %277 = vector.broadcast %276 : vector<1x64xf32> to vector<8x64xf32>
    %278 = arith.mulf %277, %269 : vector<8x64xf32>
    %279 = arith.addf %231, %278 : vector<8x64xf32>
    %c0_288 = arith.constant 0 : index
    %c3_289 = arith.constant 3 : index
    %c1_290 = arith.constant 1 : index
    %c1_291 = arith.constant 1 : index
    %c0_292 = arith.constant 0 : index
    %280 = vector.load %arg1[%c0_288, %c3_289, %c1_290, %c1_291, %c0_292] : memref<1x7x2x11x64xf32, #tpu.memory_space<vmem>>, vector<1x1x1x8x64xf32>
    %281 = vector.shape_cast %280 : vector<1x1x1x8x64xf32> to vector<8x64xf32>
    %c0_293 = arith.constant 0 : index
    %c24 = arith.constant 24 : index
    %c0_294 = arith.constant 0 : index
    %c0_295 = arith.constant 0 : index
    %282 = vector.load %arg2[%c0_293, %c24, %c0_294, %c0_295] : memref<2x49x1x64xf32, #tpu.memory_space<vmem>>, vector<1x1x1x64xf32>
    %283 = vector.shape_cast %282 : vector<1x1x1x64xf32> to vector<1x64xf32>
    %284 = vector.broadcast %283 : vector<1x64xf32> to vector<8x64xf32>
    %285 = arith.mulf %284, %281 : vector<8x64xf32>
    %286 = arith.addf %238, %285 : vector<8x64xf32>
    %c1_296 = arith.constant 1 : index
    %c24_297 = arith.constant 24 : index
    %c0_298 = arith.constant 0 : index
    %c0_299 = arith.constant 0 : index
    %287 = vector.load %arg2[%c1_296, %c24_297, %c0_298, %c0_299] : memref<2x49x1x64xf32, #tpu.memory_space<vmem>>, vector<1x1x1x64xf32>
    %288 = vector.shape_cast %287 : vector<1x1x1x64xf32> to vector<1x64xf32>
    %289 = vector.broadcast %288 : vector<1x64xf32> to vector<8x64xf32>
    %290 = arith.mulf %289, %281 : vector<8x64xf32>
    %291 = arith.addf %243, %290 : vector<8x64xf32>
    %c0_300 = arith.constant 0 : index
    %c4_301 = arith.constant 4 : index
    %c1_302 = arith.constant 1 : index
    %c1_303 = arith.constant 1 : index
    %c0_304 = arith.constant 0 : index
    %292 = vector.load %arg1[%c0_300, %c4_301, %c1_302, %c1_303, %c0_304] : memref<1x7x2x11x64xf32, #tpu.memory_space<vmem>>, vector<1x1x1x8x64xf32>
    %293 = vector.shape_cast %292 : vector<1x1x1x8x64xf32> to vector<8x64xf32>
    %c0_305 = arith.constant 0 : index
    %c25 = arith.constant 25 : index
    %c0_306 = arith.constant 0 : index
    %c0_307 = arith.constant 0 : index
    %294 = vector.load %arg2[%c0_305, %c25, %c0_306, %c0_307] : memref<2x49x1x64xf32, #tpu.memory_space<vmem>>, vector<1x1x1x64xf32>
    %295 = vector.shape_cast %294 : vector<1x1x1x64xf32> to vector<1x64xf32>
    %296 = vector.broadcast %295 : vector<1x64xf32> to vector<8x64xf32>
    %297 = arith.mulf %296, %293 : vector<8x64xf32>
    %298 = arith.addf %250, %297 : vector<8x64xf32>
    %c1_308 = arith.constant 1 : index
    %c25_309 = arith.constant 25 : index
    %c0_310 = arith.constant 0 : index
    %c0_311 = arith.constant 0 : index
    %299 = vector.load %arg2[%c1_308, %c25_309, %c0_310, %c0_311] : memref<2x49x1x64xf32, #tpu.memory_space<vmem>>, vector<1x1x1x64xf32>
    %300 = vector.shape_cast %299 : vector<1x1x1x64xf32> to vector<1x64xf32>
    %301 = vector.broadcast %300 : vector<1x64xf32> to vector<8x64xf32>
    %302 = arith.mulf %301, %293 : vector<8x64xf32>
    %303 = arith.addf %255, %302 : vector<8x64xf32>
    %c0_312 = arith.constant 0 : index
    %c5_313 = arith.constant 5 : index
    %c1_314 = arith.constant 1 : index
    %c1_315 = arith.constant 1 : index
    %c0_316 = arith.constant 0 : index
    %304 = vector.load %arg1[%c0_312, %c5_313, %c1_314, %c1_315, %c0_316] : memref<1x7x2x11x64xf32, #tpu.memory_space<vmem>>, vector<1x1x1x8x64xf32>
    %305 = vector.shape_cast %304 : vector<1x1x1x8x64xf32> to vector<8x64xf32>
    %c0_317 = arith.constant 0 : index
    %c26 = arith.constant 26 : index
    %c0_318 = arith.constant 0 : index
    %c0_319 = arith.constant 0 : index
    %306 = vector.load %arg2[%c0_317, %c26, %c0_318, %c0_319] : memref<2x49x1x64xf32, #tpu.memory_space<vmem>>, vector<1x1x1x64xf32>
    %307 = vector.shape_cast %306 : vector<1x1x1x64xf32> to vector<1x64xf32>
    %308 = vector.broadcast %307 : vector<1x64xf32> to vector<8x64xf32>
    %309 = arith.mulf %308, %305 : vector<8x64xf32>
    %310 = arith.addf %262, %309 : vector<8x64xf32>
    %c1_320 = arith.constant 1 : index
    %c26_321 = arith.constant 26 : index
    %c0_322 = arith.constant 0 : index
    %c0_323 = arith.constant 0 : index
    %311 = vector.load %arg2[%c1_320, %c26_321, %c0_322, %c0_323] : memref<2x49x1x64xf32, #tpu.memory_space<vmem>>, vector<1x1x1x64xf32>
    %312 = vector.shape_cast %311 : vector<1x1x1x64xf32> to vector<1x64xf32>
    %313 = vector.broadcast %312 : vector<1x64xf32> to vector<8x64xf32>
    %314 = arith.mulf %313, %305 : vector<8x64xf32>
    %315 = arith.addf %267, %314 : vector<8x64xf32>
    %c0_324 = arith.constant 0 : index
    %c6_325 = arith.constant 6 : index
    %c1_326 = arith.constant 1 : index
    %c1_327 = arith.constant 1 : index
    %c0_328 = arith.constant 0 : index
    %316 = vector.load %arg1[%c0_324, %c6_325, %c1_326, %c1_327, %c0_328] : memref<1x7x2x11x64xf32, #tpu.memory_space<vmem>>, vector<1x1x1x8x64xf32>
    %317 = vector.shape_cast %316 : vector<1x1x1x8x64xf32> to vector<8x64xf32>
    %c0_329 = arith.constant 0 : index
    %c27 = arith.constant 27 : index
    %c0_330 = arith.constant 0 : index
    %c0_331 = arith.constant 0 : index
    %318 = vector.load %arg2[%c0_329, %c27, %c0_330, %c0_331] : memref<2x49x1x64xf32, #tpu.memory_space<vmem>>, vector<1x1x1x64xf32>
    %319 = vector.shape_cast %318 : vector<1x1x1x64xf32> to vector<1x64xf32>
    %320 = vector.broadcast %319 : vector<1x64xf32> to vector<8x64xf32>
    %321 = arith.mulf %320, %317 : vector<8x64xf32>
    %322 = arith.addf %274, %321 : vector<8x64xf32>
    %c1_332 = arith.constant 1 : index
    %c27_333 = arith.constant 27 : index
    %c0_334 = arith.constant 0 : index
    %c0_335 = arith.constant 0 : index
    %323 = vector.load %arg2[%c1_332, %c27_333, %c0_334, %c0_335] : memref<2x49x1x64xf32, #tpu.memory_space<vmem>>, vector<1x1x1x64xf32>
    %324 = vector.shape_cast %323 : vector<1x1x1x64xf32> to vector<1x64xf32>
    %325 = vector.broadcast %324 : vector<1x64xf32> to vector<8x64xf32>
    %326 = arith.mulf %325, %317 : vector<8x64xf32>
    %327 = arith.addf %279, %326 : vector<8x64xf32>
    %c0_336 = arith.constant 0 : index
    %c0_337 = arith.constant 0 : index
    %c0_338 = arith.constant 0 : index
    %c2_339 = arith.constant 2 : index
    %c0_340 = arith.constant 0 : index
    %328 = vector.load %arg1[%c0_336, %c0_337, %c0_338, %c2_339, %c0_340] : memref<1x7x2x11x64xf32, #tpu.memory_space<vmem>>, vector<1x1x1x8x64xf32>
    %329 = vector.shape_cast %328 : vector<1x1x1x8x64xf32> to vector<8x64xf32>
    %c0_341 = arith.constant 0 : index
    %c28 = arith.constant 28 : index
    %c0_342 = arith.constant 0 : index
    %c0_343 = arith.constant 0 : index
    %330 = vector.load %arg2[%c0_341, %c28, %c0_342, %c0_343] : memref<2x49x1x64xf32, #tpu.memory_space<vmem>>, vector<1x1x1x64xf32>
    %331 = vector.shape_cast %330 : vector<1x1x1x64xf32> to vector<1x64xf32>
    %332 = vector.broadcast %331 : vector<1x64xf32> to vector<8x64xf32>
    %333 = arith.mulf %332, %329 : vector<8x64xf32>
    %334 = arith.addf %286, %333 : vector<8x64xf32>
    %c1_344 = arith.constant 1 : index
    %c28_345 = arith.constant 28 : index
    %c0_346 = arith.constant 0 : index
    %c0_347 = arith.constant 0 : index
    %335 = vector.load %arg2[%c1_344, %c28_345, %c0_346, %c0_347] : memref<2x49x1x64xf32, #tpu.memory_space<vmem>>, vector<1x1x1x64xf32>
    %336 = vector.shape_cast %335 : vector<1x1x1x64xf32> to vector<1x64xf32>
    %337 = vector.broadcast %336 : vector<1x64xf32> to vector<8x64xf32>
    %338 = arith.mulf %337, %329 : vector<8x64xf32>
    %339 = arith.addf %291, %338 : vector<8x64xf32>
    %c0_348 = arith.constant 0 : index
    %c1_349 = arith.constant 1 : index
    %c0_350 = arith.constant 0 : index
    %c2_351 = arith.constant 2 : index
    %c0_352 = arith.constant 0 : index
    %340 = vector.load %arg1[%c0_348, %c1_349, %c0_350, %c2_351, %c0_352] : memref<1x7x2x11x64xf32, #tpu.memory_space<vmem>>, vector<1x1x1x8x64xf32>
    %341 = vector.shape_cast %340 : vector<1x1x1x8x64xf32> to vector<8x64xf32>
    %c0_353 = arith.constant 0 : index
    %c29 = arith.constant 29 : index
    %c0_354 = arith.constant 0 : index
    %c0_355 = arith.constant 0 : index
    %342 = vector.load %arg2[%c0_353, %c29, %c0_354, %c0_355] : memref<2x49x1x64xf32, #tpu.memory_space<vmem>>, vector<1x1x1x64xf32>
    %343 = vector.shape_cast %342 : vector<1x1x1x64xf32> to vector<1x64xf32>
    %344 = vector.broadcast %343 : vector<1x64xf32> to vector<8x64xf32>
    %345 = arith.mulf %344, %341 : vector<8x64xf32>
    %346 = arith.addf %298, %345 : vector<8x64xf32>
    %c1_356 = arith.constant 1 : index
    %c29_357 = arith.constant 29 : index
    %c0_358 = arith.constant 0 : index
    %c0_359 = arith.constant 0 : index
    %347 = vector.load %arg2[%c1_356, %c29_357, %c0_358, %c0_359] : memref<2x49x1x64xf32, #tpu.memory_space<vmem>>, vector<1x1x1x64xf32>
    %348 = vector.shape_cast %347 : vector<1x1x1x64xf32> to vector<1x64xf32>
    %349 = vector.broadcast %348 : vector<1x64xf32> to vector<8x64xf32>
    %350 = arith.mulf %349, %341 : vector<8x64xf32>
    %351 = arith.addf %303, %350 : vector<8x64xf32>
    %c0_360 = arith.constant 0 : index
    %c2_361 = arith.constant 2 : index
    %c0_362 = arith.constant 0 : index
    %c2_363 = arith.constant 2 : index
    %c0_364 = arith.constant 0 : index
    %352 = vector.load %arg1[%c0_360, %c2_361, %c0_362, %c2_363, %c0_364] : memref<1x7x2x11x64xf32, #tpu.memory_space<vmem>>, vector<1x1x1x8x64xf32>
    %353 = vector.shape_cast %352 : vector<1x1x1x8x64xf32> to vector<8x64xf32>
    %c0_365 = arith.constant 0 : index
    %c30 = arith.constant 30 : index
    %c0_366 = arith.constant 0 : index
    %c0_367 = arith.constant 0 : index
    %354 = vector.load %arg2[%c0_365, %c30, %c0_366, %c0_367] : memref<2x49x1x64xf32, #tpu.memory_space<vmem>>, vector<1x1x1x64xf32>
    %355 = vector.shape_cast %354 : vector<1x1x1x64xf32> to vector<1x64xf32>
    %356 = vector.broadcast %355 : vector<1x64xf32> to vector<8x64xf32>
    %357 = arith.mulf %356, %353 : vector<8x64xf32>
    %358 = arith.addf %310, %357 : vector<8x64xf32>
    %c1_368 = arith.constant 1 : index
    %c30_369 = arith.constant 30 : index
    %c0_370 = arith.constant 0 : index
    %c0_371 = arith.constant 0 : index
    %359 = vector.load %arg2[%c1_368, %c30_369, %c0_370, %c0_371] : memref<2x49x1x64xf32, #tpu.memory_space<vmem>>, vector<1x1x1x64xf32>
    %360 = vector.shape_cast %359 : vector<1x1x1x64xf32> to vector<1x64xf32>
    %361 = vector.broadcast %360 : vector<1x64xf32> to vector<8x64xf32>
    %362 = arith.mulf %361, %353 : vector<8x64xf32>
    %363 = arith.addf %315, %362 : vector<8x64xf32>
    %c0_372 = arith.constant 0 : index
    %c3_373 = arith.constant 3 : index
    %c0_374 = arith.constant 0 : index
    %c2_375 = arith.constant 2 : index
    %c0_376 = arith.constant 0 : index
    %364 = vector.load %arg1[%c0_372, %c3_373, %c0_374, %c2_375, %c0_376] : memref<1x7x2x11x64xf32, #tpu.memory_space<vmem>>, vector<1x1x1x8x64xf32>
    %365 = vector.shape_cast %364 : vector<1x1x1x8x64xf32> to vector<8x64xf32>
    %c0_377 = arith.constant 0 : index
    %c31 = arith.constant 31 : index
    %c0_378 = arith.constant 0 : index
    %c0_379 = arith.constant 0 : index
    %366 = vector.load %arg2[%c0_377, %c31, %c0_378, %c0_379] : memref<2x49x1x64xf32, #tpu.memory_space<vmem>>, vector<1x1x1x64xf32>
    %367 = vector.shape_cast %366 : vector<1x1x1x64xf32> to vector<1x64xf32>
    %368 = vector.broadcast %367 : vector<1x64xf32> to vector<8x64xf32>
    %369 = arith.mulf %368, %365 : vector<8x64xf32>
    %370 = arith.addf %322, %369 : vector<8x64xf32>
    %c1_380 = arith.constant 1 : index
    %c31_381 = arith.constant 31 : index
    %c0_382 = arith.constant 0 : index
    %c0_383 = arith.constant 0 : index
    %371 = vector.load %arg2[%c1_380, %c31_381, %c0_382, %c0_383] : memref<2x49x1x64xf32, #tpu.memory_space<vmem>>, vector<1x1x1x64xf32>
    %372 = vector.shape_cast %371 : vector<1x1x1x64xf32> to vector<1x64xf32>
    %373 = vector.broadcast %372 : vector<1x64xf32> to vector<8x64xf32>
    %374 = arith.mulf %373, %365 : vector<8x64xf32>
    %375 = arith.addf %327, %374 : vector<8x64xf32>
    %c0_384 = arith.constant 0 : index
    %c4_385 = arith.constant 4 : index
    %c0_386 = arith.constant 0 : index
    %c2_387 = arith.constant 2 : index
    %c0_388 = arith.constant 0 : index
    %376 = vector.load %arg1[%c0_384, %c4_385, %c0_386, %c2_387, %c0_388] : memref<1x7x2x11x64xf32, #tpu.memory_space<vmem>>, vector<1x1x1x8x64xf32>
    %377 = vector.shape_cast %376 : vector<1x1x1x8x64xf32> to vector<8x64xf32>
    %c0_389 = arith.constant 0 : index
    %c32 = arith.constant 32 : index
    %c0_390 = arith.constant 0 : index
    %c0_391 = arith.constant 0 : index
    %378 = vector.load %arg2[%c0_389, %c32, %c0_390, %c0_391] : memref<2x49x1x64xf32, #tpu.memory_space<vmem>>, vector<1x1x1x64xf32>
    %379 = vector.shape_cast %378 : vector<1x1x1x64xf32> to vector<1x64xf32>
    %380 = vector.broadcast %379 : vector<1x64xf32> to vector<8x64xf32>
    %381 = arith.mulf %380, %377 : vector<8x64xf32>
    %382 = arith.addf %334, %381 : vector<8x64xf32>
    %c1_392 = arith.constant 1 : index
    %c32_393 = arith.constant 32 : index
    %c0_394 = arith.constant 0 : index
    %c0_395 = arith.constant 0 : index
    %383 = vector.load %arg2[%c1_392, %c32_393, %c0_394, %c0_395] : memref<2x49x1x64xf32, #tpu.memory_space<vmem>>, vector<1x1x1x64xf32>
    %384 = vector.shape_cast %383 : vector<1x1x1x64xf32> to vector<1x64xf32>
    %385 = vector.broadcast %384 : vector<1x64xf32> to vector<8x64xf32>
    %386 = arith.mulf %385, %377 : vector<8x64xf32>
    %387 = arith.addf %339, %386 : vector<8x64xf32>
    %c0_396 = arith.constant 0 : index
    %c5_397 = arith.constant 5 : index
    %c0_398 = arith.constant 0 : index
    %c2_399 = arith.constant 2 : index
    %c0_400 = arith.constant 0 : index
    %388 = vector.load %arg1[%c0_396, %c5_397, %c0_398, %c2_399, %c0_400] : memref<1x7x2x11x64xf32, #tpu.memory_space<vmem>>, vector<1x1x1x8x64xf32>
    %389 = vector.shape_cast %388 : vector<1x1x1x8x64xf32> to vector<8x64xf32>
    %c0_401 = arith.constant 0 : index
    %c33 = arith.constant 33 : index
    %c0_402 = arith.constant 0 : index
    %c0_403 = arith.constant 0 : index
    %390 = vector.load %arg2[%c0_401, %c33, %c0_402, %c0_403] : memref<2x49x1x64xf32, #tpu.memory_space<vmem>>, vector<1x1x1x64xf32>
    %391 = vector.shape_cast %390 : vector<1x1x1x64xf32> to vector<1x64xf32>
    %392 = vector.broadcast %391 : vector<1x64xf32> to vector<8x64xf32>
    %393 = arith.mulf %392, %389 : vector<8x64xf32>
    %394 = arith.addf %346, %393 : vector<8x64xf32>
    %c1_404 = arith.constant 1 : index
    %c33_405 = arith.constant 33 : index
    %c0_406 = arith.constant 0 : index
    %c0_407 = arith.constant 0 : index
    %395 = vector.load %arg2[%c1_404, %c33_405, %c0_406, %c0_407] : memref<2x49x1x64xf32, #tpu.memory_space<vmem>>, vector<1x1x1x64xf32>
    %396 = vector.shape_cast %395 : vector<1x1x1x64xf32> to vector<1x64xf32>
    %397 = vector.broadcast %396 : vector<1x64xf32> to vector<8x64xf32>
    %398 = arith.mulf %397, %389 : vector<8x64xf32>
    %399 = arith.addf %351, %398 : vector<8x64xf32>
    %c0_408 = arith.constant 0 : index
    %c6_409 = arith.constant 6 : index
    %c0_410 = arith.constant 0 : index
    %c2_411 = arith.constant 2 : index
    %c0_412 = arith.constant 0 : index
    %400 = vector.load %arg1[%c0_408, %c6_409, %c0_410, %c2_411, %c0_412] : memref<1x7x2x11x64xf32, #tpu.memory_space<vmem>>, vector<1x1x1x8x64xf32>
    %401 = vector.shape_cast %400 : vector<1x1x1x8x64xf32> to vector<8x64xf32>
    %c0_413 = arith.constant 0 : index
    %c34 = arith.constant 34 : index
    %c0_414 = arith.constant 0 : index
    %c0_415 = arith.constant 0 : index
    %402 = vector.load %arg2[%c0_413, %c34, %c0_414, %c0_415] : memref<2x49x1x64xf32, #tpu.memory_space<vmem>>, vector<1x1x1x64xf32>
    %403 = vector.shape_cast %402 : vector<1x1x1x64xf32> to vector<1x64xf32>
    %404 = vector.broadcast %403 : vector<1x64xf32> to vector<8x64xf32>
    %405 = arith.mulf %404, %401 : vector<8x64xf32>
    %406 = arith.addf %358, %405 : vector<8x64xf32>
    %c1_416 = arith.constant 1 : index
    %c34_417 = arith.constant 34 : index
    %c0_418 = arith.constant 0 : index
    %c0_419 = arith.constant 0 : index
    %407 = vector.load %arg2[%c1_416, %c34_417, %c0_418, %c0_419] : memref<2x49x1x64xf32, #tpu.memory_space<vmem>>, vector<1x1x1x64xf32>
    %408 = vector.shape_cast %407 : vector<1x1x1x64xf32> to vector<1x64xf32>
    %409 = vector.broadcast %408 : vector<1x64xf32> to vector<8x64xf32>
    %410 = arith.mulf %409, %401 : vector<8x64xf32>
    %411 = arith.addf %363, %410 : vector<8x64xf32>
    %c0_420 = arith.constant 0 : index
    %c0_421 = arith.constant 0 : index
    %c1_422 = arith.constant 1 : index
    %c2_423 = arith.constant 2 : index
    %c0_424 = arith.constant 0 : index
    %412 = vector.load %arg1[%c0_420, %c0_421, %c1_422, %c2_423, %c0_424] : memref<1x7x2x11x64xf32, #tpu.memory_space<vmem>>, vector<1x1x1x8x64xf32>
    %413 = vector.shape_cast %412 : vector<1x1x1x8x64xf32> to vector<8x64xf32>
    %c0_425 = arith.constant 0 : index
    %c35 = arith.constant 35 : index
    %c0_426 = arith.constant 0 : index
    %c0_427 = arith.constant 0 : index
    %414 = vector.load %arg2[%c0_425, %c35, %c0_426, %c0_427] : memref<2x49x1x64xf32, #tpu.memory_space<vmem>>, vector<1x1x1x64xf32>
    %415 = vector.shape_cast %414 : vector<1x1x1x64xf32> to vector<1x64xf32>
    %416 = vector.broadcast %415 : vector<1x64xf32> to vector<8x64xf32>
    %417 = arith.mulf %416, %413 : vector<8x64xf32>
    %418 = arith.addf %370, %417 : vector<8x64xf32>
    %c1_428 = arith.constant 1 : index
    %c35_429 = arith.constant 35 : index
    %c0_430 = arith.constant 0 : index
    %c0_431 = arith.constant 0 : index
    %419 = vector.load %arg2[%c1_428, %c35_429, %c0_430, %c0_431] : memref<2x49x1x64xf32, #tpu.memory_space<vmem>>, vector<1x1x1x64xf32>
    %420 = vector.shape_cast %419 : vector<1x1x1x64xf32> to vector<1x64xf32>
    %421 = vector.broadcast %420 : vector<1x64xf32> to vector<8x64xf32>
    %422 = arith.mulf %421, %413 : vector<8x64xf32>
    %423 = arith.addf %375, %422 : vector<8x64xf32>
    %c0_432 = arith.constant 0 : index
    %c1_433 = arith.constant 1 : index
    %c1_434 = arith.constant 1 : index
    %c2_435 = arith.constant 2 : index
    %c0_436 = arith.constant 0 : index
    %424 = vector.load %arg1[%c0_432, %c1_433, %c1_434, %c2_435, %c0_436] : memref<1x7x2x11x64xf32, #tpu.memory_space<vmem>>, vector<1x1x1x8x64xf32>
    %425 = vector.shape_cast %424 : vector<1x1x1x8x64xf32> to vector<8x64xf32>
    %c0_437 = arith.constant 0 : index
    %c36 = arith.constant 36 : index
    %c0_438 = arith.constant 0 : index
    %c0_439 = arith.constant 0 : index
    %426 = vector.load %arg2[%c0_437, %c36, %c0_438, %c0_439] : memref<2x49x1x64xf32, #tpu.memory_space<vmem>>, vector<1x1x1x64xf32>
    %427 = vector.shape_cast %426 : vector<1x1x1x64xf32> to vector<1x64xf32>
    %428 = vector.broadcast %427 : vector<1x64xf32> to vector<8x64xf32>
    %429 = arith.mulf %428, %425 : vector<8x64xf32>
    %430 = arith.addf %382, %429 : vector<8x64xf32>
    %c1_440 = arith.constant 1 : index
    %c36_441 = arith.constant 36 : index
    %c0_442 = arith.constant 0 : index
    %c0_443 = arith.constant 0 : index
    %431 = vector.load %arg2[%c1_440, %c36_441, %c0_442, %c0_443] : memref<2x49x1x64xf32, #tpu.memory_space<vmem>>, vector<1x1x1x64xf32>
    %432 = vector.shape_cast %431 : vector<1x1x1x64xf32> to vector<1x64xf32>
    %433 = vector.broadcast %432 : vector<1x64xf32> to vector<8x64xf32>
    %434 = arith.mulf %433, %425 : vector<8x64xf32>
    %435 = arith.addf %387, %434 : vector<8x64xf32>
    %c0_444 = arith.constant 0 : index
    %c2_445 = arith.constant 2 : index
    %c1_446 = arith.constant 1 : index
    %c2_447 = arith.constant 2 : index
    %c0_448 = arith.constant 0 : index
    %436 = vector.load %arg1[%c0_444, %c2_445, %c1_446, %c2_447, %c0_448] : memref<1x7x2x11x64xf32, #tpu.memory_space<vmem>>, vector<1x1x1x8x64xf32>
    %437 = vector.shape_cast %436 : vector<1x1x1x8x64xf32> to vector<8x64xf32>
    %c0_449 = arith.constant 0 : index
    %c37 = arith.constant 37 : index
    %c0_450 = arith.constant 0 : index
    %c0_451 = arith.constant 0 : index
    %438 = vector.load %arg2[%c0_449, %c37, %c0_450, %c0_451] : memref<2x49x1x64xf32, #tpu.memory_space<vmem>>, vector<1x1x1x64xf32>
    %439 = vector.shape_cast %438 : vector<1x1x1x64xf32> to vector<1x64xf32>
    %440 = vector.broadcast %439 : vector<1x64xf32> to vector<8x64xf32>
    %441 = arith.mulf %440, %437 : vector<8x64xf32>
    %442 = arith.addf %394, %441 : vector<8x64xf32>
    %c1_452 = arith.constant 1 : index
    %c37_453 = arith.constant 37 : index
    %c0_454 = arith.constant 0 : index
    %c0_455 = arith.constant 0 : index
    %443 = vector.load %arg2[%c1_452, %c37_453, %c0_454, %c0_455] : memref<2x49x1x64xf32, #tpu.memory_space<vmem>>, vector<1x1x1x64xf32>
    %444 = vector.shape_cast %443 : vector<1x1x1x64xf32> to vector<1x64xf32>
    %445 = vector.broadcast %444 : vector<1x64xf32> to vector<8x64xf32>
    %446 = arith.mulf %445, %437 : vector<8x64xf32>
    %447 = arith.addf %399, %446 : vector<8x64xf32>
    %c0_456 = arith.constant 0 : index
    %c3_457 = arith.constant 3 : index
    %c1_458 = arith.constant 1 : index
    %c2_459 = arith.constant 2 : index
    %c0_460 = arith.constant 0 : index
    %448 = vector.load %arg1[%c0_456, %c3_457, %c1_458, %c2_459, %c0_460] : memref<1x7x2x11x64xf32, #tpu.memory_space<vmem>>, vector<1x1x1x8x64xf32>
    %449 = vector.shape_cast %448 : vector<1x1x1x8x64xf32> to vector<8x64xf32>
    %c0_461 = arith.constant 0 : index
    %c38 = arith.constant 38 : index
    %c0_462 = arith.constant 0 : index
    %c0_463 = arith.constant 0 : index
    %450 = vector.load %arg2[%c0_461, %c38, %c0_462, %c0_463] : memref<2x49x1x64xf32, #tpu.memory_space<vmem>>, vector<1x1x1x64xf32>
    %451 = vector.shape_cast %450 : vector<1x1x1x64xf32> to vector<1x64xf32>
    %452 = vector.broadcast %451 : vector<1x64xf32> to vector<8x64xf32>
    %453 = arith.mulf %452, %449 : vector<8x64xf32>
    %454 = arith.addf %406, %453 : vector<8x64xf32>
    %c1_464 = arith.constant 1 : index
    %c38_465 = arith.constant 38 : index
    %c0_466 = arith.constant 0 : index
    %c0_467 = arith.constant 0 : index
    %455 = vector.load %arg2[%c1_464, %c38_465, %c0_466, %c0_467] : memref<2x49x1x64xf32, #tpu.memory_space<vmem>>, vector<1x1x1x64xf32>
    %456 = vector.shape_cast %455 : vector<1x1x1x64xf32> to vector<1x64xf32>
    %457 = vector.broadcast %456 : vector<1x64xf32> to vector<8x64xf32>
    %458 = arith.mulf %457, %449 : vector<8x64xf32>
    %459 = arith.addf %411, %458 : vector<8x64xf32>
    %c0_468 = arith.constant 0 : index
    %c4_469 = arith.constant 4 : index
    %c1_470 = arith.constant 1 : index
    %c2_471 = arith.constant 2 : index
    %c0_472 = arith.constant 0 : index
    %460 = vector.load %arg1[%c0_468, %c4_469, %c1_470, %c2_471, %c0_472] : memref<1x7x2x11x64xf32, #tpu.memory_space<vmem>>, vector<1x1x1x8x64xf32>
    %461 = vector.shape_cast %460 : vector<1x1x1x8x64xf32> to vector<8x64xf32>
    %c0_473 = arith.constant 0 : index
    %c39 = arith.constant 39 : index
    %c0_474 = arith.constant 0 : index
    %c0_475 = arith.constant 0 : index
    %462 = vector.load %arg2[%c0_473, %c39, %c0_474, %c0_475] : memref<2x49x1x64xf32, #tpu.memory_space<vmem>>, vector<1x1x1x64xf32>
    %463 = vector.shape_cast %462 : vector<1x1x1x64xf32> to vector<1x64xf32>
    %464 = vector.broadcast %463 : vector<1x64xf32> to vector<8x64xf32>
    %465 = arith.mulf %464, %461 : vector<8x64xf32>
    %466 = arith.addf %418, %465 : vector<8x64xf32>
    %c1_476 = arith.constant 1 : index
    %c39_477 = arith.constant 39 : index
    %c0_478 = arith.constant 0 : index
    %c0_479 = arith.constant 0 : index
    %467 = vector.load %arg2[%c1_476, %c39_477, %c0_478, %c0_479] : memref<2x49x1x64xf32, #tpu.memory_space<vmem>>, vector<1x1x1x64xf32>
    %468 = vector.shape_cast %467 : vector<1x1x1x64xf32> to vector<1x64xf32>
    %469 = vector.broadcast %468 : vector<1x64xf32> to vector<8x64xf32>
    %470 = arith.mulf %469, %461 : vector<8x64xf32>
    %471 = arith.addf %423, %470 : vector<8x64xf32>
    %c0_480 = arith.constant 0 : index
    %c5_481 = arith.constant 5 : index
    %c1_482 = arith.constant 1 : index
    %c2_483 = arith.constant 2 : index
    %c0_484 = arith.constant 0 : index
    %472 = vector.load %arg1[%c0_480, %c5_481, %c1_482, %c2_483, %c0_484] : memref<1x7x2x11x64xf32, #tpu.memory_space<vmem>>, vector<1x1x1x8x64xf32>
    %473 = vector.shape_cast %472 : vector<1x1x1x8x64xf32> to vector<8x64xf32>
    %c0_485 = arith.constant 0 : index
    %c40 = arith.constant 40 : index
    %c0_486 = arith.constant 0 : index
    %c0_487 = arith.constant 0 : index
    %474 = vector.load %arg2[%c0_485, %c40, %c0_486, %c0_487] : memref<2x49x1x64xf32, #tpu.memory_space<vmem>>, vector<1x1x1x64xf32>
    %475 = vector.shape_cast %474 : vector<1x1x1x64xf32> to vector<1x64xf32>
    %476 = vector.broadcast %475 : vector<1x64xf32> to vector<8x64xf32>
    %477 = arith.mulf %476, %473 : vector<8x64xf32>
    %478 = arith.addf %430, %477 : vector<8x64xf32>
    %c1_488 = arith.constant 1 : index
    %c40_489 = arith.constant 40 : index
    %c0_490 = arith.constant 0 : index
    %c0_491 = arith.constant 0 : index
    %479 = vector.load %arg2[%c1_488, %c40_489, %c0_490, %c0_491] : memref<2x49x1x64xf32, #tpu.memory_space<vmem>>, vector<1x1x1x64xf32>
    %480 = vector.shape_cast %479 : vector<1x1x1x64xf32> to vector<1x64xf32>
    %481 = vector.broadcast %480 : vector<1x64xf32> to vector<8x64xf32>
    %482 = arith.mulf %481, %473 : vector<8x64xf32>
    %483 = arith.addf %435, %482 : vector<8x64xf32>
    %c0_492 = arith.constant 0 : index
    %c6_493 = arith.constant 6 : index
    %c1_494 = arith.constant 1 : index
    %c2_495 = arith.constant 2 : index
    %c0_496 = arith.constant 0 : index
    %484 = vector.load %arg1[%c0_492, %c6_493, %c1_494, %c2_495, %c0_496] : memref<1x7x2x11x64xf32, #tpu.memory_space<vmem>>, vector<1x1x1x8x64xf32>
    %485 = vector.shape_cast %484 : vector<1x1x1x8x64xf32> to vector<8x64xf32>
    %c0_497 = arith.constant 0 : index
    %c41 = arith.constant 41 : index
    %c0_498 = arith.constant 0 : index
    %c0_499 = arith.constant 0 : index
    %486 = vector.load %arg2[%c0_497, %c41, %c0_498, %c0_499] : memref<2x49x1x64xf32, #tpu.memory_space<vmem>>, vector<1x1x1x64xf32>
    %487 = vector.shape_cast %486 : vector<1x1x1x64xf32> to vector<1x64xf32>
    %488 = vector.broadcast %487 : vector<1x64xf32> to vector<8x64xf32>
    %489 = arith.mulf %488, %485 : vector<8x64xf32>
    %490 = arith.addf %442, %489 : vector<8x64xf32>
    %c1_500 = arith.constant 1 : index
    %c41_501 = arith.constant 41 : index
    %c0_502 = arith.constant 0 : index
    %c0_503 = arith.constant 0 : index
    %491 = vector.load %arg2[%c1_500, %c41_501, %c0_502, %c0_503] : memref<2x49x1x64xf32, #tpu.memory_space<vmem>>, vector<1x1x1x64xf32>
    %492 = vector.shape_cast %491 : vector<1x1x1x64xf32> to vector<1x64xf32>
    %493 = vector.broadcast %492 : vector<1x64xf32> to vector<8x64xf32>
    %494 = arith.mulf %493, %485 : vector<8x64xf32>
    %495 = arith.addf %447, %494 : vector<8x64xf32>
    %c0_504 = arith.constant 0 : index
    %c0_505 = arith.constant 0 : index
    %c0_506 = arith.constant 0 : index
    %c3_507 = arith.constant 3 : index
    %c0_508 = arith.constant 0 : index
    %496 = vector.load %arg1[%c0_504, %c0_505, %c0_506, %c3_507, %c0_508] : memref<1x7x2x11x64xf32, #tpu.memory_space<vmem>>, vector<1x1x1x8x64xf32>
    %497 = vector.shape_cast %496 : vector<1x1x1x8x64xf32> to vector<8x64xf32>
    %c0_509 = arith.constant 0 : index
    %c42 = arith.constant 42 : index
    %c0_510 = arith.constant 0 : index
    %c0_511 = arith.constant 0 : index
    %498 = vector.load %arg2[%c0_509, %c42, %c0_510, %c0_511] : memref<2x49x1x64xf32, #tpu.memory_space<vmem>>, vector<1x1x1x64xf32>
    %499 = vector.shape_cast %498 : vector<1x1x1x64xf32> to vector<1x64xf32>
    %500 = vector.broadcast %499 : vector<1x64xf32> to vector<8x64xf32>
    %501 = arith.mulf %500, %497 : vector<8x64xf32>
    %502 = arith.addf %454, %501 : vector<8x64xf32>
    %c1_512 = arith.constant 1 : index
    %c42_513 = arith.constant 42 : index
    %c0_514 = arith.constant 0 : index
    %c0_515 = arith.constant 0 : index
    %503 = vector.load %arg2[%c1_512, %c42_513, %c0_514, %c0_515] : memref<2x49x1x64xf32, #tpu.memory_space<vmem>>, vector<1x1x1x64xf32>
    %504 = vector.shape_cast %503 : vector<1x1x1x64xf32> to vector<1x64xf32>
    %505 = vector.broadcast %504 : vector<1x64xf32> to vector<8x64xf32>
    %506 = arith.mulf %505, %497 : vector<8x64xf32>
    %507 = arith.addf %459, %506 : vector<8x64xf32>
    %c0_516 = arith.constant 0 : index
    %c1_517 = arith.constant 1 : index
    %c0_518 = arith.constant 0 : index
    %c3_519 = arith.constant 3 : index
    %c0_520 = arith.constant 0 : index
    %508 = vector.load %arg1[%c0_516, %c1_517, %c0_518, %c3_519, %c0_520] : memref<1x7x2x11x64xf32, #tpu.memory_space<vmem>>, vector<1x1x1x8x64xf32>
    %509 = vector.shape_cast %508 : vector<1x1x1x8x64xf32> to vector<8x64xf32>
    %c0_521 = arith.constant 0 : index
    %c43 = arith.constant 43 : index
    %c0_522 = arith.constant 0 : index
    %c0_523 = arith.constant 0 : index
    %510 = vector.load %arg2[%c0_521, %c43, %c0_522, %c0_523] : memref<2x49x1x64xf32, #tpu.memory_space<vmem>>, vector<1x1x1x64xf32>
    %511 = vector.shape_cast %510 : vector<1x1x1x64xf32> to vector<1x64xf32>
    %512 = vector.broadcast %511 : vector<1x64xf32> to vector<8x64xf32>
    %513 = arith.mulf %512, %509 : vector<8x64xf32>
    %514 = arith.addf %466, %513 : vector<8x64xf32>
    %c1_524 = arith.constant 1 : index
    %c43_525 = arith.constant 43 : index
    %c0_526 = arith.constant 0 : index
    %c0_527 = arith.constant 0 : index
    %515 = vector.load %arg2[%c1_524, %c43_525, %c0_526, %c0_527] : memref<2x49x1x64xf32, #tpu.memory_space<vmem>>, vector<1x1x1x64xf32>
    %516 = vector.shape_cast %515 : vector<1x1x1x64xf32> to vector<1x64xf32>
    %517 = vector.broadcast %516 : vector<1x64xf32> to vector<8x64xf32>
    %518 = arith.mulf %517, %509 : vector<8x64xf32>
    %519 = arith.addf %471, %518 : vector<8x64xf32>
    %c0_528 = arith.constant 0 : index
    %c2_529 = arith.constant 2 : index
    %c0_530 = arith.constant 0 : index
    %c3_531 = arith.constant 3 : index
    %c0_532 = arith.constant 0 : index
    %520 = vector.load %arg1[%c0_528, %c2_529, %c0_530, %c3_531, %c0_532] : memref<1x7x2x11x64xf32, #tpu.memory_space<vmem>>, vector<1x1x1x8x64xf32>
    %521 = vector.shape_cast %520 : vector<1x1x1x8x64xf32> to vector<8x64xf32>
    %c0_533 = arith.constant 0 : index
    %c44 = arith.constant 44 : index
    %c0_534 = arith.constant 0 : index
    %c0_535 = arith.constant 0 : index
    %522 = vector.load %arg2[%c0_533, %c44, %c0_534, %c0_535] : memref<2x49x1x64xf32, #tpu.memory_space<vmem>>, vector<1x1x1x64xf32>
    %523 = vector.shape_cast %522 : vector<1x1x1x64xf32> to vector<1x64xf32>
    %524 = vector.broadcast %523 : vector<1x64xf32> to vector<8x64xf32>
    %525 = arith.mulf %524, %521 : vector<8x64xf32>
    %526 = arith.addf %478, %525 : vector<8x64xf32>
    %c1_536 = arith.constant 1 : index
    %c44_537 = arith.constant 44 : index
    %c0_538 = arith.constant 0 : index
    %c0_539 = arith.constant 0 : index
    %527 = vector.load %arg2[%c1_536, %c44_537, %c0_538, %c0_539] : memref<2x49x1x64xf32, #tpu.memory_space<vmem>>, vector<1x1x1x64xf32>
    %528 = vector.shape_cast %527 : vector<1x1x1x64xf32> to vector<1x64xf32>
    %529 = vector.broadcast %528 : vector<1x64xf32> to vector<8x64xf32>
    %530 = arith.mulf %529, %521 : vector<8x64xf32>
    %531 = arith.addf %483, %530 : vector<8x64xf32>
    %c0_540 = arith.constant 0 : index
    %c3_541 = arith.constant 3 : index
    %c0_542 = arith.constant 0 : index
    %c3_543 = arith.constant 3 : index
    %c0_544 = arith.constant 0 : index
    %532 = vector.load %arg1[%c0_540, %c3_541, %c0_542, %c3_543, %c0_544] : memref<1x7x2x11x64xf32, #tpu.memory_space<vmem>>, vector<1x1x1x8x64xf32>
    %533 = vector.shape_cast %532 : vector<1x1x1x8x64xf32> to vector<8x64xf32>
    %c0_545 = arith.constant 0 : index
    %c45 = arith.constant 45 : index
    %c0_546 = arith.constant 0 : index
    %c0_547 = arith.constant 0 : index
    %534 = vector.load %arg2[%c0_545, %c45, %c0_546, %c0_547] : memref<2x49x1x64xf32, #tpu.memory_space<vmem>>, vector<1x1x1x64xf32>
    %535 = vector.shape_cast %534 : vector<1x1x1x64xf32> to vector<1x64xf32>
    %536 = vector.broadcast %535 : vector<1x64xf32> to vector<8x64xf32>
    %537 = arith.mulf %536, %533 : vector<8x64xf32>
    %538 = arith.addf %490, %537 : vector<8x64xf32>
    %c1_548 = arith.constant 1 : index
    %c45_549 = arith.constant 45 : index
    %c0_550 = arith.constant 0 : index
    %c0_551 = arith.constant 0 : index
    %539 = vector.load %arg2[%c1_548, %c45_549, %c0_550, %c0_551] : memref<2x49x1x64xf32, #tpu.memory_space<vmem>>, vector<1x1x1x64xf32>
    %540 = vector.shape_cast %539 : vector<1x1x1x64xf32> to vector<1x64xf32>
    %541 = vector.broadcast %540 : vector<1x64xf32> to vector<8x64xf32>
    %542 = arith.mulf %541, %533 : vector<8x64xf32>
    %543 = arith.addf %495, %542 : vector<8x64xf32>
    %c0_552 = arith.constant 0 : index
    %c4_553 = arith.constant 4 : index
    %c0_554 = arith.constant 0 : index
    %c3_555 = arith.constant 3 : index
    %c0_556 = arith.constant 0 : index
    %544 = vector.load %arg1[%c0_552, %c4_553, %c0_554, %c3_555, %c0_556] : memref<1x7x2x11x64xf32, #tpu.memory_space<vmem>>, vector<1x1x1x8x64xf32>
    %545 = vector.shape_cast %544 : vector<1x1x1x8x64xf32> to vector<8x64xf32>
    %c0_557 = arith.constant 0 : index
    %c46 = arith.constant 46 : index
    %c0_558 = arith.constant 0 : index
    %c0_559 = arith.constant 0 : index
    %546 = vector.load %arg2[%c0_557, %c46, %c0_558, %c0_559] : memref<2x49x1x64xf32, #tpu.memory_space<vmem>>, vector<1x1x1x64xf32>
    %547 = vector.shape_cast %546 : vector<1x1x1x64xf32> to vector<1x64xf32>
    %548 = vector.broadcast %547 : vector<1x64xf32> to vector<8x64xf32>
    %549 = arith.mulf %548, %545 : vector<8x64xf32>
    %550 = arith.addf %502, %549 : vector<8x64xf32>
    %c1_560 = arith.constant 1 : index
    %c46_561 = arith.constant 46 : index
    %c0_562 = arith.constant 0 : index
    %c0_563 = arith.constant 0 : index
    %551 = vector.load %arg2[%c1_560, %c46_561, %c0_562, %c0_563] : memref<2x49x1x64xf32, #tpu.memory_space<vmem>>, vector<1x1x1x64xf32>
    %552 = vector.shape_cast %551 : vector<1x1x1x64xf32> to vector<1x64xf32>
    %553 = vector.broadcast %552 : vector<1x64xf32> to vector<8x64xf32>
    %554 = arith.mulf %553, %545 : vector<8x64xf32>
    %555 = arith.addf %507, %554 : vector<8x64xf32>
    %c0_564 = arith.constant 0 : index
    %c5_565 = arith.constant 5 : index
    %c0_566 = arith.constant 0 : index
    %c3_567 = arith.constant 3 : index
    %c0_568 = arith.constant 0 : index
    %556 = vector.load %arg1[%c0_564, %c5_565, %c0_566, %c3_567, %c0_568] : memref<1x7x2x11x64xf32, #tpu.memory_space<vmem>>, vector<1x1x1x8x64xf32>
    %557 = vector.shape_cast %556 : vector<1x1x1x8x64xf32> to vector<8x64xf32>
    %c0_569 = arith.constant 0 : index
    %c47 = arith.constant 47 : index
    %c0_570 = arith.constant 0 : index
    %c0_571 = arith.constant 0 : index
    %558 = vector.load %arg2[%c0_569, %c47, %c0_570, %c0_571] : memref<2x49x1x64xf32, #tpu.memory_space<vmem>>, vector<1x1x1x64xf32>
    %559 = vector.shape_cast %558 : vector<1x1x1x64xf32> to vector<1x64xf32>
    %560 = vector.broadcast %559 : vector<1x64xf32> to vector<8x64xf32>
    %561 = arith.mulf %560, %557 : vector<8x64xf32>
    %562 = arith.addf %514, %561 : vector<8x64xf32>
    %c1_572 = arith.constant 1 : index
    %c47_573 = arith.constant 47 : index
    %c0_574 = arith.constant 0 : index
    %c0_575 = arith.constant 0 : index
    %563 = vector.load %arg2[%c1_572, %c47_573, %c0_574, %c0_575] : memref<2x49x1x64xf32, #tpu.memory_space<vmem>>, vector<1x1x1x64xf32>
    %564 = vector.shape_cast %563 : vector<1x1x1x64xf32> to vector<1x64xf32>
    %565 = vector.broadcast %564 : vector<1x64xf32> to vector<8x64xf32>
    %566 = arith.mulf %565, %557 : vector<8x64xf32>
    %567 = arith.addf %519, %566 : vector<8x64xf32>
    %c0_576 = arith.constant 0 : index
    %c6_577 = arith.constant 6 : index
    %c0_578 = arith.constant 0 : index
    %c3_579 = arith.constant 3 : index
    %c0_580 = arith.constant 0 : index
    %568 = vector.load %arg1[%c0_576, %c6_577, %c0_578, %c3_579, %c0_580] : memref<1x7x2x11x64xf32, #tpu.memory_space<vmem>>, vector<1x1x1x8x64xf32>
    %569 = vector.shape_cast %568 : vector<1x1x1x8x64xf32> to vector<8x64xf32>
    %c0_581 = arith.constant 0 : index
    %c48 = arith.constant 48 : index
    %c0_582 = arith.constant 0 : index
    %c0_583 = arith.constant 0 : index
    %570 = vector.load %arg2[%c0_581, %c48, %c0_582, %c0_583] : memref<2x49x1x64xf32, #tpu.memory_space<vmem>>, vector<1x1x1x64xf32>
    %571 = vector.shape_cast %570 : vector<1x1x1x64xf32> to vector<1x64xf32>
    %572 = vector.broadcast %571 : vector<1x64xf32> to vector<8x64xf32>
    %573 = arith.mulf %572, %569 : vector<8x64xf32>
    %574 = arith.addf %526, %573 : vector<8x64xf32>
    %c1_584 = arith.constant 1 : index
    %c48_585 = arith.constant 48 : index
    %c0_586 = arith.constant 0 : index
    %c0_587 = arith.constant 0 : index
    %575 = vector.load %arg2[%c1_584, %c48_585, %c0_586, %c0_587] : memref<2x49x1x64xf32, #tpu.memory_space<vmem>>, vector<1x1x1x64xf32>
    %576 = vector.shape_cast %575 : vector<1x1x1x64xf32> to vector<1x64xf32>
    %577 = vector.broadcast %576 : vector<1x64xf32> to vector<8x64xf32>
    %578 = arith.mulf %577, %569 : vector<8x64xf32>
    %579 = arith.addf %531, %578 : vector<8x64xf32>
    %580 = arith.addf %574, %538 : vector<8x64xf32>
    %581 = arith.addf %550, %562 : vector<8x64xf32>
    %582 = arith.addf %580, %581 : vector<8x64xf32>
    %c0_588 = arith.constant 0 : index
    %c0_589 = arith.constant 0 : index
    %c0_590 = arith.constant 0 : index
    %583 = vector.load %arg3[%c0_588, %c0_589, %c0_590] : memref<2x1x64xf32, #tpu.memory_space<vmem>>, vector<1x1x64xf32>
    %584 = vector.shape_cast %583 : vector<1x1x64xf32> to vector<1x64xf32>
    %585 = vector.broadcast %584 : vector<1x64xf32> to vector<8x64xf32>
    %586 = arith.addf %582, %585 : vector<8x64xf32>
    %cst = arith.constant 0.000000e+00 : f32
    %587 = vector.broadcast %cst : f32 to vector<8x64xf32>
    %588 = arith.minimumf %586, %587 : vector<8x64xf32>
    %589 = math.exp %588 : vector<8x64xf32>
    %cst_591 = arith.constant 1.000000e+00 : f32
    %590 = vector.broadcast %cst_591 : f32 to vector<8x64xf32>
    %591 = arith.subf %589, %590 : vector<8x64xf32>
    %cst_592 = arith.constant 1.67326319 : f32
    %592 = vector.broadcast %cst_592 : f32 to vector<8x64xf32>
    %593 = arith.mulf %592, %591 : vector<8x64xf32>
    %cst_593 = arith.constant 0.000000e+00 : f32
    %594 = vector.broadcast %cst_593 : f32 to vector<8x64xf32>
    %595 = arith.cmpf ogt, %586, %594 : vector<8x64xf32>
    %596 = arith.select %595, %586, %593 : vector<8x64xi1>, vector<8x64xf32>
    %cst_594 = arith.constant 1.05070102 : f32
    %597 = vector.broadcast %cst_594 : f32 to vector<8x64xf32>
    %598 = arith.mulf %597, %596 : vector<8x64xf32>
    %c0_595 = arith.constant 0 : index
    %c0_596 = arith.constant 0 : index
    %c0_597 = arith.constant 0 : index
    %599 = vector.load %arg4[%c0_595, %c0_596, %c0_597] : memref<1x8x64xf32, #tpu.memory_space<vmem>>, vector<1x8x64xf32>
    %600 = vector.shape_cast %599 : vector<1x8x64xf32> to vector<8x64xf32>
    %601 = arith.mulf %598, %600 : vector<8x64xf32>
    %cst_598 = arith.constant dense<0.000000e+00> : vector<64xf32>
    %602 = vector.multi_reduction <add>, %601, %cst_598 [0] : vector<8x64xf32> to vector<64xf32>
    %603 = vector.shape_cast %602 : vector<64xf32> to vector<1x64xf32>
    %604 = arith.addf %579, %543 : vector<8x64xf32>
    %605 = arith.addf %555, %567 : vector<8x64xf32>
    %606 = arith.addf %604, %605 : vector<8x64xf32>
    %c1_599 = arith.constant 1 : index
    %c0_600 = arith.constant 0 : index
    %c0_601 = arith.constant 0 : index
    %607 = vector.load %arg3[%c1_599, %c0_600, %c0_601] : memref<2x1x64xf32, #tpu.memory_space<vmem>>, vector<1x1x64xf32>
    %608 = vector.shape_cast %607 : vector<1x1x64xf32> to vector<1x64xf32>
    %609 = vector.broadcast %608 : vector<1x64xf32> to vector<8x64xf32>
    %610 = arith.addf %606, %609 : vector<8x64xf32>
    %cst_602 = arith.constant 0.000000e+00 : f32
    %611 = vector.broadcast %cst_602 : f32 to vector<8x64xf32>
    %612 = arith.minimumf %610, %611 : vector<8x64xf32>
    %613 = math.exp %612 : vector<8x64xf32>
    %cst_603 = arith.constant 1.000000e+00 : f32
    %614 = vector.broadcast %cst_603 : f32 to vector<8x64xf32>
    %615 = arith.subf %613, %614 : vector<8x64xf32>
    %cst_604 = arith.constant 1.67326319 : f32
    %616 = vector.broadcast %cst_604 : f32 to vector<8x64xf32>
    %617 = arith.mulf %616, %615 : vector<8x64xf32>
    %cst_605 = arith.constant 0.000000e+00 : f32
    %618 = vector.broadcast %cst_605 : f32 to vector<8x64xf32>
    %619 = arith.cmpf ogt, %610, %618 : vector<8x64xf32>
    %620 = arith.select %619, %610, %617 : vector<8x64xi1>, vector<8x64xf32>
    %cst_606 = arith.constant 1.05070102 : f32
    %621 = vector.broadcast %cst_606 : f32 to vector<8x64xf32>
    %622 = arith.mulf %621, %620 : vector<8x64xf32>
    %c0_607 = arith.constant 0 : index
    %c0_608 = arith.constant 0 : index
    %c0_609 = arith.constant 0 : index
    %623 = vector.load %arg4[%c0_607, %c0_608, %c0_609] : memref<1x8x64xf32, #tpu.memory_space<vmem>>, vector<1x8x64xf32>
    %624 = vector.shape_cast %623 : vector<1x8x64xf32> to vector<8x64xf32>
    %625 = arith.mulf %622, %624 : vector<8x64xf32>
    %cst_610 = arith.constant dense<0.000000e+00> : vector<64xf32>
    %626 = vector.multi_reduction <add>, %625, %cst_610 [0] : vector<8x64xf32> to vector<64xf32>
    %627 = vector.shape_cast %626 : vector<64xf32> to vector<1x64xf32>
    %628 = tpu.concatenate %598, %622 in 1 : vector<8x64xf32>, vector<8x64xf32> -> vector<8x128xf32>
    %c0_611 = arith.constant 0 : index
    %c0_612 = arith.constant 0 : index
    %c0_613 = arith.constant 0 : index
    %629 = vector.load %arg7[%c0_611, %c0_612, %c0_613] : memref<1x8x128xf32, #tpu.memory_space<vmem>>, vector<1x8x128xf32>
    %630 = vector.shape_cast %629 : vector<1x8x128xf32> to vector<8x128xf32>
    %631 = vector.shape_cast %628 : vector<8x128xf32> to vector<1x8x128xf32>
    tpu.vector_store %arg7[%c0_611, %c0_612, %c0_613], %631 {strides = array<i32>} : memref<1x8x128xf32, #tpu.memory_space<vmem>>, vector<1x8x128xf32>,
    %632 = tpu.concatenate %603, %627 in 0 : vector<1x64xf32>, vector<1x64xf32> -> vector<2x64xf32>
    %c0_614 = arith.constant 0 : index
    %c0_615 = arith.constant 0 : index
    %633 = vector.load %arg5[%c0_614, %c0_615] : memref<64x8xf32, #tpu.memory_space<vmem>>, vector<64x8xf32>
    %cst_616 = arith.constant dense<0.000000e+00> : vector<2x8xf32>
    %634 = tpu.matmul %632, %633, %cst_616 {dimension_numbers = #tpu.dot_dimension_numbers<[1], [0], [0], [1], [0, 0, 1, 1], [], []>, precision = #tpu.contract_precision<fp32>} : vector<2x64xf32>, vector<64x8xf32>, vector<2x8xf32> -> vector<2x8xf32>
    %c0_617 = arith.constant 0 : index
    %c0_618 = arith.constant 0 : index
    %635 = vector.load %arg6[%c0_617, %c0_618] : memref<2x1xf32, #tpu.memory_space<vmem>>, vector<2x1xf32>
    %636 = vector.broadcast %635 : vector<2x1xf32> to vector<2x8xf32>
    %637 = arith.addf %634, %636 : vector<2x8xf32>
    %c0_619 = arith.constant 0 : index
    %c0_620 = arith.constant 0 : index
    %c0_621 = arith.constant 0 : index
    %638 = vector.load %arg8[%c0_619, %c0_620, %c0_621] : memref<1x2x8xf32, #tpu.memory_space<vmem>>, vector<1x2x8xf32>
    %639 = vector.shape_cast %638 : vector<1x2x8xf32> to vector<2x8xf32>
    %640 = vector.shape_cast %637 : vector<2x8xf32> to vector<1x2x8xf32>
    tpu.vector_store %arg8[%c0_619, %c0_620, %c0_621], %640 {strides = array<i32>} : memref<1x2x8xf32, #tpu.memory_space<vmem>>, vector<1x2x8xf32>,
    return
  }
  func.func @transform_0(%arg0: i32) -> (i32, i32, i32, i32, i32) {
    %c0_i32 = arith.constant 0 : i32
    %c0_i32_0 = arith.constant 0 : i32
    %c0_i32_1 = arith.constant 0 : i32
    %c0_i32_2 = arith.constant 0 : i32
    %c0_i32_3 = arith.constant 0 : i32
    return %arg0, %c0_i32, %c0_i32_0, %c0_i32_1, %c0_i32_2 : i32, i32, i32, i32, i32
  }
  func.func @transform_1(%arg0: i32) -> (i32, i32, i32, i32) {
    %c0_i32 = arith.constant 0 : i32
    %c0_i32_0 = arith.constant 0 : i32
    %c0_i32_1 = arith.constant 0 : i32
    %c0_i32_2 = arith.constant 0 : i32
    %c0_i32_3 = arith.constant 0 : i32
    return %c0_i32, %c0_i32_0, %c0_i32_1, %c0_i32_2 : i32, i32, i32, i32
  }
  func.func @transform_2(%arg0: i32) -> (i32, i32, i32) {
    %c0_i32 = arith.constant 0 : i32
    %c0_i32_0 = arith.constant 0 : i32
    %c0_i32_1 = arith.constant 0 : i32
    %c0_i32_2 = arith.constant 0 : i32
    return %c0_i32, %c0_i32_0, %c0_i32_1 : i32, i32, i32
  }
  func.func @transform_3(%arg0: i32) -> (i32, i32, i32) {
    %c0_i32 = arith.constant 0 : i32
    %c0_i32_0 = arith.constant 0 : i32
    %c0_i32_1 = arith.constant 0 : i32
    %c0_i32_2 = arith.constant 0 : i32
    return %c0_i32, %c0_i32_0, %c0_i32_1 : i32, i32, i32
  }
  func.func @transform_4(%arg0: i32) -> (i32, i32) {
    %c0_i32 = arith.constant 0 : i32
    %c0_i32_0 = arith.constant 0 : i32
    %c0_i32_1 = arith.constant 0 : i32
    return %c0_i32, %c0_i32_0 : i32, i32
  }
  func.func @transform_5(%arg0: i32) -> (i32, i32) {
    %c0_i32 = arith.constant 0 : i32
    %c0_i32_0 = arith.constant 0 : i32
    %c0_i32_1 = arith.constant 0 : i32
    return %c0_i32, %c0_i32_0 : i32, i32
  }
  func.func @transform_6(%arg0: i32) -> (i32, i32, i32) {
    %c0_i32 = arith.constant 0 : i32
    %c0_i32_0 = arith.constant 0 : i32
    %c0_i32_1 = arith.constant 0 : i32
    return %arg0, %c0_i32, %c0_i32_0 : i32, i32, i32
  }
  func.func @transform_7(%arg0: i32) -> (i32, i32, i32) {
    %c0_i32 = arith.constant 0 : i32
    %c0_i32_0 = arith.constant 0 : i32
    %c0_i32_1 = arith.constant 0 : i32
    return %arg0, %c0_i32, %c0_i32_0 : i32, i32, i32
  }
}

</mosaic_0001>

<llo_original>
// kernel: tpu_custom_call.1
$region0: #{tpu_custom_call.1}
  #allocation0 [shape = 'u32[]', space=smem, size = 0x4, offset = 0x4, fixed_abs, tag = 'smem constant byte address 0x4 - core index']
  #allocation1 [shape = 'u32[144,128]{1,0:T(1,128)}', space=vmem, size = 0x12000, scoped, tag = 'internal scratch']
  %s0 = inlined_call_operand.vmem [shape: f32[1,7,2,11,64], index: 0, kind: input, shape index: {}]
  %s1 = inlined_call_operand.vmem [shape: f32[2,49,1,64], index: 1, kind: input, shape index: {}]
  %s2 = inlined_call_operand.vmem [shape: f32[2,1,64], index: 2, kind: input, shape index: {}]
  %s3 = inlined_call_operand.vmem [shape: f32[1,8,64], index: 3, kind: input, shape index: {}]
  %s4 = inlined_call_operand.vmem [shape: f32[64,8], index: 4, kind: input, shape index: {}]
  %s5 = inlined_call_operand.vmem [shape: f32[2,1], index: 5, kind: input, shape index: {}]
  %s6 = inlined_call_operand.hbm [shape: f32[1,8,128], index: 6, kind: output, shape index: {0}]
  %s7 = inlined_call_operand.hbm [shape: f32[1,2,8], index: 7, kind: output, shape index: {1}]
  %8 = xla_tuple %s6, %s7
  %s9 = sld [smem:[#allocation0]]
  $region42: #{tpu_custom_call.1} parent=0
    _
  %s11 = ssub.s32 1, %s9
  %s12 = scalar_select 0, %s11, %s9
  $region1: #{tpu_custom_call.1} parent=0
    #allocation2 [shape = 'u8[4096]{0}', space=vmem, size = 0x1000, scoped, tag = 'output window, operand 0, single buffered']
    #allocation3 [shape = 's32[1]{0}', space=sflag, size = 0x4, scoped, tag = 'scoped memory for tpu_custom_call.1']
    #allocation4 [shape = 'u8[1024]{0}', space=vmem, size = 0x400, scoped, tag = 'output window, operand 1, single buffered']
    #allocation5 [shape = 's32[1]{0}', space=sflag, size = 0x4, scoped, tag = 'scoped memory for tpu_custom_call.1']
    %13 = vsyncpa [#allocation3], 0
    %14 = vsyncpa [#allocation5], 0
    // Predicated region
    $region2: #{tpu_custom_call.1} parent=1 // pred_check
      _
    $region3: #{tpu_custom_call.1} parent=1 // pred_check_branch
      %16 = sbr.rel (0) target = $region5
    $region4: #{tpu_custom_call.1} parent=1 // pred_region
      _
    $region5: #{tpu_custom_call.1} parent=1 // pred_fallthru
      _
    // Predicated region
    $region6: #{tpu_custom_call.1} parent=1 // pred_check
      _
    $region7: #{tpu_custom_call.1} parent=1 // pred_check_branch
      %18 = sbr.rel (0) target = $region9
    $region8: #{tpu_custom_call.1} parent=1 // pred_region
      _
    $region9: #{tpu_custom_call.1} parent=1 // pred_fallthru
      _
    // Predicated region
    $region10: #{tpu_custom_call.1} parent=1 // pred_check
      _
    $region11: #{tpu_custom_call.1} parent=1 // pred_check_branch
      %20 = sbr.rel (0) target = $region13
    $region12: #{tpu_custom_call.1} parent=1 // pred_region
      _
    $region13: #{tpu_custom_call.1} parent=1 // pred_fallthru
      _
    // Predicated region
    $region14: #{tpu_custom_call.1} parent=1 // pred_check
      _
    $region15: #{tpu_custom_call.1} parent=1 // pred_check_branch
      %22 = sbr.rel (0) target = $region17
    $region16: #{tpu_custom_call.1} parent=1 // pred_region
      _
    $region17: #{tpu_custom_call.1} parent=1 // pred_fallthru
      _
    // Predicated region
    $region18: #{tpu_custom_call.1} parent=1 // pred_check
      _
    $region19: #{tpu_custom_call.1} parent=1 // pred_check_branch
      %24 = sbr.rel (0) target = $region21
    $region20: #{tpu_custom_call.1} parent=1 // pred_region
      _
    $region21: #{tpu_custom_call.1} parent=1 // pred_fallthru
      _
    // Predicated region
    $region22: #{tpu_custom_call.1} parent=1 // pred_check
      _
    $region23: #{tpu_custom_call.1} parent=1 // pred_check_branch
      %26 = sbr.rel (0) target = $region25
    $region24: #{tpu_custom_call.1} parent=1 // pred_region
      _
    $region25: #{tpu_custom_call.1} parent=1 // pred_fallthru
      _
    %v27 = vld [vmem:[%s0] sm:$0xff]
    %v28 = vld [vmem:[%s1] sm:$0x1]
    %v30 = vlaneseq
    %v31 = vshrl.u32 %v30, 7
    %v32 = vsub.s32 0, %v31
    %v33 = vrot.slane %v28, %v32
    %v35 = vmul.f32 %v33, %v27
    %s36 = scalar_lea.vmem %s1, 49
    %v37 = vld [vmem:[%s36] sm:$0x1]
    %v39 = vlaneseq
    %v40 = vshrl.u32 %v39, 7
    %v41 = vsub.s32 0, %v40
    %v42 = vrot.slane %v37, %v41
    %v44 = vmul.f32 %v42, %v27
    %s45 = scalar_lea.vmem %s0, 32
    %v46 = vld [vmem:[%s45] sm:$0xff]
    %s47 = scalar_lea.vmem %s1, 1
    %v48 = vld [vmem:[%s47] sm:$0x1]
    %v50 = vlaneseq
    %v51 = vshrl.u32 %v50, 7
    %v52 = vsub.s32 0, %v51
    %v53 = vrot.slane %v48, %v52
    %v55 = vmul.f32 %v53, %v46
    %s56 = scalar_lea.vmem %s1, 50
    %v57 = vld [vmem:[%s56] sm:$0x1]
    %v59 = vlaneseq
    %v60 = vshrl.u32 %v59, 7
    %v61 = vsub.s32 0, %v60
    %v62 = vrot.slane %v57, %v61
    %v64 = vmul.f32 %v62, %v46
    %s65 = scalar_lea.vmem %s0, 64
    %v66 = vld [vmem:[%s65] sm:$0xff]
    %s67 = scalar_lea.vmem %s1, 2
    %v68 = vld [vmem:[%s67] sm:$0x1]
    %v70 = vlaneseq
    %v71 = vshrl.u32 %v70, 7
    %v72 = vsub.s32 0, %v71
    %v73 = vrot.slane %v68, %v72
    %v75 = vmul.f32 %v73, %v66
    %s76 = scalar_lea.vmem %s1, 51
    %v77 = vld [vmem:[%s76] sm:$0x1]
    %v79 = vlaneseq
    %v80 = vshrl.u32 %v79, 7
    %v81 = vsub.s32 0, %v80
    %v82 = vrot.slane %v77, %v81
    %v84 = vmul.f32 %v82, %v66
    %s85 = scalar_lea.vmem %s0, 96
    %v86 = vld [vmem:[%s85] sm:$0xff]
    %s87 = scalar_lea.vmem %s1, 3
    %v88 = vld [vmem:[%s87] sm:$0x1]
    %v90 = vlaneseq
    %v91 = vshrl.u32 %v90, 7
    %v92 = vsub.s32 0, %v91
    %v93 = vrot.slane %v88, %v92
    %v95 = vmul.f32 %v93, %v86
    %s96 = scalar_lea.vmem %s1, 52
    %v97 = vld [vmem:[%s96] sm:$0x1]
    %v99 = vlaneseq
    %v100 = vshrl.u32 %v99, 7
    %v101 = vsub.s32 0, %v100
    %v102 = vrot.slane %v97, %v101
    %v104 = vmul.f32 %v102, %v86
    %s105 = scalar_lea.vmem %s0, 128
    %v106 = vld [vmem:[%s105] sm:$0xff]
    %s107 = scalar_lea.vmem %s1, 4
    %v108 = vld [vmem:[%s107] sm:$0x1]
    %v110 = vlaneseq
    %v111 = vshrl.u32 %v110, 7
    %v112 = vsub.s32 0, %v111
    %v113 = vrot.slane %v108, %v112
    %v115 = vmul.f32 %v113, %v106
    %v116 = vadd.f32 %v35, %v115
    %s117 = scalar_lea.vmem %s1, 53
    %v118 = vld [vmem:[%s117] sm:$0x1]
    %v120 = vlaneseq
    %v121 = vshrl.u32 %v120, 7
    %v122 = vsub.s32 0, %v121
    %v123 = vrot.slane %v118, %v122
    %v125 = vmul.f32 %v123, %v106
    %v126 = vadd.f32 %v44, %v125
    %s127 = scalar_lea.vmem %s0, 160
    %v128 = vld [vmem:[%s127] sm:$0xff]
    %s129 = scalar_lea.vmem %s1, 5
    %v130 = vld [vmem:[%s129] sm:$0x1]
    %v132 = vlaneseq
    %v133 = vshrl.u32 %v132, 7
    %v134 = vsub.s32 0, %v133
    %v135 = vrot.slane %v130, %v134
    %v137 = vmul.f32 %v135, %v128
    %v138 = vadd.f32 %v55, %v137
    %s139 = scalar_lea.vmem %s1, 54
    %v140 = vld [vmem:[%s139] sm:$0x1]
    %v142 = vlaneseq
    %v143 = vshrl.u32 %v142, 7
    %v144 = vsub.s32 0, %v143
    %v145 = vrot.slane %v140, %v144
    %v147 = vmul.f32 %v145, %v128
    %v148 = vadd.f32 %v64, %v147
    %s149 = scalar_lea.vmem %s0, 192
    %v150 = vld [vmem:[%s149] sm:$0xff]
    %s151 = scalar_lea.vmem %s1, 6
    %v152 = vld [vmem:[%s151] sm:$0x1]
    %v154 = vlaneseq
    %v155 = vshrl.u32 %v154, 7
    %v156 = vsub.s32 0, %v155
    %v157 = vrot.slane %v152, %v156
    %v159 = vmul.f32 %v157, %v150
    %v160 = vadd.f32 %v75, %v159
    %s161 = scalar_lea.vmem %s1, 55
    %v162 = vld [vmem:[%s161] sm:$0x1]
    %v164 = vlaneseq
    %v165 = vshrl.u32 %v164, 7
    %v166 = vsub.s32 0, %v165
    %v167 = vrot.slane %v162, %v166
    %v169 = vmul.f32 %v167, %v150
    %v170 = vadd.f32 %v84, %v169
    %s171 = scalar_lea.vmem %s0, 16
    %v172 = vld [vmem:[%s171] sm:$0xff]
    %s173 = scalar_lea.vmem %s1, 7
    %v174 = vld [vmem:[%s173] sm:$0x1]
    %v176 = vlaneseq
    %v177 = vshrl.u32 %v176, 7
    %v178 = vsub.s32 0, %v177
    %v179 = vrot.slane %v174, %v178
    %v181 = vmul.f32 %v179, %v172
    %v182 = vadd.f32 %v95, %v181
    %s183 = scalar_lea.vmem %s1, 56
    %v184 = vld [vmem:[%s183] sm:$0x1]
    %v186 = vlaneseq
    %v187 = vshrl.u32 %v186, 7
    %v188 = vsub.s32 0, %v187
    %v189 = vrot.slane %v184, %v188
    %v191 = vmul.f32 %v189, %v172
    %v192 = vadd.f32 %v104, %v191
    %s193 = scalar_lea.vmem %s0, 48
    %v194 = vld [vmem:[%s193] sm:$0xff]
    %s195 = scalar_lea.vmem %s1, 8
    %v196 = vld [vmem:[%s195] sm:$0x1]
    %v198 = vlaneseq
    %v199 = vshrl.u32 %v198, 7
    %v200 = vsub.s32 0, %v199
    %v201 = vrot.slane %v196, %v200
    %v203 = vmul.f32 %v201, %v194
    %v204 = vadd.f32 %v116, %v203
    %s205 = scalar_lea.vmem %s1, 57
    %v206 = vld [vmem:[%s205] sm:$0x1]
    %v208 = vlaneseq
    %v209 = vshrl.u32 %v208, 7
    %v210 = vsub.s32 0, %v209
    %v211 = vrot.slane %v206, %v210
    %v213 = vmul.f32 %v211, %v194
    %v214 = vadd.f32 %v126, %v213
    %s215 = scalar_lea.vmem %s0, 80
    %v216 = vld [vmem:[%s215] sm:$0xff]
    %s217 = scalar_lea.vmem %s1, 9
    %v218 = vld [vmem:[%s217] sm:$0x1]
    %v220 = vlaneseq
    %v221 = vshrl.u32 %v220, 7
    %v222 = vsub.s32 0, %v221
    %v223 = vrot.slane %v218, %v222
    %v225 = vmul.f32 %v223, %v216
    %v226 = vadd.f32 %v138, %v225
    %s227 = scalar_lea.vmem %s1, 58
    %v228 = vld [vmem:[%s227] sm:$0x1]
    %v230 = vlaneseq
    %v231 = vshrl.u32 %v230, 7
    %v232 = vsub.s32 0, %v231
    %v233 = vrot.slane %v228, %v232
    %v235 = vmul.f32 %v233, %v216
    %v236 = vadd.f32 %v148, %v235
    %s237 = scalar_lea.vmem %s0, 112
    %v238 = vld [vmem:[%s237] sm:$0xff]
    %s239 = scalar_lea.vmem %s1, 10
    %v240 = vld [vmem:[%s239] sm:$0x1]
    %v242 = vlaneseq
    %v243 = vshrl.u32 %v242, 7
    %v244 = vsub.s32 0, %v243
    %v245 = vrot.slane %v240, %v244
    %v247 = vmul.f32 %v245, %v238
    %v248 = vadd.f32 %v160, %v247
    %s249 = scalar_lea.vmem %s1, 59
    %v250 = vld [vmem:[%s249] sm:$0x1]
    %v252 = vlaneseq
    %v253 = vshrl.u32 %v252, 7
    %v254 = vsub.s32 0, %v253
    %v255 = vrot.slane %v250, %v254
    %v257 = vmul.f32 %v255, %v238
    %v258 = vadd.f32 %v170, %v257
    %s259 = scalar_lea.vmem %s0, 144
    %v260 = vld [vmem:[%s259] sm:$0xff]
    %s261 = scalar_lea.vmem %s1, 11
    %v262 = vld [vmem:[%s261] sm:$0x1]
    %v264 = vlaneseq
    %v265 = vshrl.u32 %v264, 7
    %v266 = vsub.s32 0, %v265
    %v267 = vrot.slane %v262, %v266
    %v269 = vmul.f32 %v267, %v260
    %v270 = vadd.f32 %v182, %v269
    %s271 = scalar_lea.vmem %s1, 60
    %v272 = vld [vmem:[%s271] sm:$0x1]
    %v274 = vlaneseq
    %v275 = vshrl.u32 %v274, 7
    %v276 = vsub.s32 0, %v275
    %v277 = vrot.slane %v272, %v276
    %v279 = vmul.f32 %v277, %v260
    %v280 = vadd.f32 %v192, %v279
    %s281 = scalar_lea.vmem %s0, 176
    %v282 = vld [vmem:[%s281] sm:$0xff]
    %s283 = scalar_lea.vmem %s1, 12
    %v284 = vld [vmem:[%s283] sm:$0x1]
    %v286 = vlaneseq
    %v287 = vshrl.u32 %v286, 7
    %v288 = vsub.s32 0, %v287
    %v289 = vrot.slane %v284, %v288
    %v291 = vmul.f32 %v289, %v282
    %v292 = vadd.f32 %v204, %v291
    %s293 = scalar_lea.vmem %s1, 61
    %v294 = vld [vmem:[%s293] sm:$0x1]
    %v296 = vlaneseq
    %v297 = vshrl.u32 %v296, 7
    %v298 = vsub.s32 0, %v297
    %v299 = vrot.slane %v294, %v298
    %v301 = vmul.f32 %v299, %v282
    %v302 = vadd.f32 %v214, %v301
    %s303 = scalar_lea.vmem %s0, 208
    %v304 = vld [vmem:[%s303] sm:$0xff]
    %s305 = scalar_lea.vmem %s1, 13
    %v306 = vld [vmem:[%s305] sm:$0x1]
    %v308 = vlaneseq
    %v309 = vshrl.u32 %v308, 7
    %v310 = vsub.s32 0, %v309
    %v311 = vrot.slane %v306, %v310
    %v313 = vmul.f32 %v311, %v304
    %v314 = vadd.f32 %v226, %v313
    %s315 = scalar_lea.vmem %s1, 62
    %v316 = vld [vmem:[%s315] sm:$0x1]
    %v318 = vlaneseq
    %v319 = vshrl.u32 %v318, 7
    %v320 = vsub.s32 0, %v319
    %v321 = vrot.slane %v316, %v320
    %v323 = vmul.f32 %v321, %v304
    %v324 = vadd.f32 %v236, %v323
    %v325 = vld [vmem:[%s0 + $0x1] sm:$0xff]
    %s326 = scalar_lea.vmem %s1, 14
    %v327 = vld [vmem:[%s326] sm:$0x1]
    %v329 = vlaneseq
    %v330 = vshrl.u32 %v329, 7
    %v331 = vsub.s32 0, %v330
    %v332 = vrot.slane %v327, %v331
    %v334 = vmul.f32 %v332, %v325
    %v335 = vadd.f32 %v248, %v334
    %s336 = scalar_lea.vmem %s1, 63
    %v337 = vld [vmem:[%s336] sm:$0x1]
    %v339 = vlaneseq
    %v340 = vshrl.u32 %v339, 7
    %v341 = vsub.s32 0, %v340
    %v342 = vrot.slane %v337, %v341
    %v344 = vmul.f32 %v342, %v325
    %v345 = vadd.f32 %v258, %v344
    %v346 = vld [vmem:[%s45 + $0x1] sm:$0xff]
    %s347 = scalar_lea.vmem %s1, 15
    %v348 = vld [vmem:[%s347] sm:$0x1]
    %v350 = vlaneseq
    %v351 = vshrl.u32 %v350, 7
    %v352 = vsub.s32 0, %v351
    %v353 = vrot.slane %v348, %v352
    %v355 = vmul.f32 %v353, %v346
    %v356 = vadd.f32 %v270, %v355
    %s357 = scalar_lea.vmem %s1, 64
    %v358 = vld [vmem:[%s357] sm:$0x1]
    %v360 = vlaneseq
    %v361 = vshrl.u32 %v360, 7
    %v362 = vsub.s32 0, %v361
    %v363 = vrot.slane %v358, %v362
    %v365 = vmul.f32 %v363, %v346
    %v366 = vadd.f32 %v280, %v365
    %v367 = vld [vmem:[%s65 + $0x1] sm:$0xff]
    %s368 = scalar_lea.vmem %s1, 16
    %v369 = vld [vmem:[%s368] sm:$0x1]
    %v371 = vlaneseq
    %v372 = vshrl.u32 %v371, 7
    %v373 = vsub.s32 0, %v372
    %v374 = vrot.slane %v369, %v373
    %v376 = vmul.f32 %v374, %v367
    %v377 = vadd.f32 %v292, %v376
    %s378 = scalar_lea.vmem %s1, 65
    %v379 = vld [vmem:[%s378] sm:$0x1]
    %v381 = vlaneseq
    %v382 = vshrl.u32 %v381, 7
    %v383 = vsub.s32 0, %v382
    %v384 = vrot.slane %v379, %v383
    %v386 = vmul.f32 %v384, %v367
    %v387 = vadd.f32 %v302, %v386
    %v388 = vld [vmem:[%s85 + $0x1] sm:$0xff]
    %s389 = scalar_lea.vmem %s1, 17
    %v390 = vld [vmem:[%s389] sm:$0x1]
    %v392 = vlaneseq
    %v393 = vshrl.u32 %v392, 7
    %v394 = vsub.s32 0, %v393
    %v395 = vrot.slane %v390, %v394
    %v397 = vmul.f32 %v395, %v388
    %v398 = vadd.f32 %v314, %v397
    %s399 = scalar_lea.vmem %s1, 66
    %v400 = vld [vmem:[%s399] sm:$0x1]
    %v402 = vlaneseq
    %v403 = vshrl.u32 %v402, 7
    %v404 = vsub.s32 0, %v403
    %v405 = vrot.slane %v400, %v404
    %v407 = vmul.f32 %v405, %v388
    %v408 = vadd.f32 %v324, %v407
    %v409 = vld [vmem:[%s105 + $0x1] sm:$0xff]
    %s410 = scalar_lea.vmem %s1, 18
    %v411 = vld [vmem:[%s410] sm:$0x1]
    %v413 = vlaneseq
    %v414 = vshrl.u32 %v413, 7
    %v415 = vsub.s32 0, %v414
    %v416 = vrot.slane %v411, %v415
    %v418 = vmul.f32 %v416, %v409
    %v419 = vadd.f32 %v335, %v418
    %s420 = scalar_lea.vmem %s1, 67
    %v421 = vld [vmem:[%s420] sm:$0x1]
    %v423 = vlaneseq
    %v424 = vshrl.u32 %v423, 7
    %v425 = vsub.s32 0, %v424
    %v426 = vrot.slane %v421, %v425
    %v428 = vmul.f32 %v426, %v409
    %v429 = vadd.f32 %v345, %v428
    %v430 = vld [vmem:[%s127 + $0x1] sm:$0xff]
    %s431 = scalar_lea.vmem %s1, 19
    %v432 = vld [vmem:[%s431] sm:$0x1]
    %v434 = vlaneseq
    %v435 = vshrl.u32 %v434, 7
    %v436 = vsub.s32 0, %v435
    %v437 = vrot.slane %v432, %v436
    %v439 = vmul.f32 %v437, %v430
    %v440 = vadd.f32 %v356, %v439
    %s441 = scalar_lea.vmem %s1, 68
    %v442 = vld [vmem:[%s441] sm:$0x1]
    %v444 = vlaneseq
    %v445 = vshrl.u32 %v444, 7
    %v446 = vsub.s32 0, %v445
    %v447 = vrot.slane %v442, %v446
    %v449 = vmul.f32 %v447, %v430
    %v450 = vadd.f32 %v366, %v449
    %v451 = vld [vmem:[%s149 + $0x1] sm:$0xff]
    %s452 = scalar_lea.vmem %s1, 20
    %v453 = vld [vmem:[%s452] sm:$0x1]
    %v455 = vlaneseq
    %v456 = vshrl.u32 %v455, 7
    %v457 = vsub.s32 0, %v456
    %v458 = vrot.slane %v453, %v457
    %v460 = vmul.f32 %v458, %v451
    %v461 = vadd.f32 %v377, %v460
    %s462 = scalar_lea.vmem %s1, 69
    %v463 = vld [vmem:[%s462] sm:$0x1]
    %v465 = vlaneseq
    %v466 = vshrl.u32 %v465, 7
    %v467 = vsub.s32 0, %v466
    %v468 = vrot.slane %v463, %v467
    %v470 = vmul.f32 %v468, %v451
    %v471 = vadd.f32 %v387, %v470
    %v472 = vld [vmem:[%s171 + $0x1] sm:$0xff]
    %s473 = scalar_lea.vmem %s1, 21
    %v474 = vld [vmem:[%s473] sm:$0x1]
    %v476 = vlaneseq
    %v477 = vshrl.u32 %v476, 7
    %v478 = vsub.s32 0, %v477
    %v479 = vrot.slane %v474, %v478
    %v481 = vmul.f32 %v479, %v472
    %v482 = vadd.f32 %v398, %v481
    %s483 = scalar_lea.vmem %s1, 70
    %v484 = vld [vmem:[%s483] sm:$0x1]
    %v486 = vlaneseq
    %v487 = vshrl.u32 %v486, 7
    %v488 = vsub.s32 0, %v487
    %v489 = vrot.slane %v484, %v488
    %v491 = vmul.f32 %v489, %v472
    %v492 = vadd.f32 %v408, %v491
    %v493 = vld [vmem:[%s193 + $0x1] sm:$0xff]
    %s494 = scalar_lea.vmem %s1, 22
    %v495 = vld [vmem:[%s494] sm:$0x1]
    %v497 = vlaneseq
    %v498 = vshrl.u32 %v497, 7
    %v499 = vsub.s32 0, %v498
    %v500 = vrot.slane %v495, %v499
    %v502 = vmul.f32 %v500, %v493
    %v503 = vadd.f32 %v419, %v502
    %s504 = scalar_lea.vmem %s1, 71
    %v505 = vld [vmem:[%s504] sm:$0x1]
    %v507 = vlaneseq
    %v508 = vshrl.u32 %v507, 7
    %v509 = vsub.s32 0, %v508
    %v510 = vrot.slane %v505, %v509
    %v512 = vmul.f32 %v510, %v493
    %v513 = vadd.f32 %v429, %v512
    %v514 = vld [vmem:[%s215 + $0x1] sm:$0xff]
    %s515 = scalar_lea.vmem %s1, 23
    %v516 = vld [vmem:[%s515] sm:$0x1]
    %v518 = vlaneseq
    %v519 = vshrl.u32 %v518, 7
    %v520 = vsub.s32 0, %v519
    %v521 = vrot.slane %v516, %v520
    %v523 = vmul.f32 %v521, %v514
    %v524 = vadd.f32 %v440, %v523
    %s525 = scalar_lea.vmem %s1, 72
    %v526 = vld [vmem:[%s525] sm:$0x1]
    %v528 = vlaneseq
    %v529 = vshrl.u32 %v528, 7
    %v530 = vsub.s32 0, %v529
    %v531 = vrot.slane %v526, %v530
    %v533 = vmul.f32 %v531, %v514
    %v534 = vadd.f32 %v450, %v533
    %v535 = vld [vmem:[%s237 + $0x1] sm:$0xff]
    %s536 = scalar_lea.vmem %s1, 24
    %v537 = vld [vmem:[%s536] sm:$0x1]
    %v539 = vlaneseq
    %v540 = vshrl.u32 %v539, 7
    %v541 = vsub.s32 0, %v540
    %v542 = vrot.slane %v537, %v541
    %v544 = vmul.f32 %v542, %v535
    %v545 = vadd.f32 %v461, %v544
    %s546 = scalar_lea.vmem %s1, 73
    %v547 = vld [vmem:[%s546] sm:$0x1]
    %v549 = vlaneseq
    %v550 = vshrl.u32 %v549, 7
    %v551 = vsub.s32 0, %v550
    %v552 = vrot.slane %v547, %v551
    %v554 = vmul.f32 %v552, %v535
    %v555 = vadd.f32 %v471, %v554
    %v556 = vld [vmem:[%s259 + $0x1] sm:$0xff]
    %s557 = scalar_lea.vmem %s1, 25
    %v558 = vld [vmem:[%s557] sm:$0x1]
    %v560 = vlaneseq
    %v561 = vshrl.u32 %v560, 7
    %v562 = vsub.s32 0, %v561
    %v563 = vrot.slane %v558, %v562
    %v565 = vmul.f32 %v563, %v556
    %v566 = vadd.f32 %v482, %v565
    %s567 = scalar_lea.vmem %s1, 74
    %v568 = vld [vmem:[%s567] sm:$0x1]
    %v570 = vlaneseq
    %v571 = vshrl.u32 %v570, 7
    %v572 = vsub.s32 0, %v571
    %v573 = vrot.slane %v568, %v572
    %v575 = vmul.f32 %v573, %v556
    %v576 = vadd.f32 %v492, %v575
    %v577 = vld [vmem:[%s281 + $0x1] sm:$0xff]
    %s578 = scalar_lea.vmem %s1, 26
    %v579 = vld [vmem:[%s578] sm:$0x1]
    %v581 = vlaneseq
    %v582 = vshrl.u32 %v581, 7
    %v583 = vsub.s32 0, %v582
    %v584 = vrot.slane %v579, %v583
    %v586 = vmul.f32 %v584, %v577
    %v587 = vadd.f32 %v503, %v586
    %s588 = scalar_lea.vmem %s1, 75
    %v589 = vld [vmem:[%s588] sm:$0x1]
    %v591 = vlaneseq
    %v592 = vshrl.u32 %v591, 7
    %v593 = vsub.s32 0, %v592
    %v594 = vrot.slane %v589, %v593
    %v596 = vmul.f32 %v594, %v577
    %v597 = vadd.f32 %v513, %v596
    %v598 = vld [vmem:[%s303 + $0x1] sm:$0xff]
    %s599 = scalar_lea.vmem %s1, 27
    %v600 = vld [vmem:[%s599] sm:$0x1]
    %v602 = vlaneseq
    %v603 = vshrl.u32 %v602, 7
    %v604 = vsub.s32 0, %v603
    %v605 = vrot.slane %v600, %v604
    %v607 = vmul.f32 %v605, %v598
    %v608 = vadd.f32 %v524, %v607
    %s609 = scalar_lea.vmem %s1, 76
    %v610 = vld [vmem:[%s609] sm:$0x1]
    %v612 = vlaneseq
    %v613 = vshrl.u32 %v612, 7
    %v614 = vsub.s32 0, %v613
    %v615 = vrot.slane %v610, %v614
    %v617 = vmul.f32 %v615, %v598
    %v618 = vadd.f32 %v534, %v617
    %v619 = vld [vmem:[%s0 + $0x2] sm:$0xff]
    %s620 = scalar_lea.vmem %s1, 28
    %v621 = vld [vmem:[%s620] sm:$0x1]
    %v623 = vlaneseq
    %v624 = vshrl.u32 %v623, 7
    %v625 = vsub.s32 0, %v624
    %v626 = vrot.slane %v621, %v625
    %v628 = vmul.f32 %v626, %v619
    %v629 = vadd.f32 %v545, %v628
    %s630 = scalar_lea.vmem %s1, 77
    %v631 = vld [vmem:[%s630] sm:$0x1]
    %v633 = vlaneseq
    %v634 = vshrl.u32 %v633, 7
    %v635 = vsub.s32 0, %v634
    %v636 = vrot.slane %v631, %v635
    %v638 = vmul.f32 %v636, %v619
    %v639 = vadd.f32 %v555, %v638
    %v640 = vld [vmem:[%s45 + $0x2] sm:$0xff]
    %s641 = scalar_lea.vmem %s1, 29
    %v642 = vld [vmem:[%s641] sm:$0x1]
    %v644 = vlaneseq
    %v645 = vshrl.u32 %v644, 7
    %v646 = vsub.s32 0, %v645
    %v647 = vrot.slane %v642, %v646
    %v649 = vmul.f32 %v647, %v640
    %v650 = vadd.f32 %v566, %v649
    %s651 = scalar_lea.vmem %s1, 78
    %v652 = vld [vmem:[%s651] sm:$0x1]
    %v654 = vlaneseq
    %v655 = vshrl.u32 %v654, 7
    %v656 = vsub.s32 0, %v655
    %v657 = vrot.slane %v652, %v656
    %v659 = vmul.f32 %v657, %v640
    %v660 = vadd.f32 %v576, %v659
    %v661 = vld [vmem:[%s65 + $0x2] sm:$0xff]
    %s662 = scalar_lea.vmem %s1, 30
    %v663 = vld [vmem:[%s662] sm:$0x1]
    %v665 = vlaneseq
    %v666 = vshrl.u32 %v665, 7
    %v667 = vsub.s32 0, %v666
    %v668 = vrot.slane %v663, %v667
    %v670 = vmul.f32 %v668, %v661
    %v671 = vadd.f32 %v587, %v670
    %s672 = scalar_lea.vmem %s1, 79
    %v673 = vld [vmem:[%s672] sm:$0x1]
    %v675 = vlaneseq
    %v676 = vshrl.u32 %v675, 7
    %v677 = vsub.s32 0, %v676
    %v678 = vrot.slane %v673, %v677
    %v680 = vmul.f32 %v678, %v661
    %v681 = vadd.f32 %v597, %v680
    %v682 = vld [vmem:[%s85 + $0x2] sm:$0xff]
    %s683 = scalar_lea.vmem %s1, 31
    %v684 = vld [vmem:[%s683] sm:$0x1]
    %v686 = vlaneseq
    %v687 = vshrl.u32 %v686, 7
    %v688 = vsub.s32 0, %v687
    %v689 = vrot.slane %v684, %v688
    %v691 = vmul.f32 %v689, %v682
    %v692 = vadd.f32 %v608, %v691
    %s693 = scalar_lea.vmem %s1, 80
    %v694 = vld [vmem:[%s693] sm:$0x1]
    %v696 = vlaneseq
    %v697 = vshrl.u32 %v696, 7
    %v698 = vsub.s32 0, %v697
    %v699 = vrot.slane %v694, %v698
    %v701 = vmul.f32 %v699, %v682
    %v702 = vadd.f32 %v618, %v701
    %v703 = vld [vmem:[%s105 + $0x2] sm:$0xff]
    %s704 = scalar_lea.vmem %s1, 32
    %v705 = vld [vmem:[%s704] sm:$0x1]
    %v707 = vlaneseq
    %v708 = vshrl.u32 %v707, 7
    %v709 = vsub.s32 0, %v708
    %v710 = vrot.slane %v705, %v709
    %v712 = vmul.f32 %v710, %v703
    %v713 = vadd.f32 %v629, %v712
    %s714 = scalar_lea.vmem %s1, 81
    %v715 = vld [vmem:[%s714] sm:$0x1]
    %v717 = vlaneseq
    %v718 = vshrl.u32 %v717, 7
    %v719 = vsub.s32 0, %v718
    %v720 = vrot.slane %v715, %v719
    %v722 = vmul.f32 %v720, %v703
    %v723 = vadd.f32 %v639, %v722
    %v724 = vld [vmem:[%s127 + $0x2] sm:$0xff]
    %s725 = scalar_lea.vmem %s1, 33
    %v726 = vld [vmem:[%s725] sm:$0x1]
    %v728 = vlaneseq
    %v729 = vshrl.u32 %v728, 7
    %v730 = vsub.s32 0, %v729
    %v731 = vrot.slane %v726, %v730
    %v733 = vmul.f32 %v731, %v724
    %v734 = vadd.f32 %v650, %v733
    %s735 = scalar_lea.vmem %s1, 82
    %v736 = vld [vmem:[%s735] sm:$0x1]
    %v738 = vlaneseq
    %v739 = vshrl.u32 %v738, 7
    %v740 = vsub.s32 0, %v739
    %v741 = vrot.slane %v736, %v740
    %v743 = vmul.f32 %v741, %v724
    %v744 = vadd.f32 %v660, %v743
    %v745 = vld [vmem:[%s149 + $0x2] sm:$0xff]
    %s746 = scalar_lea.vmem %s1, 34
    %v747 = vld [vmem:[%s746] sm:$0x1]
    %v749 = vlaneseq
    %v750 = vshrl.u32 %v749, 7
    %v751 = vsub.s32 0, %v750
    %v752 = vrot.slane %v747, %v751
    %v754 = vmul.f32 %v752, %v745
    %v755 = vadd.f32 %v671, %v754
    %s756 = scalar_lea.vmem %s1, 83
    %v757 = vld [vmem:[%s756] sm:$0x1]
    %v759 = vlaneseq
    %v760 = vshrl.u32 %v759, 7
    %v761 = vsub.s32 0, %v760
    %v762 = vrot.slane %v757, %v761
    %v764 = vmul.f32 %v762, %v745
    %v765 = vadd.f32 %v681, %v764
    %v766 = vld [vmem:[%s171 + $0x2] sm:$0xff]
    %s767 = scalar_lea.vmem %s1, 35
    %v768 = vld [vmem:[%s767] sm:$0x1]
    %v770 = vlaneseq
    %v771 = vshrl.u32 %v770, 7
    %v772 = vsub.s32 0, %v771
    %v773 = vrot.slane %v768, %v772
    %v775 = vmul.f32 %v773, %v766
    %v776 = vadd.f32 %v692, %v775
    %s777 = scalar_lea.vmem %s1, 84
    %v778 = vld [vmem:[%s777] sm:$0x1]
    %v780 = vlaneseq
    %v781 = vshrl.u32 %v780, 7
    %v782 = vsub.s32 0, %v781
    %v783 = vrot.slane %v778, %v782
    %v785 = vmul.f32 %v783, %v766
    %v786 = vadd.f32 %v702, %v785
    %v787 = vld [vmem:[%s193 + $0x2] sm:$0xff]
    %s788 = scalar_lea.vmem %s1, 36
    %v789 = vld [vmem:[%s788] sm:$0x1]
    %v791 = vlaneseq
    %v792 = vshrl.u32 %v791, 7
    %v793 = vsub.s32 0, %v792
    %v794 = vrot.slane %v789, %v793
    %v796 = vmul.f32 %v794, %v787
    %v797 = vadd.f32 %v713, %v796
    %s798 = scalar_lea.vmem %s1, 85
    %v799 = vld [vmem:[%s798] sm:$0x1]
    %v801 = vlaneseq
    %v802 = vshrl.u32 %v801, 7
    %v803 = vsub.s32 0, %v802
    %v804 = vrot.slane %v799, %v803
    %v806 = vmul.f32 %v804, %v787
    %v807 = vadd.f32 %v723, %v806
    %v808 = vld [vmem:[%s215 + $0x2] sm:$0xff]
    %s809 = scalar_lea.vmem %s1, 37
    %v810 = vld [vmem:[%s809] sm:$0x1]
    %v812 = vlaneseq
    %v813 = vshrl.u32 %v812, 7
    %v814 = vsub.s32 0, %v813
    %v815 = vrot.slane %v810, %v814
    %v817 = vmul.f32 %v815, %v808
    %v818 = vadd.f32 %v734, %v817
    %s819 = scalar_lea.vmem %s1, 86
    %v820 = vld [vmem:[%s819] sm:$0x1]
    %v822 = vlaneseq
    %v823 = vshrl.u32 %v822, 7
    %v824 = vsub.s32 0, %v823
    %v825 = vrot.slane %v820, %v824
    %v827 = vmul.f32 %v825, %v808
    %v828 = vadd.f32 %v744, %v827
    %v829 = vld [vmem:[%s237 + $0x2] sm:$0xff]
    %s830 = scalar_lea.vmem %s1, 38
    %v831 = vld [vmem:[%s830] sm:$0x1]
    %v833 = vlaneseq
    %v834 = vshrl.u32 %v833, 7
    %v835 = vsub.s32 0, %v834
    %v836 = vrot.slane %v831, %v835
    %v838 = vmul.f32 %v836, %v829
    %v839 = vadd.f32 %v755, %v838
    %s840 = scalar_lea.vmem %s1, 87
    %v841 = vld [vmem:[%s840] sm:$0x1]
    %v843 = vlaneseq
    %v844 = vshrl.u32 %v843, 7
    %v845 = vsub.s32 0, %v844
    %v846 = vrot.slane %v841, %v845
    %v848 = vmul.f32 %v846, %v829
    %v849 = vadd.f32 %v765, %v848
    %v850 = vld [vmem:[%s259 + $0x2] sm:$0xff]
    %s851 = scalar_lea.vmem %s1, 39
    %v852 = vld [vmem:[%s851] sm:$0x1]
    %v854 = vlaneseq
    %v855 = vshrl.u32 %v854, 7
    %v856 = vsub.s32 0, %v855
    %v857 = vrot.slane %v852, %v856
    %v859 = vmul.f32 %v857, %v850
    %v860 = vadd.f32 %v776, %v859
    %s861 = scalar_lea.vmem %s1, 88
    %v862 = vld [vmem:[%s861] sm:$0x1]
    %v864 = vlaneseq
    %v865 = vshrl.u32 %v864, 7
    %v866 = vsub.s32 0, %v865
    %v867 = vrot.slane %v862, %v866
    %v869 = vmul.f32 %v867, %v850
    %v870 = vadd.f32 %v786, %v869
    %v871 = vld [vmem:[%s281 + $0x2] sm:$0xff]
    %s872 = scalar_lea.vmem %s1, 40
    %v873 = vld [vmem:[%s872] sm:$0x1]
    %v875 = vlaneseq
    %v876 = vshrl.u32 %v875, 7
    %v877 = vsub.s32 0, %v876
    %v878 = vrot.slane %v873, %v877
    %v880 = vmul.f32 %v878, %v871
    %v881 = vadd.f32 %v797, %v880
    %s882 = scalar_lea.vmem %s1, 89
    %v883 = vld [vmem:[%s882] sm:$0x1]
    %v885 = vlaneseq
    %v886 = vshrl.u32 %v885, 7
    %v887 = vsub.s32 0, %v886
    %v888 = vrot.slane %v883, %v887
    %v890 = vmul.f32 %v888, %v871
    %v891 = vadd.f32 %v807, %v890
    %v892 = vld [vmem:[%s303 + $0x2] sm:$0xff]
    %s893 = scalar_lea.vmem %s1, 41
    %v894 = vld [vmem:[%s893] sm:$0x1]
    %v896 = vlaneseq
    %v897 = vshrl.u32 %v896, 7
    %v898 = vsub.s32 0, %v897
    %v899 = vrot.slane %v894, %v898
    %v901 = vmul.f32 %v899, %v892
    %v902 = vadd.f32 %v818, %v901
    %s903 = scalar_lea.vmem %s1, 90
    %v904 = vld [vmem:[%s903] sm:$0x1]
    %v906 = vlaneseq
    %v907 = vshrl.u32 %v906, 7
    %v908 = vsub.s32 0, %v907
    %v909 = vrot.slane %v904, %v908
    %v911 = vmul.f32 %v909, %v892
    %v912 = vadd.f32 %v828, %v911
    %v913 = vld [vmem:[%s0 + $0x3] sm:$0xff]
    %s914 = scalar_lea.vmem %s1, 42
    %v915 = vld [vmem:[%s914] sm:$0x1]
    %v917 = vlaneseq
    %v918 = vshrl.u32 %v917, 7
    %v919 = vsub.s32 0, %v918
    %v920 = vrot.slane %v915, %v919
    %v922 = vmul.f32 %v920, %v913
    %v923 = vadd.f32 %v839, %v922
    %s924 = scalar_lea.vmem %s1, 91
    %v925 = vld [vmem:[%s924] sm:$0x1]
    %v927 = vlaneseq
    %v928 = vshrl.u32 %v927, 7
    %v929 = vsub.s32 0, %v928
    %v930 = vrot.slane %v925, %v929
    %v932 = vmul.f32 %v930, %v913
    %v933 = vadd.f32 %v849, %v932
    %v934 = vld [vmem:[%s45 + $0x3] sm:$0xff]
    %s935 = scalar_lea.vmem %s1, 43
    %v936 = vld [vmem:[%s935] sm:$0x1]
    %v938 = vlaneseq
    %v939 = vshrl.u32 %v938, 7
    %v940 = vsub.s32 0, %v939
    %v941 = vrot.slane %v936, %v940
    %v943 = vmul.f32 %v941, %v934
    %v944 = vadd.f32 %v860, %v943
    %s945 = scalar_lea.vmem %s1, 92
    %v946 = vld [vmem:[%s945] sm:$0x1]
    %v948 = vlaneseq
    %v949 = vshrl.u32 %v948, 7
    %v950 = vsub.s32 0, %v949
    %v951 = vrot.slane %v946, %v950
    %v953 = vmul.f32 %v951, %v934
    %v954 = vadd.f32 %v870, %v953
    %v955 = vld [vmem:[%s65 + $0x3] sm:$0xff]
    %s956 = scalar_lea.vmem %s1, 44
    %v957 = vld [vmem:[%s956] sm:$0x1]
    %v959 = vlaneseq
    %v960 = vshrl.u32 %v959, 7
    %v961 = vsub.s32 0, %v960
    %v962 = vrot.slane %v957, %v961
    %v964 = vmul.f32 %v962, %v955
    %v965 = vadd.f32 %v881, %v964
    %s966 = scalar_lea.vmem %s1, 93
    %v967 = vld [vmem:[%s966] sm:$0x1]
    %v969 = vlaneseq
    %v970 = vshrl.u32 %v969, 7
    %v971 = vsub.s32 0, %v970
    %v972 = vrot.slane %v967, %v971
    %v974 = vmul.f32 %v972, %v955
    %v975 = vadd.f32 %v891, %v974
    %v976 = vld [vmem:[%s85 + $0x3] sm:$0xff]
    %s977 = scalar_lea.vmem %s1, 45
    %v978 = vld [vmem:[%s977] sm:$0x1]
    %v980 = vlaneseq
    %v981 = vshrl.u32 %v980, 7
    %v982 = vsub.s32 0, %v981
    %v983 = vrot.slane %v978, %v982
    %v985 = vmul.f32 %v983, %v976
    %v986 = vadd.f32 %v902, %v985
    %s987 = scalar_lea.vmem %s1, 94
    %v988 = vld [vmem:[%s987] sm:$0x1]
    %v990 = vlaneseq
    %v991 = vshrl.u32 %v990, 7
    %v992 = vsub.s32 0, %v991
    %v993 = vrot.slane %v988, %v992
    %v995 = vmul.f32 %v993, %v976
    %v996 = vadd.f32 %v912, %v995
    %v997 = vld [vmem:[%s105 + $0x3] sm:$0xff]
    %s998 = scalar_lea.vmem %s1, 46
    %v999 = vld [vmem:[%s998] sm:$0x1]
    %v1001 = vlaneseq
    %v1002 = vshrl.u32 %v1001, 7
    %v1003 = vsub.s32 0, %v1002
    %v1004 = vrot.slane %v999, %v1003
    %v1006 = vmul.f32 %v1004, %v997
    %v1007 = vadd.f32 %v923, %v1006
    %s1008 = scalar_lea.vmem %s1, 95
    %v1009 = vld [vmem:[%s1008] sm:$0x1]
    %v1011 = vlaneseq
    %v1012 = vshrl.u32 %v1011, 7
    %v1013 = vsub.s32 0, %v1012
    %v1014 = vrot.slane %v1009, %v1013
    %v1016 = vmul.f32 %v1014, %v997
    %v1017 = vadd.f32 %v933, %v1016
    %v1018 = vld [vmem:[%s127 + $0x3] sm:$0xff]
    %s1019 = scalar_lea.vmem %s1, 47
    %v1020 = vld [vmem:[%s1019] sm:$0x1]
    %v1022 = vlaneseq
    %v1023 = vshrl.u32 %v1022, 7
    %v1024 = vsub.s32 0, %v1023
    %v1025 = vrot.slane %v1020, %v1024
    %v1027 = vmul.f32 %v1025, %v1018
    %v1028 = vadd.f32 %v944, %v1027
    %s1029 = scalar_lea.vmem %s1, 96
    %v1030 = vld [vmem:[%s1029] sm:$0x1]
    %v1032 = vlaneseq
    %v1033 = vshrl.u32 %v1032, 7
    %v1034 = vsub.s32 0, %v1033
    %v1035 = vrot.slane %v1030, %v1034
    %v1037 = vmul.f32 %v1035, %v1018
    %v1038 = vadd.f32 %v954, %v1037
    %v1039 = vld [vmem:[%s149 + $0x3] sm:$0xff]
    %s1040 = scalar_lea.vmem %s1, 48
    %v1041 = vld [vmem:[%s1040] sm:$0x1]
    %v1043 = vlaneseq
    %v1044 = vshrl.u32 %v1043, 7
    %v1045 = vsub.s32 0, %v1044
    %v1046 = vrot.slane %v1041, %v1045
    %v1048 = vmul.f32 %v1046, %v1039
    %v1049 = vadd.f32 %v965, %v1048
    %s1050 = scalar_lea.vmem %s1, 97
    %v1051 = vld [vmem:[%s1050] sm:$0x1]
    %v1053 = vlaneseq
    %v1054 = vshrl.u32 %v1053, 7
    %v1055 = vsub.s32 0, %v1054
    %v1056 = vrot.slane %v1051, %v1055
    %v1058 = vmul.f32 %v1056, %v1039
    %v1059 = vadd.f32 %v975, %v1058
    %v1060 = vadd.f32 %v1049, %v986
    %v1061 = vadd.f32 %v1007, %v1028
    %v1062 = vadd.f32 %v1060, %v1061
    %v1063 = vld [vmem:[%s2] sm:$0x1]
    %v1065 = vlaneseq
    %v1066 = vshrl.u32 %v1065, 7
    %v1067 = vsub.s32 0, %v1066
    %v1068 = vrot.slane %v1063, %v1067
    %v1070 = vadd.f32 %v1062, %v1068
    %v1071 = vmin.f32 %v1070, 0.0
    %v1072 = vmul.f32 %v1071, 1.442695
    %v1073 = vpow.pop %v1072
    %v1074 = vsub.f32 %v1073, 1.0
    %v1075 = vmul.f32 %v1074, 1.6732632
    %vm1076 = vcmp.gt.f32.partialorder %v1070, 0.0
    %v1077 = vsel %vm1076, %v1070, %v1075
    %v1078 = vmul.f32 %v1077, 1.050701
    %v1079 = vld [vmem:[%s3] sm:$0xff]
    %v1080 = vmul.f32 %v1078, %v1079
    %vm1081 = vcmask 523264
    %v1082 = vsel %vm1081, %v1080, 0.0
    %v1083 = vrot.slane %v1082, 4
    %v1084 = vadd.f32 %v1082, %v1083
    %v1085 = vrot.slane %v1084, 2
    %v1086 = vadd.f32 %v1084, %v1085
    %v1087 = vrot.slane %v1086, 1
    %v1088 = vadd.f32 %v1086, %v1087
    %v1089 = vadd.f32 %v1059, %v996
    %v1090 = vadd.f32 %v1017, %v1038
    %v1091 = vadd.f32 %v1089, %v1090
    %s1092 = scalar_lea.vmem %s2, 1
    %v1093 = vld [vmem:[%s1092] sm:$0x1]
    %v1095 = vlaneseq
    %v1096 = vshrl.u32 %v1095, 7
    %v1097 = vsub.s32 0, %v1096
    %v1098 = vrot.slane %v1093, %v1097
    %v1100 = vadd.f32 %v1091, %v1098
    %v1101 = vmin.f32 %v1100, 0.0
    %v1102 = vmul.f32 %v1101, 1.442695
    %v1103 = vpow.pop %v1102
    %v1104 = vsub.f32 %v1103, 1.0
    %v1105 = vmul.f32 %v1104, 1.6732632
    %vm1106 = vcmp.gt.f32.partialorder %v1100, 0.0
    %v1107 = vsel %vm1106, %v1100, %v1105
    %v1108 = vmul.f32 %v1107, 1.050701
    %v1109 = vmul.f32 %v1108, %v1079
    %v1110 = vsel %vm1081, %v1109, 0.0
    %v1111 = vrot.slane %v1110, 4
    %v1112 = vadd.f32 %v1110, %v1111
    %v1113 = vrot.slane %v1112, 2
    %v1114 = vadd.f32 %v1112, %v1113
    %v1115 = vrot.slane %v1114, 1
    %v1116 = vadd.f32 %v1114, %v1115
    %1118 = vrot.lane.b32.xlu0 %v1108, 64
    %v1119 = vpop.permute.xlu0 %1118
    %v1121 = vsel %vm1081, %v1078, %v1119
    %1122 = vst [vmem:[#allocation2] sm:$0xff] %v1121
    %vm1123 = vcmask 1040384
    %v1124 = vsel %vm1123, %v1088, %v1116
    %v1125 = vld [vmem:[%s4] sm:$0xff]
    %v1126 = vld [vmem:[%s4 + $0x8] sm:$0xff]
    %v1127 = vld [vmem:[%s4 + $0x10] sm:$0xff]
    %v1128 = vld [vmem:[%s4 + $0x18] sm:$0xff]
    %v1129 = vld [vmem:[%s4 + $0x20] sm:$0xff]
    %v1130 = vld [vmem:[%s4 + $0x28] sm:$0xff]
    %v1131 = vld [vmem:[%s4 + $0x30] sm:$0xff]
    %v1132 = vld [vmem:[%s4 + $0x38] sm:$0xff]
    %v1133 = vld [vmem:[%s5] sm:$0x3]
    %1135 = vset.pattern.permute.xlu0 0
    %1136 = vperm.xlu0 %1135, %v1133
    %v1137 = vpop.permute.xlu0 %1136
    %v1140 = vsel %vm1081, %v1124, 0
    %1142 = vmatprep.subr.mxu0 0.0
    %1143 = vmatpush1.msra.mxu0 0.0
    %1144 = vmatprep.subr.mxu0 0.0
    %1145 = vmatpush1.msra.mxu0 0.0
    %1146 = vmatprep.subr.mxu0 0.0
    %1147 = vmatpush1.msra.mxu0 0.0
    %1148 = vmatprep.subr.mxu0 0.0
    %1149 = vmatpush1.msra.mxu0 0.0
    %1150 = vmatprep.subr.mxu0 0.0
    %1151 = vmatpush1.msra.mxu0 0.0
    %1152 = vmatprep.subr.mxu0 0.0
    %1153 = vmatpush1.msra.mxu0 0.0
    %1154 = vmatprep.subr.mxu0 0.0
    %1155 = vmatpush1.msra.mxu0 0.0
    %1156 = vmatprep.subr.mxu0 0.0
    %1157 = vmatpush1.msra.mxu0 0.0
    %1158 = vmatprep.subr.mxu0 0.0
    %v1159 = vand.u32 %v1132, 4294901760
    %1160 = vmatpush1.msra.mxu0 %v1159
    %1161 = vmatprep.subr.mxu0 0.0
    %v1162 = vand.u32 %v1131, 4294901760
    %1163 = vmatpush1.msra.mxu0 %v1162
    %1164 = vmatprep.subr.mxu0 0.0
    %v1165 = vand.u32 %v1130, 4294901760
    %1166 = vmatpush1.msra.mxu0 %v1165
    %1167 = vmatprep.subr.mxu0 0.0
    %v1168 = vand.u32 %v1129, 4294901760
    %1169 = vmatpush1.msra.mxu0 %v1168
    %1170 = vmatprep.subr.mxu0 0.0
    %v1171 = vand.u32 %v1128, 4294901760
    %1172 = vmatpush1.msra.mxu0 %v1171
    %1173 = vmatprep.subr.mxu0 0.0
    %v1174 = vand.u32 %v1127, 4294901760
    %1175 = vmatpush1.msra.mxu0 %v1174
    %1176 = vmatprep.subr.mxu0 0.0
    %v1177 = vand.u32 %v1126, 4294901760
    %1178 = vmatpush1.msra.mxu0 %v1177
    %1179 = vmatprep.subr.mxu0 0.0
    %v1180 = vand.u32 %v1125, 4294901760
    %1181 = vmatpush1.msra.mxu0 %v1180
    %1182 = vmatprep.subr.mxu0 0.0
    %1183 = vmatpush2.msra.mxu0 0.0
    %1184 = vmatprep.subr.mxu0 0.0
    %1185 = vmatpush2.msra.mxu0 0.0
    %1186 = vmatprep.subr.mxu0 0.0
    %1187 = vmatpush2.msra.mxu0 0.0
    %1188 = vmatprep.subr.mxu0 0.0
    %1189 = vmatpush2.msra.mxu0 0.0
    %1190 = vmatprep.subr.mxu0 0.0
    %1191 = vmatpush2.msra.mxu0 0.0
    %1192 = vmatprep.subr.mxu0 0.0
    %1193 = vmatpush2.msra.mxu0 0.0
    %1194 = vmatprep.subr.mxu0 0.0
    %1195 = vmatpush2.msra.mxu0 0.0
    %1196 = vmatprep.subr.mxu0 0.0
    %1197 = vmatpush2.msra.mxu0 0.0
    %1198 = vmatprep.subr.mxu0 0.0
    %1199 = vmatpush2.msra.mxu0 0.0
    %1200 = vmatprep.subr.mxu0 0.0
    %1201 = vmatpush2.msra.mxu0 0.0
    %1202 = vmatprep.subr.mxu0 0.0
    %1203 = vmatpush2.msra.mxu0 0.0
    %1204 = vmatprep.subr.mxu0 0.0
    %1205 = vmatpush2.msra.mxu0 0.0
    %1206 = vmatprep.subr.mxu0 0.0
    %1207 = vmatpush2.msra.mxu0 0.0
    %1208 = vmatprep.subr.mxu0 0.0
    %1209 = vmatpush2.msra.mxu0 0.0
    %1210 = vmatprep.subr.mxu0 0.0
    %1211 = vmatpush2.msra.mxu0 0.0
    %1212 = vmatprep.subr.mxu0 0.0
    %1213 = vmatpush2.msra.mxu0 0.0
    %1214 = vmatprep.mubr.f32.mxu0 0.0
    %v1215 = vand.u32 %v1140, 4294901760
    %v1216 = vsub.f32 %v1140, %v1215
    %v1217 = vand.u32 %v1216, 4294901760
    %v1218 = vsub.f32 %v1216, %v1217
    %v1219 = vand.u32 %v1218, 4294901760
    %1220 = vmatmul.mubr.f32.gmra.mxu0 %v1219
    %v1221 = vpop.f32.mrf.mxu0
    %v1222 = vadd.f32 %v1137, %v1221
    %v1223 = vpop.f32.mrf.mxu0
    %1224 = vdwg.mxu0
    %1225 = vmatprep.subr.mxu0 0.0
    %1226 = vmatpush1.msra.mxu0 0.0
    %1227 = vmatprep.subr.mxu0 0.0
    %1228 = vmatpush1.msra.mxu0 0.0
    %1229 = vmatprep.subr.mxu0 0.0
    %1230 = vmatpush1.msra.mxu0 0.0
    %1231 = vmatprep.subr.mxu0 0.0
    %1232 = vmatpush1.msra.mxu0 0.0
    %1233 = vmatprep.subr.mxu0 0.0
    %1234 = vmatpush1.msra.mxu0 0.0
    %1235 = vmatprep.subr.mxu0 0.0
    %1236 = vmatpush1.msra.mxu0 0.0
    %1237 = vmatprep.subr.mxu0 0.0
    %1238 = vmatpush1.msra.mxu0 0.0
    %1239 = vmatprep.subr.mxu0 0.0
    %1240 = vmatpush1.msra.mxu0 0.0
    %1241 = vmatprep.subr.mxu0 0.0
    %v1242 = vand.u32 %v1132, 4294901760
    %v1243 = vsub.f32 %v1132, %v1242
    %v1244 = vand.u32 %v1243, 4294901760
    %v1245 = vsub.f32 %v1243, %v1244
    %v1246 = vand.u32 %v1245, 4294901760
    %1247 = vmatpush1.msra.mxu0 %v1246
    %1248 = vmatprep.subr.mxu0 0.0
    %v1249 = vand.u32 %v1131, 4294901760
    %v1250 = vsub.f32 %v1131, %v1249
    %v1251 = vand.u32 %v1250, 4294901760
    %v1252 = vsub.f32 %v1250, %v1251
    %v1253 = vand.u32 %v1252, 4294901760
    %1254 = vmatpush1.msra.mxu0 %v1253
    %1255 = vmatprep.subr.mxu0 0.0
    %v1256 = vand.u32 %v1130, 4294901760
    %v1257 = vsub.f32 %v1130, %v1256
    %v1258 = vand.u32 %v1257, 4294901760
    %v1259 = vsub.f32 %v1257, %v1258
    %v1260 = vand.u32 %v1259, 4294901760
    %1261 = vmatpush1.msra.mxu0 %v1260
    %1262 = vmatprep.subr.mxu0 0.0
    %v1263 = vand.u32 %v1129, 4294901760
    %v1264 = vsub.f32 %v1129, %v1263
    %v1265 = vand.u32 %v1264, 4294901760
    %v1266 = vsub.f32 %v1264, %v1265
    %v1267 = vand.u32 %v1266, 4294901760
    %1268 = vmatpush1.msra.mxu0 %v1267
    %1269 = vmatprep.subr.mxu0 0.0
    %v1270 = vand.u32 %v1128, 4294901760
    %v1271 = vsub.f32 %v1128, %v1270
    %v1272 = vand.u32 %v1271, 4294901760
    %v1273 = vsub.f32 %v1271, %v1272
    %v1274 = vand.u32 %v1273, 4294901760
    %1275 = vmatpush1.msra.mxu0 %v1274
    %1276 = vmatprep.subr.mxu0 0.0
    %v1277 = vand.u32 %v1127, 4294901760
    %v1278 = vsub.f32 %v1127, %v1277
    %v1279 = vand.u32 %v1278, 4294901760
    %v1280 = vsub.f32 %v1278, %v1279
    %v1281 = vand.u32 %v1280, 4294901760
    %1282 = vmatpush1.msra.mxu0 %v1281
    %1283 = vmatprep.subr.mxu0 0.0
    %v1284 = vand.u32 %v1126, 4294901760
    %v1285 = vsub.f32 %v1126, %v1284
    %v1286 = vand.u32 %v1285, 4294901760
    %v1287 = vsub.f32 %v1285, %v1286
    %v1288 = vand.u32 %v1287, 4294901760
    %1289 = vmatpush1.msra.mxu0 %v1288
    %1290 = vmatprep.subr.mxu0 0.0
    %v1291 = vand.u32 %v1125, 4294901760
    %v1292 = vsub.f32 %v1125, %v1291
    %v1293 = vand.u32 %v1292, 4294901760
    %v1294 = vsub.f32 %v1292, %v1293
    %v1295 = vand.u32 %v1294, 4294901760
    %1296 = vmatpush1.msra.mxu0 %v1295
    %1297 = vmatprep.subr.mxu0 0.0
    %1298 = vmatpush2.msra.mxu0 0.0
    %1299 = vmatprep.subr.mxu0 0.0
    %1300 = vmatpush2.msra.mxu0 0.0
    %1301 = vmatprep.subr.mxu0 0.0
    %1302 = vmatpush2.msra.mxu0 0.0
    %1303 = vmatprep.subr.mxu0 0.0
    %1304 = vmatpush2.msra.mxu0 0.0
    %1305 = vmatprep.subr.mxu0 0.0
    %1306 = vmatpush2.msra.mxu0 0.0
    %1307 = vmatprep.subr.mxu0 0.0
    %1308 = vmatpush2.msra.mxu0 0.0
    %1309 = vmatprep.subr.mxu0 0.0
    %1310 = vmatpush2.msra.mxu0 0.0
    %1311 = vmatprep.subr.mxu0 0.0
    %1312 = vmatpush2.msra.mxu0 0.0
    %1313 = vmatprep.subr.mxu0 0.0
    %1314 = vmatpush2.msra.mxu0 0.0
    %1315 = vmatprep.subr.mxu0 0.0
    %1316 = vmatpush2.msra.mxu0 0.0
    %1317 = vmatprep.subr.mxu0 0.0
    %1318 = vmatpush2.msra.mxu0 0.0
    %1319 = vmatprep.subr.mxu0 0.0
    %1320 = vmatpush2.msra.mxu0 0.0
    %1321 = vmatprep.subr.mxu0 0.0
    %1322 = vmatpush2.msra.mxu0 0.0
    %1323 = vmatprep.subr.mxu0 0.0
    %1324 = vmatpush2.msra.mxu0 0.0
    %1325 = vmatprep.subr.mxu0 0.0
    %1326 = vmatpush2.msra.mxu0 0.0
    %1327 = vmatprep.subr.mxu0 0.0
    %1328 = vmatpush2.msra.mxu0 0.0
    %1329 = vmatprep.mubr.f32.mxu0 0.0
    %v1330 = vand.u32 %v1140, 4294901760
    %1331 = vmatmul.mubr.f32.gmra.mxu0 %v1330
    %v1332 = vpop.f32.mrf.mxu0
    %v1333 = vadd.f32 %v1222, %v1332
    %v1334 = vpop.f32.mrf.mxu0
    %1335 = vdwg.mxu0
    %1336 = vmatprep.subr.mxu0 0.0
    %1337 = vmatpush1.msra.mxu0 0.0
    %1338 = vmatprep.subr.mxu0 0.0
    %1339 = vmatpush1.msra.mxu0 0.0
    %1340 = vmatprep.subr.mxu0 0.0
    %1341 = vmatpush1.msra.mxu0 0.0
    %1342 = vmatprep.subr.mxu0 0.0
    %1343 = vmatpush1.msra.mxu0 0.0
    %1344 = vmatprep.subr.mxu0 0.0
    %1345 = vmatpush1.msra.mxu0 0.0
    %1346 = vmatprep.subr.mxu0 0.0
    %1347 = vmatpush1.msra.mxu0 0.0
    %1348 = vmatprep.subr.mxu0 0.0
    %1349 = vmatpush1.msra.mxu0 0.0
    %1350 = vmatprep.subr.mxu0 0.0
    %1351 = vmatpush1.msra.mxu0 0.0
    %1352 = vmatprep.subr.mxu0 0.0
    %v1353 = vand.u32 %v1132, 4294901760
    %v1354 = vsub.f32 %v1132, %v1353
    %1355 = vmatpush1.msra.mxu0 %v1354
    %1356 = vmatprep.subr.mxu0 0.0
    %v1357 = vand.u32 %v1131, 4294901760
    %v1358 = vsub.f32 %v1131, %v1357
    %1359 = vmatpush1.msra.mxu0 %v1358
    %1360 = vmatprep.subr.mxu0 0.0
    %v1361 = vand.u32 %v1130, 4294901760
    %v1362 = vsub.f32 %v1130, %v1361
    %1363 = vmatpush1.msra.mxu0 %v1362
    %1364 = vmatprep.subr.mxu0 0.0
    %v1365 = vand.u32 %v1129, 4294901760
    %v1366 = vsub.f32 %v1129, %v1365
    %1367 = vmatpush1.msra.mxu0 %v1366
    %1368 = vmatprep.subr.mxu0 0.0
    %v1369 = vand.u32 %v1128, 4294901760
    %v1370 = vsub.f32 %v1128, %v1369
    %1371 = vmatpush1.msra.mxu0 %v1370
    %1372 = vmatprep.subr.mxu0 0.0
    %v1373 = vand.u32 %v1127, 4294901760
    %v1374 = vsub.f32 %v1127, %v1373
    %1375 = vmatpush1.msra.mxu0 %v1374
    %1376 = vmatprep.subr.mxu0 0.0
    %v1377 = vand.u32 %v1126, 4294901760
    %v1378 = vsub.f32 %v1126, %v1377
    %1379 = vmatpush1.msra.mxu0 %v1378
    %1380 = vmatprep.subr.mxu0 0.0
    %v1381 = vand.u32 %v1125, 4294901760
    %v1382 = vsub.f32 %v1125, %v1381
    %1383 = vmatpush1.msra.mxu0 %v1382
    %1384 = vmatprep.subr.mxu0 0.0
    %1385 = vmatpush2.msra.mxu0 0.0
    %1386 = vmatprep.subr.mxu0 0.0
    %1387 = vmatpush2.msra.mxu0 0.0
    %1388 = vmatprep.subr.mxu0 0.0
    %1389 = vmatpush2.msra.mxu0 0.0
    %1390 = vmatprep.subr.mxu0 0.0
    %1391 = vmatpush2.msra.mxu0 0.0
    %1392 = vmatprep.subr.mxu0 0.0
    %1393 = vmatpush2.msra.mxu0 0.0
    %1394 = vmatprep.subr.mxu0 0.0
    %1395 = vmatpush2.msra.mxu0 0.0
    %1396 = vmatprep.subr.mxu0 0.0
    %1397 = vmatpush2.msra.mxu0 0.0
    %1398 = vmatprep.subr.mxu0 0.0
    %1399 = vmatpush2.msra.mxu0 0.0
    %1400 = vmatprep.subr.mxu0 0.0
    %1401 = vmatpush2.msra.mxu0 0.0
    %1402 = vmatprep.subr.mxu0 0.0
    %1403 = vmatpush2.msra.mxu0 0.0
    %1404 = vmatprep.subr.mxu0 0.0
    %1405 = vmatpush2.msra.mxu0 0.0
    %1406 = vmatprep.subr.mxu0 0.0
    %1407 = vmatpush2.msra.mxu0 0.0
    %1408 = vmatprep.subr.mxu0 0.0
    %1409 = vmatpush2.msra.mxu0 0.0
    %1410 = vmatprep.subr.mxu0 0.0
    %1411 = vmatpush2.msra.mxu0 0.0
    %1412 = vmatprep.subr.mxu0 0.0
    %1413 = vmatpush2.msra.mxu0 0.0
    %1414 = vmatprep.subr.mxu0 0.0
    %1415 = vmatpush2.msra.mxu0 0.0
    %1416 = vmatprep.mubr.f32.mxu0 0.0
    %v1417 = vand.u32 %v1140, 4294901760
    %v1418 = vsub.f32 %v1140, %v1417
    %1419 = vmatmul.mubr.f32.gmra.mxu0 %v1418
    %v1420 = vpop.f32.mrf.mxu0
    %v1421 = vadd.f32 %v1333, %v1420
    %v1422 = vpop.f32.mrf.mxu0
    %1423 = vdwg.mxu0
    %1424 = vmatprep.subr.mxu0 0.0
    %1425 = vmatpush1.msra.mxu0 0.0
    %1426 = vmatprep.subr.mxu0 0.0
    %1427 = vmatpush1.msra.mxu0 0.0
    %1428 = vmatprep.subr.mxu0 0.0
    %1429 = vmatpush1.msra.mxu0 0.0
    %1430 = vmatprep.subr.mxu0 0.0
    %1431 = vmatpush1.msra.mxu0 0.0
    %1432 = vmatprep.subr.mxu0 0.0
    %1433 = vmatpush1.msra.mxu0 0.0
    %1434 = vmatprep.subr.mxu0 0.0
    %1435 = vmatpush1.msra.mxu0 0.0
    %1436 = vmatprep.subr.mxu0 0.0
    %1437 = vmatpush1.msra.mxu0 0.0
    %1438 = vmatprep.subr.mxu0 0.0
    %1439 = vmatpush1.msra.mxu0 0.0
    %1440 = vmatprep.subr.mxu0 0.0
    %v1441 = vand.u32 %v1132, 4294901760
    %1442 = vmatpush1.msra.mxu0 %v1441
    %1443 = vmatprep.subr.mxu0 0.0
    %v1444 = vand.u32 %v1131, 4294901760
    %1445 = vmatpush1.msra.mxu0 %v1444
    %1446 = vmatprep.subr.mxu0 0.0
    %v1447 = vand.u32 %v1130, 4294901760
    %1448 = vmatpush1.msra.mxu0 %v1447
    %1449 = vmatprep.subr.mxu0 0.0
    %v1450 = vand.u32 %v1129, 4294901760
    %1451 = vmatpush1.msra.mxu0 %v1450
    %1452 = vmatprep.subr.mxu0 0.0
    %v1453 = vand.u32 %v1128, 4294901760
    %1454 = vmatpush1.msra.mxu0 %v1453
    %1455 = vmatprep.subr.mxu0 0.0
    %v1456 = vand.u32 %v1127, 4294901760
    %1457 = vmatpush1.msra.mxu0 %v1456
    %1458 = vmatprep.subr.mxu0 0.0
    %v1459 = vand.u32 %v1126, 4294901760
    %1460 = vmatpush1.msra.mxu0 %v1459
    %1461 = vmatprep.subr.mxu0 0.0
    %v1462 = vand.u32 %v1125, 4294901760
    %1463 = vmatpush1.msra.mxu0 %v1462
    %1464 = vmatprep.subr.mxu0 0.0
    %1465 = vmatpush2.msra.mxu0 0.0
    %1466 = vmatprep.subr.mxu0 0.0
    %1467 = vmatpush2.msra.mxu0 0.0
    %1468 = vmatprep.subr.mxu0 0.0
    %1469 = vmatpush2.msra.mxu0 0.0
    %1470 = vmatprep.subr.mxu0 0.0
    %1471 = vmatpush2.msra.mxu0 0.0
    %1472 = vmatprep.subr.mxu0 0.0
    %1473 = vmatpush2.msra.mxu0 0.0
    %1474 = vmatprep.subr.mxu0 0.0
    %1475 = vmatpush2.msra.mxu0 0.0
    %1476 = vmatprep.subr.mxu0 0.0
    %1477 = vmatpush2.msra.mxu0 0.0
    %1478 = vmatprep.subr.mxu0 0.0
    %1479 = vmatpush2.msra.mxu0 0.0
    %1480 = vmatprep.subr.mxu0 0.0
    %1481 = vmatpush2.msra.mxu0 0.0
    %1482 = vmatprep.subr.mxu0 0.0
    %1483 = vmatpush2.msra.mxu0 0.0
    %1484 = vmatprep.subr.mxu0 0.0
    %1485 = vmatpush2.msra.mxu0 0.0
    %1486 = vmatprep.subr.mxu0 0.0
    %1487 = vmatpush2.msra.mxu0 0.0
    %1488 = vmatprep.subr.mxu0 0.0
    %1489 = vmatpush2.msra.mxu0 0.0
    %1490 = vmatprep.subr.mxu0 0.0
    %1491 = vmatpush2.msra.mxu0 0.0
    %1492 = vmatprep.subr.mxu0 0.0
    %1493 = vmatpush2.msra.mxu0 0.0
    %1494 = vmatprep.subr.mxu0 0.0
    %1495 = vmatpush2.msra.mxu0 0.0
    %1496 = vmatprep.mubr.f32.mxu0 0.0
    %v1497 = vand.u32 %v1140, 4294901760
    %v1498 = vsub.f32 %v1140, %v1497
    %v1499 = vand.u32 %v1498, 4294901760
    %1500 = vmatmul.mubr.f32.gmra.mxu0 %v1499
    %v1501 = vpop.f32.mrf.mxu0
    %v1502 = vadd.f32 %v1421, %v1501
    %v1503 = vpop.f32.mrf.mxu0
    %1504 = vdwg.mxu0
    %1505 = vmatprep.subr.mxu0 0.0
    %1506 = vmatpush1.msra.mxu0 0.0
    %1507 = vmatprep.subr.mxu0 0.0
    %1508 = vmatpush1.msra.mxu0 0.0
    %1509 = vmatprep.subr.mxu0 0.0
    %1510 = vmatpush1.msra.mxu0 0.0
    %1511 = vmatprep.subr.mxu0 0.0
    %1512 = vmatpush1.msra.mxu0 0.0
    %1513 = vmatprep.subr.mxu0 0.0
    %1514 = vmatpush1.msra.mxu0 0.0
    %1515 = vmatprep.subr.mxu0 0.0
    %1516 = vmatpush1.msra.mxu0 0.0
    %1517 = vmatprep.subr.mxu0 0.0
    %1518 = vmatpush1.msra.mxu0 0.0
    %1519 = vmatprep.subr.mxu0 0.0
    %1520 = vmatpush1.msra.mxu0 0.0
    %1521 = vmatprep.subr.mxu0 0.0
    %v1522 = vand.u32 %v1132, 4294901760
    %v1523 = vsub.f32 %v1132, %v1522
    %v1524 = vand.u32 %v1523, 4294901760
    %1525 = vmatpush1.msra.mxu0 %v1524
    %1526 = vmatprep.subr.mxu0 0.0
    %v1527 = vand.u32 %v1131, 4294901760
    %v1528 = vsub.f32 %v1131, %v1527
    %v1529 = vand.u32 %v1528, 4294901760
    %1530 = vmatpush1.msra.mxu0 %v1529
    %1531 = vmatprep.subr.mxu0 0.0
    %v1532 = vand.u32 %v1130, 4294901760
    %v1533 = vsub.f32 %v1130, %v1532
    %v1534 = vand.u32 %v1533, 4294901760
    %1535 = vmatpush1.msra.mxu0 %v1534
    %1536 = vmatprep.subr.mxu0 0.0
    %v1537 = vand.u32 %v1129, 4294901760
    %v1538 = vsub.f32 %v1129, %v1537
    %v1539 = vand.u32 %v1538, 4294901760
    %1540 = vmatpush1.msra.mxu0 %v1539
    %1541 = vmatprep.subr.mxu0 0.0
    %v1542 = vand.u32 %v1128, 4294901760
    %v1543 = vsub.f32 %v1128, %v1542
    %v1544 = vand.u32 %v1543, 4294901760
    %1545 = vmatpush1.msra.mxu0 %v1544
    %1546 = vmatprep.subr.mxu0 0.0
    %v1547 = vand.u32 %v1127, 4294901760
    %v1548 = vsub.f32 %v1127, %v1547
    %v1549 = vand.u32 %v1548, 4294901760
    %1550 = vmatpush1.msra.mxu0 %v1549
    %1551 = vmatprep.subr.mxu0 0.0
    %v1552 = vand.u32 %v1126, 4294901760
    %v1553 = vsub.f32 %v1126, %v1552
    %v1554 = vand.u32 %v1553, 4294901760
    %1555 = vmatpush1.msra.mxu0 %v1554
    %1556 = vmatprep.subr.mxu0 0.0
    %v1557 = vand.u32 %v1125, 4294901760
    %v1558 = vsub.f32 %v1125, %v1557
    %v1559 = vand.u32 %v1558, 4294901760
    %1560 = vmatpush1.msra.mxu0 %v1559
    %1561 = vmatprep.subr.mxu0 0.0
    %1562 = vmatpush2.msra.mxu0 0.0
    %1563 = vmatprep.subr.mxu0 0.0
    %1564 = vmatpush2.msra.mxu0 0.0
    %1565 = vmatprep.subr.mxu0 0.0
    %1566 = vmatpush2.msra.mxu0 0.0
    %1567 = vmatprep.subr.mxu0 0.0
    %1568 = vmatpush2.msra.mxu0 0.0
    %1569 = vmatprep.subr.mxu0 0.0
    %1570 = vmatpush2.msra.mxu0 0.0
    %1571 = vmatprep.subr.mxu0 0.0
    %1572 = vmatpush2.msra.mxu0 0.0
    %1573 = vmatprep.subr.mxu0 0.0
    %1574 = vmatpush2.msra.mxu0 0.0
    %1575 = vmatprep.subr.mxu0 0.0
    %1576 = vmatpush2.msra.mxu0 0.0
    %1577 = vmatprep.subr.mxu0 0.0
    %1578 = vmatpush2.msra.mxu0 0.0
    %1579 = vmatprep.subr.mxu0 0.0
    %1580 = vmatpush2.msra.mxu0 0.0
    %1581 = vmatprep.subr.mxu0 0.0
    %1582 = vmatpush2.msra.mxu0 0.0
    %1583 = vmatprep.subr.mxu0 0.0
    %1584 = vmatpush2.msra.mxu0 0.0
    %1585 = vmatprep.subr.mxu0 0.0
    %1586 = vmatpush2.msra.mxu0 0.0
    %1587 = vmatprep.subr.mxu0 0.0
    %1588 = vmatpush2.msra.mxu0 0.0
    %1589 = vmatprep.subr.mxu0 0.0
    %1590 = vmatpush2.msra.mxu0 0.0
    %1591 = vmatprep.subr.mxu0 0.0
    %1592 = vmatpush2.msra.mxu0 0.0
    %1593 = vmatprep.mubr.f32.mxu0 0.0
    %v1594 = vand.u32 %v1140, 4294901760
    %1595 = vmatmul.mubr.f32.gmra.mxu0 %v1594
    %v1596 = vpop.f32.mrf.mxu0
    %v1597 = vadd.f32 %v1502, %v1596
    %v1598 = vpop.f32.mrf.mxu0
    %1599 = vdwg.mxu0
    %1600 = vmatprep.subr.mxu0 0.0
    %1601 = vmatpush1.msra.mxu0 0.0
    %1602 = vmatprep.subr.mxu0 0.0
    %1603 = vmatpush1.msra.mxu0 0.0
    %1604 = vmatprep.subr.mxu0 0.0
    %1605 = vmatpush1.msra.mxu0 0.0
    %1606 = vmatprep.subr.mxu0 0.0
    %1607 = vmatpush1.msra.mxu0 0.0
    %1608 = vmatprep.subr.mxu0 0.0
    %1609 = vmatpush1.msra.mxu0 0.0
    %1610 = vmatprep.subr.mxu0 0.0
    %1611 = vmatpush1.msra.mxu0 0.0
    %1612 = vmatprep.subr.mxu0 0.0
    %1613 = vmatpush1.msra.mxu0 0.0
    %1614 = vmatprep.subr.mxu0 0.0
    %1615 = vmatpush1.msra.mxu0 0.0
    %1616 = vmatprep.subr.mxu0 0.0
    %v1617 = vand.u32 %v1132, 4294901760
    %1618 = vmatpush1.msra.mxu0 %v1617
    %1619 = vmatprep.subr.mxu0 0.0
    %v1620 = vand.u32 %v1131, 4294901760
    %1621 = vmatpush1.msra.mxu0 %v1620
    %1622 = vmatprep.subr.mxu0 0.0
    %v1623 = vand.u32 %v1130, 4294901760
    %1624 = vmatpush1.msra.mxu0 %v1623
    %1625 = vmatprep.subr.mxu0 0.0
    %v1626 = vand.u32 %v1129, 4294901760
    %1627 = vmatpush1.msra.mxu0 %v1626
    %1628 = vmatprep.subr.mxu0 0.0
    %v1629 = vand.u32 %v1128, 4294901760
    %1630 = vmatpush1.msra.mxu0 %v1629
    %1631 = vmatprep.subr.mxu0 0.0
    %v1632 = vand.u32 %v1127, 4294901760
    %1633 = vmatpush1.msra.mxu0 %v1632
    %1634 = vmatprep.subr.mxu0 0.0
    %v1635 = vand.u32 %v1126, 4294901760
    %1636 = vmatpush1.msra.mxu0 %v1635
    %1637 = vmatprep.subr.mxu0 0.0
    %v1638 = vand.u32 %v1125, 4294901760
    %1639 = vmatpush1.msra.mxu0 %v1638
    %1640 = vmatprep.subr.mxu0 0.0
    %1641 = vmatpush2.msra.mxu0 0.0
    %1642 = vmatprep.subr.mxu0 0.0
    %1643 = vmatpush2.msra.mxu0 0.0
    %1644 = vmatprep.subr.mxu0 0.0
    %1645 = vmatpush2.msra.mxu0 0.0
    %1646 = vmatprep.subr.mxu0 0.0
    %1647 = vmatpush2.msra.mxu0 0.0
    %1648 = vmatprep.subr.mxu0 0.0
    %1649 = vmatpush2.msra.mxu0 0.0
    %1650 = vmatprep.subr.mxu0 0.0
    %1651 = vmatpush2.msra.mxu0 0.0
    %1652 = vmatprep.subr.mxu0 0.0
    %1653 = vmatpush2.msra.mxu0 0.0
    %1654 = vmatprep.subr.mxu0 0.0
    %1655 = vmatpush2.msra.mxu0 0.0
    %1656 = vmatprep.subr.mxu0 0.0
    %1657 = vmatpush2.msra.mxu0 0.0
    %1658 = vmatprep.subr.mxu0 0.0
    %1659 = vmatpush2.msra.mxu0 0.0
    %1660 = vmatprep.subr.mxu0 0.0
    %1661 = vmatpush2.msra.mxu0 0.0
    %1662 = vmatprep.subr.mxu0 0.0
    %1663 = vmatpush2.msra.mxu0 0.0
    %1664 = vmatprep.subr.mxu0 0.0
    %1665 = vmatpush2.msra.mxu0 0.0
    %1666 = vmatprep.subr.mxu0 0.0
    %1667 = vmatpush2.msra.mxu0 0.0
    %1668 = vmatprep.subr.mxu0 0.0
    %1669 = vmatpush2.msra.mxu0 0.0
    %1670 = vmatprep.subr.mxu0 0.0
    %1671 = vmatpush2.msra.mxu0 0.0
    %1672 = vmatprep.mubr.f32.mxu0 0.0
    %v1673 = vand.u32 %v1140, 4294901760
    %1674 = vmatmul.mubr.f32.gmra.mxu0 %v1673
    %v1675 = vpop.f32.mrf.mxu0
    %v1676 = vadd.f32 %v1597, %v1675
    %v1677 = vpop.f32.mrf.mxu0
    %1678 = vdwg.mxu0
    %vm1679 = vcmask 58368
    %1680 = vst.msk [vmem:[#allocation4] sm:$0x3] %vm1679, %v1676
    // Predicated region
    $region26: #{tpu_custom_call.1} parent=1 // pred_check
      _
    $region27: #{tpu_custom_call.1} parent=1 // pred_check_branch
      %1682 = sbr.rel (0) target = $region29
    $region28: #{tpu_custom_call.1} parent=1 // pred_region
      %s1684 = ssub.s32 128, 128
      %1685 = vsyncadd [#allocation3], %s1684
      %s1687 = sshll.u32 [#allocation2], 4
      %s1688 = int_to_ptr.vmem [resolvable:$true] %s1687
      %1690 = dma.vmem_to_hbm [thread:$0]  %s1688, 128, %s6, [#allocation3]
    $region29: #{tpu_custom_call.1} parent=1 // pred_fallthru
      _
    // Predicated region
    $region30: #{tpu_custom_call.1} parent=1 // pred_check
      _
    $region31: #{tpu_custom_call.1} parent=1 // pred_check_branch
      %1692 = sbr.rel (0) target = $region33
    $region32: #{tpu_custom_call.1} parent=1 // pred_region
      %s1694 = ssub.s32 32, 32
      %1695 = vsyncadd [#allocation5], %s1694
      %s1697 = sshll.u32 [#allocation4], 4
      %s1698 = int_to_ptr.vmem [resolvable:$true] %s1697
      %1700 = dma.vmem_to_hbm [thread:$0]  %s1698, 32, %s7, [#allocation5]
    $region33: #{tpu_custom_call.1} parent=1 // pred_fallthru
      _
    // Predicated region
    $region34: #{tpu_custom_call.1} parent=1 // pred_check
      _
    $region35: #{tpu_custom_call.1} parent=1 // pred_check_branch
      %1702 = sbr.rel (0) target = $region37
    $region36: #{tpu_custom_call.1} parent=1 // pred_region
      %1703 = dma.done [#allocation3], 128
    $region37: #{tpu_custom_call.1} parent=1 // pred_fallthru
      _
    // Predicated region
    $region38: #{tpu_custom_call.1} parent=1 // pred_check
      _
    $region39: #{tpu_custom_call.1} parent=1 // pred_check_branch
      %1705 = sbr.rel (0) target = $region41
    $region40: #{tpu_custom_call.1} parent=1 // pred_region
      %1706 = dma.done [#allocation5], 32
    $region41: #{tpu_custom_call.1} parent=1 // pred_fallthru
      _
    %1707 = vsyncpa [#allocation3], 1
    %1708 = vsyncpa [#allocation5], 1

</llo_original>
